<compile_context>
chip_gen: v5e
topology: v5e:2x2
jax: 0.10.0
libtpu: 0.0.40
codegen_flags: <defaults>
</compile_context>

<pallas_src>
import functools

import jax
import jax.numpy as jnp
from jax.experimental import pallas as pl
from jax.experimental.pallas import tpu as pltpu


# ------------------------------ fused kernel --------------------------------


def _basic_block_kernel(xpad_ref, w1_ref, s1_ref, b1_ref, w2_ref, s2_ref,
                        b2_ref, o_ref, mid_ref, *, H, W, C, O, gate0, gate1):
    """One grid step = one batch sample.

    xpad_ref : (H+2, W+2, C)  zero-padded NHWC input tile
    w1_ref   : (9*C, O)       conv1 weights, row order (dy, dx, c)
    s1/b1    : (1, O)         folded BN1 scale / shift
    w2_ref   : (9*O, O)       conv2 weights
    s2/b2    : (1, O)         folded BN2 scale / shift
    o_ref    : (H, W, O)      output tile (NHWC)
    mid_ref  : (H+2, W+2, O)  VMEM scratch: padded conv1 activation
    """

    def conv3x3(src_ref, w_mat, cin):
        # Build the im2col patch matrix in VMEM from 9 shifted static slices
        # of the padded tile, then one MXU matmul with K = 9*cin.
        cols = []
        for dy in range(3):
            for dx in range(3):
                xs = src_ref[dy:dy + H, dx:dx + W, :]        # (H, W, cin)
                cols.append(xs.reshape(H * W, cin))          # layout-trivial
        patches = jnp.concatenate(cols, axis=-1)             # (H*W, 9*cin)
        return jnp.dot(patches, w_mat, preferred_element_type=jnp.float32)

    # Residual = interior (unpadded) input, flattened to (H*W, C).
    resid = xpad_ref[1:H + 1, 1:W + 1, :].reshape(H * W, C)

    if gate0:
        y1 = conv3x3(xpad_ref, w1_ref[...], C)               # (H*W, O)
        y1 = jnp.maximum(y1 * s1_ref[...] + b1_ref[...], 0.0)
    else:
        # out = x  (requires inplanes == planes, enforced by the wrapper)
        y1 = resid

    if gate1:
        # Stage conv1's activation in a zero-padded VMEM scratch so conv2's
        # padding is free and nothing goes back to HBM between the convs.
        mid_ref[...] = jnp.zeros_like(mid_ref)
        mid_ref[1:H + 1, 1:W + 1, :] = y1.reshape(H, W, O)
        y2 = conv3x3(mid_ref, w2_ref[...], O)                # (H*W, O)
        y2 = y2 * s2_ref[...] + b2_ref[...]
    else:
        y2 = y1

    out = jnp.maximum(y2 + resid, 0.0)
    o_ref[...] = out.reshape(H, W, O)


# ------------------------------ wrapper --------------------------------------


@functools.partial(jax.jit, static_argnames=("block_gates",))
def basic_block_forward(x_nchw, prepared, block_gates=(True, True)):
    """PyTorch-semantics BasicBlockCifar forward (stride=1, no downsample)."""
    N, C, H, W = x_nchw.shape
    O = prepared["w2"].shape[1]
    assert C == O, "no-downsample path requires inplanes == planes"
    assert H % 8 == 0 and W % 8 == 0, "spatial dims must be multiples of 8"

    Hp, Wp = H + 2, W + 2
    # Single boundary transpose + pad (one HBM copy); everything else is fused.
    x_nhwc = jnp.transpose(x_nchw, (0, 2, 3, 1))
    xpad = jnp.pad(x_nhwc, ((0, 0), (1, 1), (1, 1), (0, 0)))

    kernel = functools.partial(
        _basic_block_kernel, H=H, W=W, C=C, O=O,
        gate0=bool(block_gates[0]), gate1=bool(block_gates[1]))

    out_nhwc = pl.pallas_call(
        kernel,
        out_shape=jax.ShapeDtypeStruct((N, H, W, O), jnp.float32),
        grid=(N,),
        in_specs=[
            pl.BlockSpec((None, Hp, Wp, C), lambda n: (n, 0, 0, 0)),
            pl.BlockSpec((9 * C, O), lambda n: (0, 0)),
            pl.BlockSpec((1, O), lambda n: (0, 0)),
            pl.BlockSpec((1, O), lambda n: (0, 0)),
            pl.BlockSpec((9 * O, O), lambda n: (0, 0)),
            pl.BlockSpec((1, O), lambda n: (0, 0)),
            pl.BlockSpec((1, O), lambda n: (0, 0)),
        ],
        out_specs=pl.BlockSpec((None, H, W, O), lambda n: (n, 0, 0, 0)),
        scratch_shapes=[pltpu.VMEM((Hp, Wp, O), jnp.float32)],
        compiler_params=pltpu.CompilerParams(
            dimension_semantics=("parallel",)),
    )(xpad, prepared["w1"], prepared["s1"], prepared["b1"],
      prepared["w2"], prepared["s2"], prepared["b2"])

    return jnp.transpose(out_nhwc, (0, 3, 1, 2))  # back to NCHW


def prepare_params(p, eps=1e-5):
    """One-time (outside jit) weight re-layout + BatchNorm fold."""

    def fold(gamma, beta, mean, var):
        s = gamma / jnp.sqrt(var + eps)
        return s.reshape(1, -1), (beta - mean * s).reshape(1, -1)

    def conv_mat(w):  # (O, C, 3, 3) -> (9*C, O), row order (dy, dx, c)
        O, C = w.shape[0], w.shape[1]
        return jnp.transpose(w, (2, 3, 1, 0)).reshape(9 * C, O)

    s1, b1 = fold(p["bn1_gamma"], p["bn1_beta"], p["bn1_mean"], p["bn1_var"])
    s2, b2 = fold(p["bn2_gamma"], p["bn2_beta"], p["bn2_mean"], p["bn2_var"])
    return {"w1": conv_mat(p["conv1_w"]), "s1": s1, "b1": b1,
            "w2": conv_mat(p["conv2_w"]), "s2": s2, "b2": b2}


def init_params(key, inplanes, planes):
    ks = jax.random.split(key, 10)
    n = jax.random.normal
    return {
        "conv1_w": 0.1 * n(ks[0], (planes, inplanes, 3, 3), jnp.float32),
        "bn1_gamma": 1.0 + 0.1 * n(ks[1], (planes,), jnp.float32),
        "bn1_beta": 0.1 * n(ks[2], (planes,), jnp.float32),
        "bn1_mean": 0.1 * n(ks[3], (planes,), jnp.float32),
        "bn1_var": jax.random.uniform(ks[4], (planes,), jnp.float32, 0.5, 1.5),
        "conv2_w": 0.1 * n(ks[5], (planes, planes, 3, 3), jnp.float32),
        "bn2_gamma": 1.0 + 0.1 * n(ks[6], (planes,), jnp.float32),
        "bn2_beta": 0.1 * n(ks[7], (planes,), jnp.float32),
        "bn2_mean": 0.1 * n(ks[8], (planes,), jnp.float32),
        "bn2_var": jax.random.uniform(ks[9], (planes,), jnp.float32, 0.5, 1.5),
    }


# --------------------------- pure-JAX reference ------------------------------


def reference_forward(params, x, gates, eps=1e-5):
    def conv(h, w):
        return jax.lax.conv_general_dilated(
            h, w, window_strides=(1, 1), padding=((1, 1), (1, 1)),
            dimension_numbers=("NCHW", "OIHW", "NCHW"))

    def bn(h, g, b, m, v):
        s = (g / jnp.sqrt(v + eps))[None, :, None, None]
        return (h - m[None, :, None, None]) * s + b[None, :, None, None]

    residual = out = x
    if gates[0]:
        out = jnp.maximum(
            bn(conv(x, params["conv1_w"]), params["bn1_gamma"],
               params["bn1_beta"], params["bn1_mean"], params["bn1_var"]), 0.0)
    if gates[1]:
        out = bn(conv(out, params["conv2_w"]), params["bn2_gamma"],
                 params["bn2_beta"], params["bn2_mean"], params["bn2_var"])
    return jnp.maximum(out + residual, 0.0)


# ----------------------------------- main ------------------------------------


if __name__ == "__main__":
    key = jax.random.PRNGKey(0)
    kp, kx = jax.random.split(key)

    batch, inplanes, planes, hw = 2, 16, 16, 16
    block_gates = (True, True)

    params = init_params(kp, inplanes, planes)
    prepared = prepare_params(params)
    x = jax.random.normal(kx, (batch, inplanes, hw, hw), jnp.float32)

    out = basic_block_forward(x, prepared, block_gates=block_gates)
    out = jax.block_until_ready(out)
    assert out.shape == (batch, planes, hw, hw)

    ref = reference_forward(params, x, block_gates)
    max_err = float(jnp.max(jnp.abs(out - ref)))
    assert bool(jnp.allclose(out, ref, atol=2e-2, rtol=2e-2)), max_err
    # ReLU output must be non-negative.
    assert bool(jnp.all(out >= 0.0))

    print("KERNEL_OK")
</pallas_src>

<mosaic_0001>
module attributes {stable_mosaic.version = 11 : i64} {
  func.func @_basic_block_kernel(%arg0: i32, %arg1: memref<1x18x18x16xf32, #tpu.memory_space<vmem>>, %arg2: memref<144x16xf32, #tpu.memory_space<vmem>>, %arg3: memref<1x16xf32, #tpu.memory_space<vmem>>, %arg4: memref<1x16xf32, #tpu.memory_space<vmem>>, %arg5: memref<144x16xf32, #tpu.memory_space<vmem>>, %arg6: memref<1x16xf32, #tpu.memory_space<vmem>>, %arg7: memref<1x16xf32, #tpu.memory_space<vmem>>, %arg8: memref<1x16x16x16xf32, #tpu.memory_space<vmem>>, %arg9: memref<18x18x16xf32, #tpu.memory_space<vmem>>) attributes {dimension_semantics = [#tpu.dimension_semantics<parallel>], iteration_bounds = array<i64: 2>, scalar_prefetch = 0 : i64, scratch_operands = 1 : i64, tpu.core_type = #tpu.core_type<tc>, window_params = [{transform_indices = @transform_0, window_bounds = array<i64: 1, 18, 18, 16>}, {pipeline_mode = #tpu.pipeline_mode<synchronous>, transform_indices = @transform_1, window_bounds = array<i64: 144, 16>}, {pipeline_mode = #tpu.pipeline_mode<synchronous>, transform_indices = @transform_2, window_bounds = array<i64: 1, 16>}, {pipeline_mode = #tpu.pipeline_mode<synchronous>, transform_indices = @transform_3, window_bounds = array<i64: 1, 16>}, {pipeline_mode = #tpu.pipeline_mode<synchronous>, transform_indices = @transform_4, window_bounds = array<i64: 144, 16>}, {pipeline_mode = #tpu.pipeline_mode<synchronous>, transform_indices = @transform_5, window_bounds = array<i64: 1, 16>}, {pipeline_mode = #tpu.pipeline_mode<synchronous>, transform_indices = @transform_6, window_bounds = array<i64: 1, 16>}, {transform_indices = @transform_7, window_bounds = array<i64: 1, 16, 16, 16>}]} {
    %c0 = arith.constant 0 : index
    %c1 = arith.constant 1 : index
    %c1_0 = arith.constant 1 : index
    %c0_1 = arith.constant 0 : index
    %0 = vector.load %arg1[%c0, %c1, %c1_0, %c0_1] : memref<1x18x18x16xf32, #tpu.memory_space<vmem>>, vector<1x16x16x16xf32>
    %1 = vector.shape_cast %0 : vector<1x16x16x16xf32> to vector<16x16x16xf32>
    %2 = vector.shape_cast %1 : vector<16x16x16xf32> to vector<256x16xf32>
    %c0_2 = arith.constant 0 : index
    %c0_3 = arith.constant 0 : index
    %3 = vector.load %arg2[%c0_2, %c0_3] : memref<144x16xf32, #tpu.memory_space<vmem>>, vector<144x16xf32>
    %c0_4 = arith.constant 0 : index
    %c0_5 = arith.constant 0 : index
    %c0_6 = arith.constant 0 : index
    %c0_7 = arith.constant 0 : index
    %4 = vector.load %arg1[%c0_4, %c0_5, %c0_6, %c0_7] : memref<1x18x18x16xf32, #tpu.memory_space<vmem>>, vector<1x16x16x16xf32>
    %5 = vector.shape_cast %4 : vector<1x16x16x16xf32> to vector<16x16x16xf32>
    %6 = vector.shape_cast %5 : vector<16x16x16xf32> to vector<256x16xf32>
    %c0_8 = arith.constant 0 : index
    %c0_9 = arith.constant 0 : index
    %c1_10 = arith.constant 1 : index
    %c0_11 = arith.constant 0 : index
    %7 = vector.load %arg1[%c0_8, %c0_9, %c1_10, %c0_11] : memref<1x18x18x16xf32, #tpu.memory_space<vmem>>, vector<1x16x16x16xf32>
    %8 = vector.shape_cast %7 : vector<1x16x16x16xf32> to vector<16x16x16xf32>
    %9 = vector.shape_cast %8 : vector<16x16x16xf32> to vector<256x16xf32>
    %c0_12 = arith.constant 0 : index
    %c0_13 = arith.constant 0 : index
    %c2 = arith.constant 2 : index
    %c0_14 = arith.constant 0 : index
    %10 = vector.load %arg1[%c0_12, %c0_13, %c2, %c0_14] : memref<1x18x18x16xf32, #tpu.memory_space<vmem>>, vector<1x16x16x16xf32>
    %11 = vector.shape_cast %10 : vector<1x16x16x16xf32> to vector<16x16x16xf32>
    %12 = vector.shape_cast %11 : vector<16x16x16xf32> to vector<256x16xf32>
    %c0_15 = arith.constant 0 : index
    %c1_16 = arith.constant 1 : index
    %c0_17 = arith.constant 0 : index
    %c0_18 = arith.constant 0 : index
    %13 = vector.load %arg1[%c0_15, %c1_16, %c0_17, %c0_18] : memref<1x18x18x16xf32, #tpu.memory_space<vmem>>, vector<1x16x16x16xf32>
    %14 = vector.shape_cast %13 : vector<1x16x16x16xf32> to vector<16x16x16xf32>
    %15 = vector.shape_cast %14 : vector<16x16x16xf32> to vector<256x16xf32>
    %c0_19 = arith.constant 0 : index
    %c1_20 = arith.constant 1 : index
    %c1_21 = arith.constant 1 : index
    %c0_22 = arith.constant 0 : index
    %16 = vector.load %arg1[%c0_19, %c1_20, %c1_21, %c0_22] : memref<1x18x18x16xf32, #tpu.memory_space<vmem>>, vector<1x16x16x16xf32>
    %17 = vector.shape_cast %16 : vector<1x16x16x16xf32> to vector<16x16x16xf32>
    %18 = vector.shape_cast %17 : vector<16x16x16xf32> to vector<256x16xf32>
    %c0_23 = arith.constant 0 : index
    %c1_24 = arith.constant 1 : index
    %c2_25 = arith.constant 2 : index
    %c0_26 = arith.constant 0 : index
    %19 = vector.load %arg1[%c0_23, %c1_24, %c2_25, %c0_26] : memref<1x18x18x16xf32, #tpu.memory_space<vmem>>, vector<1x16x16x16xf32>
    %20 = vector.shape_cast %19 : vector<1x16x16x16xf32> to vector<16x16x16xf32>
    %21 = vector.shape_cast %20 : vector<16x16x16xf32> to vector<256x16xf32>
    %c0_27 = arith.constant 0 : index
    %c2_28 = arith.constant 2 : index
    %c0_29 = arith.constant 0 : index
    %c0_30 = arith.constant 0 : index
    %22 = vector.load %arg1[%c0_27, %c2_28, %c0_29, %c0_30] : memref<1x18x18x16xf32, #tpu.memory_space<vmem>>, vector<1x16x16x16xf32>
    %23 = vector.shape_cast %22 : vector<1x16x16x16xf32> to vector<16x16x16xf32>
    %24 = vector.shape_cast %23 : vector<16x16x16xf32> to vector<256x16xf32>
    %c0_31 = arith.constant 0 : index
    %c2_32 = arith.constant 2 : index
    %c1_33 = arith.constant 1 : index
    %c0_34 = arith.constant 0 : index
    %25 = vector.load %arg1[%c0_31, %c2_32, %c1_33, %c0_34] : memref<1x18x18x16xf32, #tpu.memory_space<vmem>>, vector<1x16x16x16xf32>
    %26 = vector.shape_cast %25 : vector<1x16x16x16xf32> to vector<16x16x16xf32>
    %27 = vector.shape_cast %26 : vector<16x16x16xf32> to vector<256x16xf32>
    %c0_35 = arith.constant 0 : index
    %c2_36 = arith.constant 2 : index
    %c2_37 = arith.constant 2 : index
    %c0_38 = arith.constant 0 : index
    %28 = vector.load %arg1[%c0_35, %c2_36, %c2_37, %c0_38] : memref<1x18x18x16xf32, #tpu.memory_space<vmem>>, vector<1x16x16x16xf32>
    %29 = vector.shape_cast %28 : vector<1x16x16x16xf32> to vector<16x16x16xf32>
    %30 = vector.shape_cast %29 : vector<16x16x16xf32> to vector<256x16xf32>
    %31 = tpu.concatenate %6, %9, %12, %15, %18, %21, %24, %27, %30 in 1 : vector<256x16xf32>, vector<256x16xf32>, vector<256x16xf32>, vector<256x16xf32>, vector<256x16xf32>, vector<256x16xf32>, vector<256x16xf32>, vector<256x16xf32>, vector<256x16xf32> -> vector<256x144xf32>
    %cst = arith.constant dense<0.000000e+00> : vector<256x16xf32>
    %32 = tpu.matmul %31, %3, %cst {dimension_numbers = #tpu.dot_dimension_numbers<[1], [0], [0], [1], [0, 0, 1, 1], [], []>} : vector<256x144xf32>, vector<144x16xf32>, vector<256x16xf32> -> vector<256x16xf32>
    %c0_39 = arith.constant 0 : index
    %c0_40 = arith.constant 0 : index
    %33 = vector.load %arg3[%c0_39, %c0_40] : memref<1x16xf32, #tpu.memory_space<vmem>>, vector<1x16xf32>
    %34 = vector.broadcast %33 : vector<1x16xf32> to vector<256x16xf32>
    %35 = arith.mulf %32, %34 : vector<256x16xf32>
    %c0_41 = arith.constant 0 : index
    %c0_42 = arith.constant 0 : index
    %36 = vector.load %arg4[%c0_41, %c0_42] : memref<1x16xf32, #tpu.memory_space<vmem>>, vector<1x16xf32>
    %37 = vector.broadcast %36 : vector<1x16xf32> to vector<256x16xf32>
    %38 = arith.addf %35, %37 : vector<256x16xf32>
    %cst_43 = arith.constant 0.000000e+00 : f32
    %39 = vector.broadcast %cst_43 : f32 to vector<256x16xf32>
    %40 = arith.maximumf %38, %39 : vector<256x16xf32>
    %cst_44 = arith.constant 0.000000e+00 : f32
    %41 = vector.broadcast %cst_44 : f32 to vector<18x18x16xf32>
    %c0_45 = arith.constant 0 : index
    %c0_46 = arith.constant 0 : index
    %c0_47 = arith.constant 0 : index
    %42 = vector.load %arg9[%c0_45, %c0_46, %c0_47] : memref<18x18x16xf32, #tpu.memory_space<vmem>>, vector<18x18x16xf32>
    tpu.vector_store %arg9[%c0_45, %c0_46, %c0_47], %41 {strides = array<i32>} : memref<18x18x16xf32, #tpu.memory_space<vmem>>, vector<18x18x16xf32>,
    %43 = vector.shape_cast %40 : vector<256x16xf32> to vector<16x16x16xf32>
    %c1_48 = arith.constant 1 : index
    %c1_49 = arith.constant 1 : index
    %c0_50 = arith.constant 0 : index
    %44 = vector.load %arg9[%c1_48, %c1_49, %c0_50] : memref<18x18x16xf32, #tpu.memory_space<vmem>>, vector<16x16x16xf32>
    tpu.vector_store %arg9[%c1_48, %c1_49, %c0_50], %43 {strides = array<i32>} : memref<18x18x16xf32, #tpu.memory_space<vmem>>, vector<16x16x16xf32>,
    %c0_51 = arith.constant 0 : index
    %c0_52 = arith.constant 0 : index
    %45 = vector.load %arg5[%c0_51, %c0_52] : memref<144x16xf32, #tpu.memory_space<vmem>>, vector<144x16xf32>
    %c0_53 = arith.constant 0 : index
    %c0_54 = arith.constant 0 : index
    %c0_55 = arith.constant 0 : index
    %46 = vector.load %arg9[%c0_53, %c0_54, %c0_55] : memref<18x18x16xf32, #tpu.memory_space<vmem>>, vector<16x16x16xf32>
    %47 = vector.shape_cast %46 : vector<16x16x16xf32> to vector<256x16xf32>
    %c0_56 = arith.constant 0 : index
    %c1_57 = arith.constant 1 : index
    %c0_58 = arith.constant 0 : index
    %48 = vector.load %arg9[%c0_56, %c1_57, %c0_58] : memref<18x18x16xf32, #tpu.memory_space<vmem>>, vector<16x16x16xf32>
    %49 = vector.shape_cast %48 : vector<16x16x16xf32> to vector<256x16xf32>
    %c0_59 = arith.constant 0 : index
    %c2_60 = arith.constant 2 : index
    %c0_61 = arith.constant 0 : index
    %50 = vector.load %arg9[%c0_59, %c2_60, %c0_61] : memref<18x18x16xf32, #tpu.memory_space<vmem>>, vector<16x16x16xf32>
    %51 = vector.shape_cast %50 : vector<16x16x16xf32> to vector<256x16xf32>
    %c1_62 = arith.constant 1 : index
    %c0_63 = arith.constant 0 : index
    %c0_64 = arith.constant 0 : index
    %52 = vector.load %arg9[%c1_62, %c0_63, %c0_64] : memref<18x18x16xf32, #tpu.memory_space<vmem>>, vector<16x16x16xf32>
    %53 = vector.shape_cast %52 : vector<16x16x16xf32> to vector<256x16xf32>
    %c1_65 = arith.constant 1 : index
    %c1_66 = arith.constant 1 : index
    %c0_67 = arith.constant 0 : index
    %54 = vector.load %arg9[%c1_65, %c1_66, %c0_67] : memref<18x18x16xf32, #tpu.memory_space<vmem>>, vector<16x16x16xf32>
    %55 = vector.shape_cast %54 : vector<16x16x16xf32> to vector<256x16xf32>
    %c1_68 = arith.constant 1 : index
    %c2_69 = arith.constant 2 : index
    %c0_70 = arith.constant 0 : index
    %56 = vector.load %arg9[%c1_68, %c2_69, %c0_70] : memref<18x18x16xf32, #tpu.memory_space<vmem>>, vector<16x16x16xf32>
    %57 = vector.shape_cast %56 : vector<16x16x16xf32> to vector<256x16xf32>
    %c2_71 = arith.constant 2 : index
    %c0_72 = arith.constant 0 : index
    %c0_73 = arith.constant 0 : index
    %58 = vector.load %arg9[%c2_71, %c0_72, %c0_73] : memref<18x18x16xf32, #tpu.memory_space<vmem>>, vector<16x16x16xf32>
    %59 = vector.shape_cast %58 : vector<16x16x16xf32> to vector<256x16xf32>
    %c2_74 = arith.constant 2 : index
    %c1_75 = arith.constant 1 : index
    %c0_76 = arith.constant 0 : index
    %60 = vector.load %arg9[%c2_74, %c1_75, %c0_76] : memref<18x18x16xf32, #tpu.memory_space<vmem>>, vector<16x16x16xf32>
    %61 = vector.shape_cast %60 : vector<16x16x16xf32> to vector<256x16xf32>
    %c2_77 = arith.constant 2 : index
    %c2_78 = arith.constant 2 : index
    %c0_79 = arith.constant 0 : index
    %62 = vector.load %arg9[%c2_77, %c2_78, %c0_79] : memref<18x18x16xf32, #tpu.memory_space<vmem>>, vector<16x16x16xf32>
    %63 = vector.shape_cast %62 : vector<16x16x16xf32> to vector<256x16xf32>
    %64 = tpu.concatenate %47, %49, %51, %53, %55, %57, %59, %61, %63 in 1 : vector<256x16xf32>, vector<256x16xf32>, vector<256x16xf32>, vector<256x16xf32>, vector<256x16xf32>, vector<256x16xf32>, vector<256x16xf32>, vector<256x16xf32>, vector<256x16xf32> -> vector<256x144xf32>
    %cst_80 = arith.constant dense<0.000000e+00> : vector<256x16xf32>
    %65 = tpu.matmul %64, %45, %cst_80 {dimension_numbers = #tpu.dot_dimension_numbers<[1], [0], [0], [1], [0, 0, 1, 1], [], []>} : vector<256x144xf32>, vector<144x16xf32>, vector<256x16xf32> -> vector<256x16xf32>
    %c0_81 = arith.constant 0 : index
    %c0_82 = arith.constant 0 : index
    %66 = vector.load %arg6[%c0_81, %c0_82] : memref<1x16xf32, #tpu.memory_space<vmem>>, vector<1x16xf32>
    %67 = vector.broadcast %66 : vector<1x16xf32> to vector<256x16xf32>
    %68 = arith.mulf %65, %67 : vector<256x16xf32>
    %c0_83 = arith.constant 0 : index
    %c0_84 = arith.constant 0 : index
    %69 = vector.load %arg7[%c0_83, %c0_84] : memref<1x16xf32, #tpu.memory_space<vmem>>, vector<1x16xf32>
    %70 = vector.broadcast %69 : vector<1x16xf32> to vector<256x16xf32>
    %71 = arith.addf %68, %70 : vector<256x16xf32>
    %72 = arith.addf %71, %2 : vector<256x16xf32>
    %cst_85 = arith.constant 0.000000e+00 : f32
    %73 = vector.broadcast %cst_85 : f32 to vector<256x16xf32>
    %74 = arith.maximumf %72, %73 : vector<256x16xf32>
    %75 = vector.shape_cast %74 : vector<256x16xf32> to vector<16x16x16xf32>
    %c0_86 = arith.constant 0 : index
    %c0_87 = arith.constant 0 : index
    %c0_88 = arith.constant 0 : index
    %c0_89 = arith.constant 0 : index
    %76 = vector.load %arg8[%c0_86, %c0_87, %c0_88, %c0_89] : memref<1x16x16x16xf32, #tpu.memory_space<vmem>>, vector<1x16x16x16xf32>
    %77 = vector.shape_cast %76 : vector<1x16x16x16xf32> to vector<16x16x16xf32>
    %78 = vector.shape_cast %75 : vector<16x16x16xf32> to vector<1x16x16x16xf32>
    tpu.vector_store %arg8[%c0_86, %c0_87, %c0_88, %c0_89], %78 {strides = array<i32>} : memref<1x16x16x16xf32, #tpu.memory_space<vmem>>, vector<1x16x16x16xf32>,
    return
  }
  func.func @transform_0(%arg0: i32) -> (i32, i32, i32, i32) {
    %c0_i32 = arith.constant 0 : i32
    %c0_i32_0 = arith.constant 0 : i32
    %c0_i32_1 = arith.constant 0 : i32
    %c0_i32_2 = arith.constant 0 : i32
    return %arg0, %c0_i32, %c0_i32_0, %c0_i32_1 : i32, i32, i32, i32
  }
  func.func @transform_1(%arg0: i32) -> (i32, i32) {
    %c0_i32 = arith.constant 0 : i32
    %c0_i32_0 = arith.constant 0 : i32
    %c0_i32_1 = arith.constant 0 : i32
    return %c0_i32, %c0_i32_0 : i32, i32
  }
  func.func @transform_2(%arg0: i32) -> (i32, i32) {
    %c0_i32 = arith.constant 0 : i32
    %c0_i32_0 = arith.constant 0 : i32
    %c0_i32_1 = arith.constant 0 : i32
    return %c0_i32, %c0_i32_0 : i32, i32
  }
  func.func @transform_3(%arg0: i32) -> (i32, i32) {
    %c0_i32 = arith.constant 0 : i32
    %c0_i32_0 = arith.constant 0 : i32
    %c0_i32_1 = arith.constant 0 : i32
    return %c0_i32, %c0_i32_0 : i32, i32
  }
  func.func @transform_4(%arg0: i32) -> (i32, i32) {
    %c0_i32 = arith.constant 0 : i32
    %c0_i32_0 = arith.constant 0 : i32
    %c0_i32_1 = arith.constant 0 : i32
    return %c0_i32, %c0_i32_0 : i32, i32
  }
  func.func @transform_5(%arg0: i32) -> (i32, i32) {
    %c0_i32 = arith.constant 0 : i32
    %c0_i32_0 = arith.constant 0 : i32
    %c0_i32_1 = arith.constant 0 : i32
    return %c0_i32, %c0_i32_0 : i32, i32
  }
  func.func @transform_6(%arg0: i32) -> (i32, i32) {
    %c0_i32 = arith.constant 0 : i32
    %c0_i32_0 = arith.constant 0 : i32
    %c0_i32_1 = arith.constant 0 : i32
    return %c0_i32, %c0_i32_0 : i32, i32
  }
  func.func @transform_7(%arg0: i32) -> (i32, i32, i32, i32) {
    %c0_i32 = arith.constant 0 : i32
    %c0_i32_0 = arith.constant 0 : i32
    %c0_i32_1 = arith.constant 0 : i32
    %c0_i32_2 = arith.constant 0 : i32
    return %arg0, %c0_i32, %c0_i32_0, %c0_i32_1 : i32, i32, i32, i32
  }
}

</mosaic_0001>

<llo_original>
// kernel: basic_block_forward.1
$region0: #{basic_block_forward.1}
  #allocation0 [shape = 'u32[]', space=smem, size = 0x4, offset = 0x4, fixed_abs, tag = 'smem constant byte address 0x4 - core index']
  #allocation1 [shape = 'u32[72,128]{1,0:T(1,128)}', space=vmem, size = 0x9000, scoped, tag = 'internal scratch']
  #allocation2 [shape = 'f32[18,18,16]{2,1,0:T(8,128)}', space=vmem, size = 0x36000, scoped, tag = 'scratch operand']
  %s0 = inlined_call_operand.vmem [shape: f32[2,18,18,16], index: 0, kind: input, shape index: {}]
  %s1 = inlined_call_operand.vmem [shape: f32[144,16], index: 1, kind: input, shape index: {}]
  %s2 = inlined_call_operand.vmem [shape: f32[1,16], index: 2, kind: input, shape index: {}]
  %s3 = inlined_call_operand.vmem [shape: f32[1,16], index: 3, kind: input, shape index: {}]
  %s4 = inlined_call_operand.vmem [shape: f32[144,16], index: 4, kind: input, shape index: {}]
  %s5 = inlined_call_operand.vmem [shape: f32[1,16], index: 5, kind: input, shape index: {}]
  %s6 = inlined_call_operand.vmem [shape: f32[1,16], index: 6, kind: input, shape index: {}]
  %s7 = inlined_call_operand.vmem [shape: f32[2,16,16,16], index: 7, kind: output, shape index: {}]
  %s8 = sld [smem:[#allocation0]]
  $region61: #{basic_block_forward.1} parent=0
    _
  %s10 = ssub.s32 1, %s8
  %s11 = scalar_select 0, %s10, %s8
  loop: start=0, step=1, limit=4
  $region2: #{basic_block_forward.1} parent=0 // loop_pre_header
    _
  $region3: #{basic_block_forward.1} parent=0 // loop_header
    %s13 = sphi 0, %s17
    %p14 = scmp.ge.s32.totalorder %s13, 4
    %s23 = sphi 0, %s25
    %s26 = sphi 0, %s23
    %s27 = sphi 0, %s26
    %s43 = sphi 0, %s27
    %s47 = sphi 0, %s47
    %s49 = sphi 0, %s47
    %s50 = sphi 0, %s49
    %s64 = sphi 0, %s50
    %s68 = sphi 0, %s68
    %s70 = sphi 0, %s68
    %s71 = sphi 0, %s70
    %s85 = sphi 0, %s71
    %s89 = sphi 0, %s89
    %s91 = sphi 0, %s89
    %s92 = sphi 0, %s91
    %s106 = sphi 0, %s92
    %s110 = sphi 0, %s110
    %s112 = sphi 0, %s110
    %s113 = sphi 0, %s112
    %s127 = sphi 0, %s113
    %s131 = sphi 0, %s131
    %s133 = sphi 0, %s131
    %s134 = sphi 0, %s133
    %s148 = sphi 0, %s134
    %s152 = sphi 0, %s152
    %s154 = sphi 0, %s152
    %s155 = sphi 0, %s154
    %s169 = sphi 0, %s155
    %s175 = sphi 0, %s177
    %s178 = sphi 0, %s175
    %s179 = sphi 0, %s178
    %s195 = sphi 0, %s179
  $region4: #{basic_block_forward.1} parent=0 // loop_header_branch
    %16 = sbr.rel (%p14) target = $region8
  $region5: #{basic_block_forward.1} parent=0 // loop_body
    %s18 = ssub.s32 %s13, 1
    %s19 = ssub.s32 %s13, 2
    %s20 = sadd.s32 %s13, 1
    %s21 = ssub.s32 %s13, %s20
    %p22 = scmp.eq.s32.totalorder %s21, 0
    %s24 = sadd.s32 %s23, 1
    %s25 = scalar_select %p22, %s23, %s24
    %p28 = pneg %p22
    %p29 = scmp.eq.s32.totalorder %s13, 1
    %p30 = por %p28, %p29
    %p31 = scmp.ne.s32.totalorder %s23, %s26
    %p32 = scmp.eq.s32.totalorder %s13, 0
    %p33 = por %p31, %p32
    %p34 = scmp.ne.s32.totalorder %s23, %s26
    %p35 = scmp.eq.s32.totalorder %s18, 1
    %p36 = por %p34, %p35
    %p37 = scmp.ne.s32.totalorder %s26, %s27
    %p38 = scmp.eq.s32.totalorder %s18, 0
    %p39 = por %p37, %p38
    %p40 = scmp.ne.s32.totalorder %s26, %s27
    %p41 = scmp.eq.s32.totalorder %s19, 1
    %p42 = por %p40, %p41
    %p44 = scmp.ne.s32.totalorder %s27, %s43
    %p45 = scmp.eq.s32.totalorder %s19, 0
    %p46 = por %p44, %p45
    %s48 = sadd.s32 %s47, 1
    %p51 = scmp.eq.s32.totalorder %s13, 1
    %p52 = scmp.ne.s32.totalorder %s47, %s49
    %p53 = scmp.eq.s32.totalorder %s13, 0
    %p54 = por %p52, %p53
    %p55 = scmp.ne.s32.totalorder %s47, %s49
    %p56 = scmp.eq.s32.totalorder %s18, 1
    %p57 = por %p55, %p56
    %p58 = scmp.ne.s32.totalorder %s49, %s50
    %p59 = scmp.eq.s32.totalorder %s18, 0
    %p60 = por %p58, %p59
    %p61 = scmp.ne.s32.totalorder %s49, %s50
    %p62 = scmp.eq.s32.totalorder %s19, 1
    %p63 = por %p61, %p62
    %p65 = scmp.ne.s32.totalorder %s50, %s64
    %p66 = scmp.eq.s32.totalorder %s19, 0
    %p67 = por %p65, %p66
    %s69 = sadd.s32 %s68, 1
    %p72 = scmp.eq.s32.totalorder %s13, 1
    %p73 = scmp.ne.s32.totalorder %s68, %s70
    %p74 = scmp.eq.s32.totalorder %s13, 0
    %p75 = por %p73, %p74
    %p76 = scmp.ne.s32.totalorder %s68, %s70
    %p77 = scmp.eq.s32.totalorder %s18, 1
    %p78 = por %p76, %p77
    %p79 = scmp.ne.s32.totalorder %s70, %s71
    %p80 = scmp.eq.s32.totalorder %s18, 0
    %p81 = por %p79, %p80
    %p82 = scmp.ne.s32.totalorder %s70, %s71
    %p83 = scmp.eq.s32.totalorder %s19, 1
    %p84 = por %p82, %p83
    %p86 = scmp.ne.s32.totalorder %s71, %s85
    %p87 = scmp.eq.s32.totalorder %s19, 0
    %p88 = por %p86, %p87
    %s90 = sadd.s32 %s89, 1
    %p93 = scmp.eq.s32.totalorder %s13, 1
    %p94 = scmp.ne.s32.totalorder %s89, %s91
    %p95 = scmp.eq.s32.totalorder %s13, 0
    %p96 = por %p94, %p95
    %p97 = scmp.ne.s32.totalorder %s89, %s91
    %p98 = scmp.eq.s32.totalorder %s18, 1
    %p99 = por %p97, %p98
    %p100 = scmp.ne.s32.totalorder %s91, %s92
    %p101 = scmp.eq.s32.totalorder %s18, 0
    %p102 = por %p100, %p101
    %p103 = scmp.ne.s32.totalorder %s91, %s92
    %p104 = scmp.eq.s32.totalorder %s19, 1
    %p105 = por %p103, %p104
    %p107 = scmp.ne.s32.totalorder %s92, %s106
    %p108 = scmp.eq.s32.totalorder %s19, 0
    %p109 = por %p107, %p108
    %s111 = sadd.s32 %s110, 1
    %p114 = scmp.eq.s32.totalorder %s13, 1
    %p115 = scmp.ne.s32.totalorder %s110, %s112
    %p116 = scmp.eq.s32.totalorder %s13, 0
    %p117 = por %p115, %p116
    %p118 = scmp.ne.s32.totalorder %s110, %s112
    %p119 = scmp.eq.s32.totalorder %s18, 1
    %p120 = por %p118, %p119
    %p121 = scmp.ne.s32.totalorder %s112, %s113
    %p122 = scmp.eq.s32.totalorder %s18, 0
    %p123 = por %p121, %p122
    %p124 = scmp.ne.s32.totalorder %s112, %s113
    %p125 = scmp.eq.s32.totalorder %s19, 1
    %p126 = por %p124, %p125
    %p128 = scmp.ne.s32.totalorder %s113, %s127
    %p129 = scmp.eq.s32.totalorder %s19, 0
    %p130 = por %p128, %p129
    %s132 = sadd.s32 %s131, 1
    %p135 = scmp.eq.s32.totalorder %s13, 1
    %p136 = scmp.ne.s32.totalorder %s131, %s133
    %p137 = scmp.eq.s32.totalorder %s13, 0
    %p138 = por %p136, %p137
    %p139 = scmp.ne.s32.totalorder %s131, %s133
    %p140 = scmp.eq.s32.totalorder %s18, 1
    %p141 = por %p139, %p140
    %p142 = scmp.ne.s32.totalorder %s133, %s134
    %p143 = scmp.eq.s32.totalorder %s18, 0
    %p144 = por %p142, %p143
    %p145 = scmp.ne.s32.totalorder %s133, %s134
    %p146 = scmp.eq.s32.totalorder %s19, 1
    %p147 = por %p145, %p146
    %p149 = scmp.ne.s32.totalorder %s134, %s148
    %p150 = scmp.eq.s32.totalorder %s19, 0
    %p151 = por %p149, %p150
    %s153 = sadd.s32 %s152, 1
    %p156 = scmp.eq.s32.totalorder %s13, 1
    %p157 = scmp.ne.s32.totalorder %s152, %s154
    %p158 = scmp.eq.s32.totalorder %s13, 0
    %p159 = por %p157, %p158
    %p160 = scmp.ne.s32.totalorder %s152, %s154
    %p161 = scmp.eq.s32.totalorder %s18, 1
    %p162 = por %p160, %p161
    %p163 = scmp.ne.s32.totalorder %s154, %s155
    %p164 = scmp.eq.s32.totalorder %s18, 0
    %p165 = por %p163, %p164
    %p166 = scmp.ne.s32.totalorder %s154, %s155
    %p167 = scmp.eq.s32.totalorder %s19, 1
    %p168 = por %p166, %p167
    %p170 = scmp.ne.s32.totalorder %s155, %s169
    %p171 = scmp.eq.s32.totalorder %s19, 0
    %p172 = por %p170, %p171
    %s173 = ssub.s32 %s13, %s20
    %p174 = scmp.eq.s32.totalorder %s173, 0
    %s176 = sadd.s32 %s175, 1
    %s177 = scalar_select %p174, %s175, %s176
    %p180 = pneg %p174
    %p181 = scmp.eq.s32.totalorder %s13, 1
    %p182 = por %p180, %p181
    %p183 = scmp.ne.s32.totalorder %s175, %s178
    %p184 = scmp.eq.s32.totalorder %s13, 0
    %p185 = por %p183, %p184
    %p186 = scmp.ne.s32.totalorder %s175, %s178
    %p187 = scmp.eq.s32.totalorder %s18, 1
    %p188 = por %p186, %p187
    %p189 = scmp.ne.s32.totalorder %s178, %s179
    %p190 = scmp.eq.s32.totalorder %s18, 0
    %p191 = por %p189, %p190
    %p192 = scmp.ne.s32.totalorder %s178, %s179
    %p193 = scmp.eq.s32.totalorder %s19, 1
    %p194 = por %p192, %p193
    %p196 = scmp.ne.s32.totalorder %s179, %s195
    %p197 = scmp.eq.s32.totalorder %s19, 0
    %p198 = por %p196, %p197
    %p199 = scmp.le.s32.totalorder 1, %s13
    %p200 = scmp.lt.s32.totalorder %s13, 3
    %p201 = pnand %p199, %p200
    %p202 = pneg %p201
    // Predicated region
    $region9: #{basic_block_forward.1} parent=5 // pred_check
      _
    $region10: #{basic_block_forward.1} parent=5 // pred_check_branch
      %204 = sbr.rel (%p201) target = $region12
    $region11: #{basic_block_forward.1} parent=5 // pred_region
      %s205 = ssub.s32 %s13, 1
      // Predicated region
      $region13: #{basic_block_forward.1} parent=11 // pred_check
        %p206 = pneg %p60
      $region14: #{basic_block_forward.1} parent=11 // pred_check_branch
        %208 = sbr.rel (%p206) target = $region16
      $region15: #{basic_block_forward.1} parent=11 // pred_region
        _
      $region16: #{basic_block_forward.1} parent=11 // pred_fallthru
        _
      // Predicated region
      $region17: #{basic_block_forward.1} parent=11 // pred_check
        %p209 = pneg %p81
      $region18: #{basic_block_forward.1} parent=11 // pred_check_branch
        %211 = sbr.rel (%p209) target = $region20
      $region19: #{basic_block_forward.1} parent=11 // pred_region
        _
      $region20: #{basic_block_forward.1} parent=11 // pred_fallthru
        _
      // Predicated region
      $region21: #{basic_block_forward.1} parent=11 // pred_check
        %p212 = pneg %p102
      $region22: #{basic_block_forward.1} parent=11 // pred_check_branch
        %214 = sbr.rel (%p212) target = $region24
      $region23: #{basic_block_forward.1} parent=11 // pred_region
        _
      $region24: #{basic_block_forward.1} parent=11 // pred_fallthru
        _
      // Predicated region
      $region25: #{basic_block_forward.1} parent=11 // pred_check
        %p215 = pneg %p123
      $region26: #{basic_block_forward.1} parent=11 // pred_check_branch
        %217 = sbr.rel (%p215) target = $region28
      $region27: #{basic_block_forward.1} parent=11 // pred_region
        _
      $region28: #{basic_block_forward.1} parent=11 // pred_fallthru
        _
      // Predicated region
      $region29: #{basic_block_forward.1} parent=11 // pred_check
        %p218 = pneg %p144
      $region30: #{basic_block_forward.1} parent=11 // pred_check_branch
        %220 = sbr.rel (%p218) target = $region32
      $region31: #{basic_block_forward.1} parent=11 // pred_region
        _
      $region32: #{basic_block_forward.1} parent=11 // pred_fallthru
        _
      // Predicated region
      $region33: #{basic_block_forward.1} parent=11 // pred_check
        %p221 = pneg %p165
      $region34: #{basic_block_forward.1} parent=11 // pred_check_branch
        %223 = sbr.rel (%p221) target = $region36
      $region35: #{basic_block_forward.1} parent=11 // pred_region
        _
      $region36: #{basic_block_forward.1} parent=11 // pred_fallthru
        _
    $region12: #{basic_block_forward.1} parent=5 // pred_fallthru
      _
    %p224 = scmp.lt.s32.totalorder %s13, 2
    // Predicated region
    $region37: #{basic_block_forward.1} parent=5 // pred_check
      %p225 = pneg %p224
    $region38: #{basic_block_forward.1} parent=5 // pred_check_branch
      %227 = sbr.rel (%p225) target = $region40
    $region39: #{basic_block_forward.1} parent=5 // pred_region
      // Predicated region
      $region41: #{basic_block_forward.1} parent=39 // pred_check
        %p228 = pneg %p33
      $region42: #{basic_block_forward.1} parent=39 // pred_check_branch
        %230 = sbr.rel (%p228) target = $region44
      $region43: #{basic_block_forward.1} parent=39 // pred_region
        %p231 = scmp.lt.s32.totalorder %s13, 1
        %s232 = scalar_select %p231, %s13, 1
        %s233 = smul.addr %s232, 54
        %s234 = smul.addr %s233, 8
        %s235 = scalar_lea.vmem %s0, %s234
      $region44: #{basic_block_forward.1} parent=39 // pred_fallthru
        _
    $region40: #{basic_block_forward.1} parent=5 // pred_fallthru
      _
    %p236 = scmp.le.s32.totalorder 1, %s13
    %p237 = scmp.lt.s32.totalorder %s13, 3
    %p238 = pnand %p236, %p237
    %p239 = pneg %p238
    // Predicated region
    $region45: #{basic_block_forward.1} parent=5 // pred_check
      _
    $region46: #{basic_block_forward.1} parent=5 // pred_check_branch
      %241 = sbr.rel (%p238) target = $region48
    $region47: #{basic_block_forward.1} parent=5 // pred_region
      %s242 = ssub.s32 %s13, 1
      %p243 = scmp.lt.s32.totalorder %s18, 1
      %s244 = scalar_select %p243, %s18, 1
      %s245 = smul.addr %s244, 54
      %s246 = smul.addr %s245, 8
      %s247 = scalar_lea.vmem %s0, %s246
      %p248 = pneg %p39
      %p249 = pneg %p36
      %p250 = pneg %p60
      %p251 = pneg %p57
      %p252 = pneg %p81
      %p253 = pneg %p78
      %p254 = pneg %p102
      %p255 = pneg %p99
      %p256 = pneg %p123
      %p257 = pneg %p120
      %p258 = pneg %p144
      %p259 = pneg %p141
      %p260 = pneg %p165
      %p261 = pneg %p162
      %p262 = pneg %p191
      %p263 = pneg %p188
      %p264 = scmp.lt.s32.totalorder %s18, 1
      %s265 = scalar_select %p264, %s18, 1
      %s266 = smul.addr %s265, 32
      %s267 = smul.addr %s266, 8
      %s268 = scalar_lea.vmem %s7, %s267
      %p269 = scmp.lt.s32.totalorder %s18, 1
      %s270 = scalar_select %p269, %s18, 1
      %s271 = smul.addr %s270, 54
      %s272 = smul.addr %s271, 8
      %s273 = scalar_lea.vmem %s0, %s272
      %p274 = scmp.lt.s32.totalorder %s18, 1
      %s275 = scalar_select %p274, %s18, 1
      %s276 = smul.addr %s275, 32
      %s277 = smul.addr %s276, 8
      %s278 = scalar_lea.vmem %s7, %s277
      %s279 = scalar_lea.vmem %s273, 24
      %v280 = vld [vmem:[%s279 + $0x1] sm:$0xff]
      %v281 = vld [vmem:[%s279 + $0x9] sm:$0xff]
      %v282 = vld [vmem:[%s279 + $0x19] sm:$0xff]
      %v283 = vld [vmem:[%s279 + $0x21] sm:$0xff]
      %v284 = vld [vmem:[%s279 + $0x31] sm:$0xff]
      %v285 = vld [vmem:[%s279 + $0x39] sm:$0xff]
      %v286 = vld [vmem:[%s279 + $0x49] sm:$0xff]
      %v287 = vld [vmem:[%s279 + $0x51] sm:$0xff]
      %v288 = vld [vmem:[%s279 + $0x61] sm:$0xff]
      %v289 = vld [vmem:[%s279 + $0x69] sm:$0xff]
      %v290 = vld [vmem:[%s279 + $0x79] sm:$0xff]
      %v291 = vld [vmem:[%s279 + $0x81] sm:$0xff]
      %v292 = vld [vmem:[%s279 + $0x91] sm:$0xff]
      %v293 = vld [vmem:[%s279 + $0x99] sm:$0xff]
      %v294 = vld [vmem:[%s279 + $0xa9] sm:$0xff]
      %v295 = vld [vmem:[%s279 + $0xb1] sm:$0xff]
      %v296 = vld [vmem:[%s279 + $0xc1] sm:$0xff]
      %v297 = vld [vmem:[%s279 + $0xc9] sm:$0xff]
      %v298 = vld [vmem:[%s279 + $0xd9] sm:$0xff]
      %v299 = vld [vmem:[%s279 + $0xe1] sm:$0xff]
      %v300 = vld [vmem:[%s279 + $0xf1] sm:$0xff]
      %v301 = vld [vmem:[%s279 + $0xf9] sm:$0xff]
      %v302 = vld [vmem:[%s279 + $0x109] sm:$0xff]
      %v303 = vld [vmem:[%s279 + $0x111] sm:$0xff]
      %v304 = vld [vmem:[%s279 + $0x121] sm:$0xff]
      %v305 = vld [vmem:[%s279 + $0x129] sm:$0xff]
      %v306 = vld [vmem:[%s279 + $0x139] sm:$0xff]
      %v307 = vld [vmem:[%s279 + $0x141] sm:$0xff]
      %v308 = vld [vmem:[%s279 + $0x151] sm:$0xff]
      %v309 = vld [vmem:[%s279 + $0x159] sm:$0xff]
      %v310 = vld [vmem:[%s279 + $0x169] sm:$0xff]
      %v311 = vld [vmem:[%s279 + $0x171] sm:$0xff]
      %v312 = vld [vmem:[%s1] sm:$0xff]
      %v313 = vld [vmem:[%s1 + $0x8] sm:$0xff]
      %v314 = vld [vmem:[%s1 + $0x10] sm:$0xff]
      %v315 = vld [vmem:[%s1 + $0x18] sm:$0xff]
      %v316 = vld [vmem:[%s1 + $0x20] sm:$0xff]
      %v317 = vld [vmem:[%s1 + $0x28] sm:$0xff]
      %v318 = vld [vmem:[%s1 + $0x30] sm:$0xff]
      %v319 = vld [vmem:[%s1 + $0x38] sm:$0xff]
      %v320 = vld [vmem:[%s1 + $0x40] sm:$0xff]
      %v321 = vld [vmem:[%s1 + $0x48] sm:$0xff]
      %v322 = vld [vmem:[%s1 + $0x50] sm:$0xff]
      %v323 = vld [vmem:[%s1 + $0x58] sm:$0xff]
      %v324 = vld [vmem:[%s1 + $0x60] sm:$0xff]
      %v325 = vld [vmem:[%s1 + $0x68] sm:$0xff]
      %v326 = vld [vmem:[%s1 + $0x70] sm:$0xff]
      %v327 = vld [vmem:[%s1 + $0x78] sm:$0xff]
      %v328 = vld [vmem:[%s1 + $0x80] sm:$0xff]
      %v329 = vld [vmem:[%s1 + $0x88] sm:$0xff]
      %v330 = vld [vmem:[%s273] sm:$0xff]
      %v331 = vld [vmem:[%s273 + $0x8] sm:$0xff]
      %v332 = vld [vmem:[%s273 + $0x18] sm:$0xff]
      %v333 = vld [vmem:[%s273 + $0x20] sm:$0xff]
      %v334 = vld [vmem:[%s273 + $0x30] sm:$0xff]
      %v335 = vld [vmem:[%s273 + $0x38] sm:$0xff]
      %v336 = vld [vmem:[%s273 + $0x48] sm:$0xff]
      %v337 = vld [vmem:[%s273 + $0x50] sm:$0xff]
      %v338 = vld [vmem:[%s273 + $0x60] sm:$0xff]
      %v339 = vld [vmem:[%s273 + $0x68] sm:$0xff]
      %v340 = vld [vmem:[%s273 + $0x78] sm:$0xff]
      %v341 = vld [vmem:[%s273 + $0x80] sm:$0xff]
      %v342 = vld [vmem:[%s273 + $0x90] sm:$0xff]
      %v343 = vld [vmem:[%s273 + $0x98] sm:$0xff]
      %v344 = vld [vmem:[%s273 + $0xa8] sm:$0xff]
      %v345 = vld [vmem:[%s273 + $0xb0] sm:$0xff]
      %v346 = vld [vmem:[%s273 + $0xc0] sm:$0xff]
      %v347 = vld [vmem:[%s273 + $0xc8] sm:$0xff]
      %v348 = vld [vmem:[%s273 + $0xd8] sm:$0xff]
      %v349 = vld [vmem:[%s273 + $0xe0] sm:$0xff]
      %v350 = vld [vmem:[%s273 + $0xf0] sm:$0xff]
      %v351 = vld [vmem:[%s273 + $0xf8] sm:$0xff]
      %v352 = vld [vmem:[%s273 + $0x108] sm:$0xff]
      %v353 = vld [vmem:[%s273 + $0x110] sm:$0xff]
      %v354 = vld [vmem:[%s273 + $0x120] sm:$0xff]
      %v355 = vld [vmem:[%s273 + $0x128] sm:$0xff]
      %v356 = vld [vmem:[%s273 + $0x138] sm:$0xff]
      %v357 = vld [vmem:[%s273 + $0x140] sm:$0xff]
      %v358 = vld [vmem:[%s273 + $0x150] sm:$0xff]
      %v359 = vld [vmem:[%s273 + $0x158] sm:$0xff]
      %v360 = vld [vmem:[%s273 + $0x168] sm:$0xff]
      %v361 = vld [vmem:[%s273 + $0x170] sm:$0xff]
      %v362 = vld [vmem:[%s273 + $0x1] sm:$0xff]
      %v363 = vld [vmem:[%s273 + $0x9] sm:$0xff]
      %v364 = vld [vmem:[%s273 + $0x19] sm:$0xff]
      %v365 = vld [vmem:[%s273 + $0x21] sm:$0xff]
      %v366 = vld [vmem:[%s273 + $0x31] sm:$0xff]
      %v367 = vld [vmem:[%s273 + $0x39] sm:$0xff]
      %v368 = vld [vmem:[%s273 + $0x49] sm:$0xff]
      %v369 = vld [vmem:[%s273 + $0x51] sm:$0xff]
      %v370 = vld [vmem:[%s273 + $0x61] sm:$0xff]
      %v371 = vld [vmem:[%s273 + $0x69] sm:$0xff]
      %v372 = vld [vmem:[%s273 + $0x79] sm:$0xff]
      %v373 = vld [vmem:[%s273 + $0x81] sm:$0xff]
      %v374 = vld [vmem:[%s273 + $0x91] sm:$0xff]
      %v375 = vld [vmem:[%s273 + $0x99] sm:$0xff]
      %v376 = vld [vmem:[%s273 + $0xa9] sm:$0xff]
      %v377 = vld [vmem:[%s273 + $0xb1] sm:$0xff]
      %v378 = vld [vmem:[%s273 + $0xc1] sm:$0xff]
      %v379 = vld [vmem:[%s273 + $0xc9] sm:$0xff]
      %v380 = vld [vmem:[%s273 + $0xd9] sm:$0xff]
      %v381 = vld [vmem:[%s273 + $0xe1] sm:$0xff]
      %v382 = vld [vmem:[%s273 + $0xf1] sm:$0xff]
      %v383 = vld [vmem:[%s273 + $0xf9] sm:$0xff]
      %v384 = vld [vmem:[%s273 + $0x109] sm:$0xff]
      %v385 = vld [vmem:[%s273 + $0x111] sm:$0xff]
      %v386 = vld [vmem:[%s273 + $0x121] sm:$0xff]
      %v387 = vld [vmem:[%s273 + $0x129] sm:$0xff]
      %v388 = vld [vmem:[%s273 + $0x139] sm:$0xff]
      %v389 = vld [vmem:[%s273 + $0x141] sm:$0xff]
      %v390 = vld [vmem:[%s273 + $0x151] sm:$0xff]
      %v391 = vld [vmem:[%s273 + $0x159] sm:$0xff]
      %v392 = vld [vmem:[%s273 + $0x169] sm:$0xff]
      %v393 = vld [vmem:[%s273 + $0x171] sm:$0xff]
      %v394 = vld [vmem:[%s273 + $0x2] sm:$0xff]
      %v395 = vld [vmem:[%s273 + $0xa] sm:$0xff]
      %v396 = vld [vmem:[%s273 + $0x1a] sm:$0xff]
      %v397 = vld [vmem:[%s273 + $0x22] sm:$0xff]
      %v398 = vld [vmem:[%s273 + $0x32] sm:$0xff]
      %v399 = vld [vmem:[%s273 + $0x3a] sm:$0xff]
      %v400 = vld [vmem:[%s273 + $0x4a] sm:$0xff]
      %v401 = vld [vmem:[%s273 + $0x52] sm:$0xff]
      %v402 = vld [vmem:[%s273 + $0x62] sm:$0xff]
      %v403 = vld [vmem:[%s273 + $0x6a] sm:$0xff]
      %v404 = vld [vmem:[%s273 + $0x7a] sm:$0xff]
      %v405 = vld [vmem:[%s273 + $0x82] sm:$0xff]
      %v406 = vld [vmem:[%s273 + $0x92] sm:$0xff]
      %v407 = vld [vmem:[%s273 + $0x9a] sm:$0xff]
      %v408 = vld [vmem:[%s273 + $0xaa] sm:$0xff]
      %v409 = vld [vmem:[%s273 + $0xb2] sm:$0xff]
      %v410 = vld [vmem:[%s273 + $0xc2] sm:$0xff]
      %v411 = vld [vmem:[%s273 + $0xca] sm:$0xff]
      %v412 = vld [vmem:[%s273 + $0xda] sm:$0xff]
      %v413 = vld [vmem:[%s273 + $0xe2] sm:$0xff]
      %v414 = vld [vmem:[%s273 + $0xf2] sm:$0xff]
      %v415 = vld [vmem:[%s273 + $0xfa] sm:$0xff]
      %v416 = vld [vmem:[%s273 + $0x10a] sm:$0xff]
      %v417 = vld [vmem:[%s273 + $0x112] sm:$0xff]
      %v418 = vld [vmem:[%s273 + $0x122] sm:$0xff]
      %v419 = vld [vmem:[%s273 + $0x12a] sm:$0xff]
      %v420 = vld [vmem:[%s273 + $0x13a] sm:$0xff]
      %v421 = vld [vmem:[%s273 + $0x142] sm:$0xff]
      %v422 = vld [vmem:[%s273 + $0x152] sm:$0xff]
      %v423 = vld [vmem:[%s273 + $0x15a] sm:$0xff]
      %v424 = vld [vmem:[%s273 + $0x16a] sm:$0xff]
      %v425 = vld [vmem:[%s273 + $0x172] sm:$0xff]
      %v426 = vld [vmem:[%s279] sm:$0xff]
      %v427 = vld [vmem:[%s279 + $0x8] sm:$0xff]
      %v428 = vld [vmem:[%s279 + $0x18] sm:$0xff]
      %v429 = vld [vmem:[%s279 + $0x20] sm:$0xff]
      %v430 = vld [vmem:[%s279 + $0x30] sm:$0xff]
      %v431 = vld [vmem:[%s279 + $0x38] sm:$0xff]
      %v432 = vld [vmem:[%s279 + $0x48] sm:$0xff]
      %v433 = vld [vmem:[%s279 + $0x50] sm:$0xff]
      %v434 = vld [vmem:[%s279 + $0x60] sm:$0xff]
      %v435 = vld [vmem:[%s279 + $0x68] sm:$0xff]
      %v436 = vld [vmem:[%s279 + $0x78] sm:$0xff]
      %v437 = vld [vmem:[%s279 + $0x80] sm:$0xff]
      %v438 = vld [vmem:[%s279 + $0x90] sm:$0xff]
      %v439 = vld [vmem:[%s279 + $0x98] sm:$0xff]
      %v440 = vld [vmem:[%s279 + $0xa8] sm:$0xff]
      %v441 = vld [vmem:[%s279 + $0xb0] sm:$0xff]
      %v442 = vld [vmem:[%s279 + $0xc0] sm:$0xff]
      %v443 = vld [vmem:[%s279 + $0xc8] sm:$0xff]
      %v444 = vld [vmem:[%s279 + $0xd8] sm:$0xff]
      %v445 = vld [vmem:[%s279 + $0xe0] sm:$0xff]
      %v446 = vld [vmem:[%s279 + $0xf0] sm:$0xff]
      %v447 = vld [vmem:[%s279 + $0xf8] sm:$0xff]
      %v448 = vld [vmem:[%s279 + $0x108] sm:$0xff]
      %v449 = vld [vmem:[%s279 + $0x110] sm:$0xff]
      %v450 = vld [vmem:[%s279 + $0x120] sm:$0xff]
      %v451 = vld [vmem:[%s279 + $0x128] sm:$0xff]
      %v452 = vld [vmem:[%s279 + $0x138] sm:$0xff]
      %v453 = vld [vmem:[%s279 + $0x140] sm:$0xff]
      %v454 = vld [vmem:[%s279 + $0x150] sm:$0xff]
      %v455 = vld [vmem:[%s279 + $0x158] sm:$0xff]
      %v456 = vld [vmem:[%s279 + $0x168] sm:$0xff]
      %v457 = vld [vmem:[%s279 + $0x170] sm:$0xff]
      %v458 = vld [vmem:[%s279 + $0x2] sm:$0xff]
      %v459 = vld [vmem:[%s279 + $0xa] sm:$0xff]
      %v460 = vld [vmem:[%s279 + $0x1a] sm:$0xff]
      %v461 = vld [vmem:[%s279 + $0x22] sm:$0xff]
      %v462 = vld [vmem:[%s279 + $0x32] sm:$0xff]
      %v463 = vld [vmem:[%s279 + $0x3a] sm:$0xff]
      %v464 = vld [vmem:[%s279 + $0x4a] sm:$0xff]
      %v465 = vld [vmem:[%s279 + $0x52] sm:$0xff]
      %v466 = vld [vmem:[%s279 + $0x62] sm:$0xff]
      %v467 = vld [vmem:[%s279 + $0x6a] sm:$0xff]
      %v468 = vld [vmem:[%s279 + $0x7a] sm:$0xff]
      %v469 = vld [vmem:[%s279 + $0x82] sm:$0xff]
      %v470 = vld [vmem:[%s279 + $0x92] sm:$0xff]
      %v471 = vld [vmem:[%s279 + $0x9a] sm:$0xff]
      %v472 = vld [vmem:[%s279 + $0xaa] sm:$0xff]
      %v473 = vld [vmem:[%s279 + $0xb2] sm:$0xff]
      %v474 = vld [vmem:[%s279 + $0xc2] sm:$0xff]
      %v475 = vld [vmem:[%s279 + $0xca] sm:$0xff]
      %v476 = vld [vmem:[%s279 + $0xda] sm:$0xff]
      %v477 = vld [vmem:[%s279 + $0xe2] sm:$0xff]
      %v478 = vld [vmem:[%s279 + $0xf2] sm:$0xff]
      %v479 = vld [vmem:[%s279 + $0xfa] sm:$0xff]
      %v480 = vld [vmem:[%s279 + $0x10a] sm:$0xff]
      %v481 = vld [vmem:[%s279 + $0x112] sm:$0xff]
      %v482 = vld [vmem:[%s279 + $0x122] sm:$0xff]
      %v483 = vld [vmem:[%s279 + $0x12a] sm:$0xff]
      %v484 = vld [vmem:[%s279 + $0x13a] sm:$0xff]
      %v485 = vld [vmem:[%s279 + $0x142] sm:$0xff]
      %v486 = vld [vmem:[%s279 + $0x152] sm:$0xff]
      %v487 = vld [vmem:[%s279 + $0x15a] sm:$0xff]
      %v488 = vld [vmem:[%s279 + $0x16a] sm:$0xff]
      %v489 = vld [vmem:[%s279 + $0x172] sm:$0xff]
      %s490 = scalar_lea.vmem %s273, 48
      %v491 = vld [vmem:[%s490] sm:$0xff]
      %v492 = vld [vmem:[%s490 + $0x8] sm:$0xff]
      %v493 = vld [vmem:[%s490 + $0x18] sm:$0xff]
      %v494 = vld [vmem:[%s490 + $0x20] sm:$0xff]
      %v495 = vld [vmem:[%s490 + $0x30] sm:$0xff]
      %v496 = vld [vmem:[%s490 + $0x38] sm:$0xff]
      %v497 = vld [vmem:[%s490 + $0x48] sm:$0xff]
      %v498 = vld [vmem:[%s490 + $0x50] sm:$0xff]
      %v499 = vld [vmem:[%s490 + $0x60] sm:$0xff]
      %v500 = vld [vmem:[%s490 + $0x68] sm:$0xff]
      %v501 = vld [vmem:[%s490 + $0x78] sm:$0xff]
      %v502 = vld [vmem:[%s490 + $0x80] sm:$0xff]
      %v503 = vld [vmem:[%s490 + $0x90] sm:$0xff]
      %v504 = vld [vmem:[%s490 + $0x98] sm:$0xff]
      %v505 = vld [vmem:[%s490 + $0xa8] sm:$0xff]
      %v506 = vld [vmem:[%s490 + $0xb0] sm:$0xff]
      %v507 = vld [vmem:[%s490 + $0xc0] sm:$0xff]
      %v508 = vld [vmem:[%s490 + $0xc8] sm:$0xff]
      %v509 = vld [vmem:[%s490 + $0xd8] sm:$0xff]
      %v510 = vld [vmem:[%s490 + $0xe0] sm:$0xff]
      %v511 = vld [vmem:[%s490 + $0xf0] sm:$0xff]
      %v512 = vld [vmem:[%s490 + $0xf8] sm:$0xff]
      %v513 = vld [vmem:[%s490 + $0x108] sm:$0xff]
      %v514 = vld [vmem:[%s490 + $0x110] sm:$0xff]
      %v515 = vld [vmem:[%s490 + $0x120] sm:$0xff]
      %v516 = vld [vmem:[%s490 + $0x128] sm:$0xff]
      %v517 = vld [vmem:[%s490 + $0x138] sm:$0xff]
      %v518 = vld [vmem:[%s490 + $0x140] sm:$0xff]
      %v519 = vld [vmem:[%s490 + $0x150] sm:$0xff]
      %v520 = vld [vmem:[%s490 + $0x158] sm:$0xff]
      %v521 = vld [vmem:[%s490 + $0x168] sm:$0xff]
      %v522 = vld [vmem:[%s490 + $0x170] sm:$0xff]
      %v523 = vld [vmem:[%s490 + $0x1] sm:$0xff]
      %v524 = vld [vmem:[%s490 + $0x9] sm:$0xff]
      %v525 = vld [vmem:[%s490 + $0x19] sm:$0xff]
      %v526 = vld [vmem:[%s490 + $0x21] sm:$0xff]
      %v527 = vld [vmem:[%s490 + $0x31] sm:$0xff]
      %v528 = vld [vmem:[%s490 + $0x39] sm:$0xff]
      %v529 = vld [vmem:[%s490 + $0x49] sm:$0xff]
      %v530 = vld [vmem:[%s490 + $0x51] sm:$0xff]
      %v531 = vld [vmem:[%s490 + $0x61] sm:$0xff]
      %v532 = vld [vmem:[%s490 + $0x69] sm:$0xff]
      %v533 = vld [vmem:[%s490 + $0x79] sm:$0xff]
      %v534 = vld [vmem:[%s490 + $0x81] sm:$0xff]
      %v535 = vld [vmem:[%s490 + $0x91] sm:$0xff]
      %v536 = vld [vmem:[%s490 + $0x99] sm:$0xff]
      %v537 = vld [vmem:[%s490 + $0xa9] sm:$0xff]
      %v538 = vld [vmem:[%s490 + $0xb1] sm:$0xff]
      %v539 = vld [vmem:[%s490 + $0xc1] sm:$0xff]
      %v540 = vld [vmem:[%s490 + $0xc9] sm:$0xff]
      %v541 = vld [vmem:[%s490 + $0xd9] sm:$0xff]
      %v542 = vld [vmem:[%s490 + $0xe1] sm:$0xff]
      %v543 = vld [vmem:[%s490 + $0xf1] sm:$0xff]
      %v544 = vld [vmem:[%s490 + $0xf9] sm:$0xff]
      %v545 = vld [vmem:[%s490 + $0x109] sm:$0xff]
      %v546 = vld [vmem:[%s490 + $0x111] sm:$0xff]
      %v547 = vld [vmem:[%s490 + $0x121] sm:$0xff]
      %v548 = vld [vmem:[%s490 + $0x129] sm:$0xff]
      %v549 = vld [vmem:[%s490 + $0x139] sm:$0xff]
      %v550 = vld [vmem:[%s490 + $0x141] sm:$0xff]
      %v551 = vld [vmem:[%s490 + $0x151] sm:$0xff]
      %v552 = vld [vmem:[%s490 + $0x159] sm:$0xff]
      %v553 = vld [vmem:[%s490 + $0x169] sm:$0xff]
      %v554 = vld [vmem:[%s490 + $0x171] sm:$0xff]
      %v555 = vld [vmem:[%s490 + $0x2] sm:$0xff]
      %v556 = vld [vmem:[%s490 + $0xa] sm:$0xff]
      %v557 = vld [vmem:[%s490 + $0x1a] sm:$0xff]
      %v558 = vld [vmem:[%s490 + $0x22] sm:$0xff]
      %v559 = vld [vmem:[%s490 + $0x32] sm:$0xff]
      %v560 = vld [vmem:[%s490 + $0x3a] sm:$0xff]
      %v561 = vld [vmem:[%s490 + $0x4a] sm:$0xff]
      %v562 = vld [vmem:[%s490 + $0x52] sm:$0xff]
      %v563 = vld [vmem:[%s490 + $0x62] sm:$0xff]
      %v564 = vld [vmem:[%s490 + $0x6a] sm:$0xff]
      %v565 = vld [vmem:[%s490 + $0x7a] sm:$0xff]
      %v566 = vld [vmem:[%s490 + $0x82] sm:$0xff]
      %v567 = vld [vmem:[%s490 + $0x92] sm:$0xff]
      %v568 = vld [vmem:[%s490 + $0x9a] sm:$0xff]
      %v569 = vld [vmem:[%s490 + $0xaa] sm:$0xff]
      %v570 = vld [vmem:[%s490 + $0xb2] sm:$0xff]
      %v571 = vld [vmem:[%s490 + $0xc2] sm:$0xff]
      %v572 = vld [vmem:[%s490 + $0xca] sm:$0xff]
      %v573 = vld [vmem:[%s490 + $0xda] sm:$0xff]
      %v574 = vld [vmem:[%s490 + $0xe2] sm:$0xff]
      %v575 = vld [vmem:[%s490 + $0xf2] sm:$0xff]
      %v576 = vld [vmem:[%s490 + $0xfa] sm:$0xff]
      %v577 = vld [vmem:[%s490 + $0x10a] sm:$0xff]
      %v578 = vld [vmem:[%s490 + $0x112] sm:$0xff]
      %v579 = vld [vmem:[%s490 + $0x122] sm:$0xff]
      %v580 = vld [vmem:[%s490 + $0x12a] sm:$0xff]
      %v581 = vld [vmem:[%s490 + $0x13a] sm:$0xff]
      %v582 = vld [vmem:[%s490 + $0x142] sm:$0xff]
      %v583 = vld [vmem:[%s490 + $0x152] sm:$0xff]
      %v584 = vld [vmem:[%s490 + $0x15a] sm:$0xff]
      %v585 = vld [vmem:[%s490 + $0x16a] sm:$0xff]
      %v586 = vld [vmem:[%s490 + $0x172] sm:$0xff]
      %619 = vrot.lane.b32.xlu0 %v362, 16
      %v620 = vpop.permute.xlu0 %619
      %621 = vrot.lane.b32.xlu0 %v363, 16
      %v622 = vpop.permute.xlu0 %621
      %623 = vrot.lane.b32.xlu0 %v364, 16
      %v624 = vpop.permute.xlu0 %623
      %625 = vrot.lane.b32.xlu0 %v365, 16
      %v626 = vpop.permute.xlu0 %625
      %627 = vrot.lane.b32.xlu0 %v366, 16
      %v628 = vpop.permute.xlu0 %627
      %629 = vrot.lane.b32.xlu0 %v367, 16
      %v630 = vpop.permute.xlu0 %629
      %631 = vrot.lane.b32.xlu0 %v368, 16
      %v632 = vpop.permute.xlu0 %631
      %633 = vrot.lane.b32.xlu0 %v369, 16
      %v634 = vpop.permute.xlu0 %633
      %635 = vrot.lane.b32.xlu0 %v370, 16
      %v636 = vpop.permute.xlu0 %635
      %637 = vrot.lane.b32.xlu0 %v371, 16
      %v638 = vpop.permute.xlu0 %637
      %639 = vrot.lane.b32.xlu0 %v372, 16
      %v640 = vpop.permute.xlu0 %639
      %641 = vrot.lane.b32.xlu0 %v373, 16
      %v642 = vpop.permute.xlu0 %641
      %643 = vrot.lane.b32.xlu0 %v374, 16
      %v644 = vpop.permute.xlu0 %643
      %645 = vrot.lane.b32.xlu0 %v375, 16
      %v646 = vpop.permute.xlu0 %645
      %647 = vrot.lane.b32.xlu0 %v376, 16
      %v648 = vpop.permute.xlu0 %647
      %649 = vrot.lane.b32.xlu0 %v377, 16
      %v650 = vpop.permute.xlu0 %649
      %651 = vrot.lane.b32.xlu0 %v378, 16
      %v652 = vpop.permute.xlu0 %651
      %653 = vrot.lane.b32.xlu0 %v379, 16
      %v654 = vpop.permute.xlu0 %653
      %655 = vrot.lane.b32.xlu0 %v380, 16
      %v656 = vpop.permute.xlu0 %655
      %657 = vrot.lane.b32.xlu0 %v381, 16
      %v658 = vpop.permute.xlu0 %657
      %659 = vrot.lane.b32.xlu0 %v382, 16
      %v660 = vpop.permute.xlu0 %659
      %661 = vrot.lane.b32.xlu0 %v383, 16
      %v662 = vpop.permute.xlu0 %661
      %663 = vrot.lane.b32.xlu0 %v384, 16
      %v664 = vpop.permute.xlu0 %663
      %665 = vrot.lane.b32.xlu0 %v385, 16
      %v666 = vpop.permute.xlu0 %665
      %667 = vrot.lane.b32.xlu0 %v386, 16
      %v668 = vpop.permute.xlu0 %667
      %669 = vrot.lane.b32.xlu0 %v387, 16
      %v670 = vpop.permute.xlu0 %669
      %671 = vrot.lane.b32.xlu0 %v388, 16
      %v672 = vpop.permute.xlu0 %671
      %673 = vrot.lane.b32.xlu0 %v389, 16
      %v674 = vpop.permute.xlu0 %673
      %675 = vrot.lane.b32.xlu0 %v390, 16
      %v676 = vpop.permute.xlu0 %675
      %677 = vrot.lane.b32.xlu0 %v391, 16
      %v678 = vpop.permute.xlu0 %677
      %679 = vrot.lane.b32.xlu0 %v392, 16
      %v680 = vpop.permute.xlu0 %679
      %681 = vrot.lane.b32.xlu0 %v393, 16
      %v682 = vpop.permute.xlu0 %681
      %747 = vrot.lane.b32.xlu0 %v394, 32
      %v748 = vpop.permute.xlu0 %747
      %749 = vrot.lane.b32.xlu0 %v395, 32
      %v750 = vpop.permute.xlu0 %749
      %751 = vrot.lane.b32.xlu0 %v396, 32
      %v752 = vpop.permute.xlu0 %751
      %753 = vrot.lane.b32.xlu0 %v397, 32
      %v754 = vpop.permute.xlu0 %753
      %755 = vrot.lane.b32.xlu0 %v398, 32
      %v756 = vpop.permute.xlu0 %755
      %757 = vrot.lane.b32.xlu0 %v399, 32
      %v758 = vpop.permute.xlu0 %757
      %759 = vrot.lane.b32.xlu0 %v400, 32
      %v760 = vpop.permute.xlu0 %759
      %761 = vrot.lane.b32.xlu0 %v401, 32
      %v762 = vpop.permute.xlu0 %761
      %763 = vrot.lane.b32.xlu0 %v402, 32
      %v764 = vpop.permute.xlu0 %763
      %765 = vrot.lane.b32.xlu0 %v403, 32
      %v766 = vpop.permute.xlu0 %765
      %767 = vrot.lane.b32.xlu0 %v404, 32
      %v768 = vpop.permute.xlu0 %767
      %769 = vrot.lane.b32.xlu0 %v405, 32
      %v770 = vpop.permute.xlu0 %769
      %771 = vrot.lane.b32.xlu0 %v406, 32
      %v772 = vpop.permute.xlu0 %771
      %773 = vrot.lane.b32.xlu0 %v407, 32
      %v774 = vpop.permute.xlu0 %773
      %775 = vrot.lane.b32.xlu0 %v408, 32
      %v776 = vpop.permute.xlu0 %775
      %777 = vrot.lane.b32.xlu0 %v409, 32
      %v778 = vpop.permute.xlu0 %777
      %779 = vrot.lane.b32.xlu0 %v410, 32
      %v780 = vpop.permute.xlu0 %779
      %781 = vrot.lane.b32.xlu0 %v411, 32
      %v782 = vpop.permute.xlu0 %781
      %783 = vrot.lane.b32.xlu0 %v412, 32
      %v784 = vpop.permute.xlu0 %783
      %785 = vrot.lane.b32.xlu0 %v413, 32
      %v786 = vpop.permute.xlu0 %785
      %787 = vrot.lane.b32.xlu0 %v414, 32
      %v788 = vpop.permute.xlu0 %787
      %789 = vrot.lane.b32.xlu0 %v415, 32
      %v790 = vpop.permute.xlu0 %789
      %791 = vrot.lane.b32.xlu0 %v416, 32
      %v792 = vpop.permute.xlu0 %791
      %793 = vrot.lane.b32.xlu0 %v417, 32
      %v794 = vpop.permute.xlu0 %793
      %795 = vrot.lane.b32.xlu0 %v418, 32
      %v796 = vpop.permute.xlu0 %795
      %797 = vrot.lane.b32.xlu0 %v419, 32
      %v798 = vpop.permute.xlu0 %797
      %799 = vrot.lane.b32.xlu0 %v420, 32
      %v800 = vpop.permute.xlu0 %799
      %801 = vrot.lane.b32.xlu0 %v421, 32
      %v802 = vpop.permute.xlu0 %801
      %803 = vrot.lane.b32.xlu0 %v422, 32
      %v804 = vpop.permute.xlu0 %803
      %805 = vrot.lane.b32.xlu0 %v423, 32
      %v806 = vpop.permute.xlu0 %805
      %807 = vrot.lane.b32.xlu0 %v424, 32
      %v808 = vpop.permute.xlu0 %807
      %809 = vrot.lane.b32.xlu0 %v425, 32
      %v810 = vpop.permute.xlu0 %809
      %875 = vrot.lane.b32.xlu0 %v426, 48
      %v876 = vpop.permute.xlu0 %875
      %877 = vrot.lane.b32.xlu0 %v427, 48
      %v878 = vpop.permute.xlu0 %877
      %879 = vrot.lane.b32.xlu0 %v428, 48
      %v880 = vpop.permute.xlu0 %879
      %881 = vrot.lane.b32.xlu0 %v429, 48
      %v882 = vpop.permute.xlu0 %881
      %883 = vrot.lane.b32.xlu0 %v430, 48
      %v884 = vpop.permute.xlu0 %883
      %885 = vrot.lane.b32.xlu0 %v431, 48
      %v886 = vpop.permute.xlu0 %885
      %887 = vrot.lane.b32.xlu0 %v432, 48
      %v888 = vpop.permute.xlu0 %887
      %889 = vrot.lane.b32.xlu0 %v433, 48
      %v890 = vpop.permute.xlu0 %889
      %891 = vrot.lane.b32.xlu0 %v434, 48
      %v892 = vpop.permute.xlu0 %891
      %893 = vrot.lane.b32.xlu0 %v435, 48
      %v894 = vpop.permute.xlu0 %893
      %895 = vrot.lane.b32.xlu0 %v436, 48
      %v896 = vpop.permute.xlu0 %895
      %897 = vrot.lane.b32.xlu0 %v437, 48
      %v898 = vpop.permute.xlu0 %897
      %899 = vrot.lane.b32.xlu0 %v438, 48
      %v900 = vpop.permute.xlu0 %899
      %901 = vrot.lane.b32.xlu0 %v439, 48
      %v902 = vpop.permute.xlu0 %901
      %903 = vrot.lane.b32.xlu0 %v440, 48
      %v904 = vpop.permute.xlu0 %903
      %905 = vrot.lane.b32.xlu0 %v441, 48
      %v906 = vpop.permute.xlu0 %905
      %907 = vrot.lane.b32.xlu0 %v442, 48
      %v908 = vpop.permute.xlu0 %907
      %909 = vrot.lane.b32.xlu0 %v443, 48
      %v910 = vpop.permute.xlu0 %909
      %911 = vrot.lane.b32.xlu0 %v444, 48
      %v912 = vpop.permute.xlu0 %911
      %913 = vrot.lane.b32.xlu0 %v445, 48
      %v914 = vpop.permute.xlu0 %913
      %915 = vrot.lane.b32.xlu0 %v446, 48
      %v916 = vpop.permute.xlu0 %915
      %917 = vrot.lane.b32.xlu0 %v447, 48
      %v918 = vpop.permute.xlu0 %917
      %919 = vrot.lane.b32.xlu0 %v448, 48
      %v920 = vpop.permute.xlu0 %919
      %921 = vrot.lane.b32.xlu0 %v449, 48
      %v922 = vpop.permute.xlu0 %921
      %923 = vrot.lane.b32.xlu0 %v450, 48
      %v924 = vpop.permute.xlu0 %923
      %925 = vrot.lane.b32.xlu0 %v451, 48
      %v926 = vpop.permute.xlu0 %925
      %927 = vrot.lane.b32.xlu0 %v452, 48
      %v928 = vpop.permute.xlu0 %927
      %929 = vrot.lane.b32.xlu0 %v453, 48
      %v930 = vpop.permute.xlu0 %929
      %931 = vrot.lane.b32.xlu0 %v454, 48
      %v932 = vpop.permute.xlu0 %931
      %933 = vrot.lane.b32.xlu0 %v455, 48
      %v934 = vpop.permute.xlu0 %933
      %935 = vrot.lane.b32.xlu0 %v456, 48
      %v936 = vpop.permute.xlu0 %935
      %937 = vrot.lane.b32.xlu0 %v457, 48
      %v938 = vpop.permute.xlu0 %937
      %1003 = vrot.lane.b32.xlu0 %v280, 64
      %v1004 = vpop.permute.xlu0 %1003
      %1005 = vrot.lane.b32.xlu0 %v281, 64
      %v1006 = vpop.permute.xlu0 %1005
      %1007 = vrot.lane.b32.xlu0 %v282, 64
      %v1008 = vpop.permute.xlu0 %1007
      %1009 = vrot.lane.b32.xlu0 %v283, 64
      %v1010 = vpop.permute.xlu0 %1009
      %1011 = vrot.lane.b32.xlu0 %v284, 64
      %v1012 = vpop.permute.xlu0 %1011
      %1013 = vrot.lane.b32.xlu0 %v285, 64
      %v1014 = vpop.permute.xlu0 %1013
      %1015 = vrot.lane.b32.xlu0 %v286, 64
      %v1016 = vpop.permute.xlu0 %1015
      %1017 = vrot.lane.b32.xlu0 %v287, 64
      %v1018 = vpop.permute.xlu0 %1017
      %1019 = vrot.lane.b32.xlu0 %v288, 64
      %v1020 = vpop.permute.xlu0 %1019
      %1021 = vrot.lane.b32.xlu0 %v289, 64
      %v1022 = vpop.permute.xlu0 %1021
      %1023 = vrot.lane.b32.xlu0 %v290, 64
      %v1024 = vpop.permute.xlu0 %1023
      %1025 = vrot.lane.b32.xlu0 %v291, 64
      %v1026 = vpop.permute.xlu0 %1025
      %1027 = vrot.lane.b32.xlu0 %v292, 64
      %v1028 = vpop.permute.xlu0 %1027
      %1029 = vrot.lane.b32.xlu0 %v293, 64
      %v1030 = vpop.permute.xlu0 %1029
      %1031 = vrot.lane.b32.xlu0 %v294, 64
      %v1032 = vpop.permute.xlu0 %1031
      %1033 = vrot.lane.b32.xlu0 %v295, 64
      %v1034 = vpop.permute.xlu0 %1033
      %1035 = vrot.lane.b32.xlu0 %v296, 64
      %v1036 = vpop.permute.xlu0 %1035
      %1037 = vrot.lane.b32.xlu0 %v297, 64
      %v1038 = vpop.permute.xlu0 %1037
      %1039 = vrot.lane.b32.xlu0 %v298, 64
      %v1040 = vpop.permute.xlu0 %1039
      %1041 = vrot.lane.b32.xlu0 %v299, 64
      %v1042 = vpop.permute.xlu0 %1041
      %1043 = vrot.lane.b32.xlu0 %v300, 64
      %v1044 = vpop.permute.xlu0 %1043
      %1045 = vrot.lane.b32.xlu0 %v301, 64
      %v1046 = vpop.permute.xlu0 %1045
      %1047 = vrot.lane.b32.xlu0 %v302, 64
      %v1048 = vpop.permute.xlu0 %1047
      %1049 = vrot.lane.b32.xlu0 %v303, 64
      %v1050 = vpop.permute.xlu0 %1049
      %1051 = vrot.lane.b32.xlu0 %v304, 64
      %v1052 = vpop.permute.xlu0 %1051
      %1053 = vrot.lane.b32.xlu0 %v305, 64
      %v1054 = vpop.permute.xlu0 %1053
      %1055 = vrot.lane.b32.xlu0 %v306, 64
      %v1056 = vpop.permute.xlu0 %1055
      %1057 = vrot.lane.b32.xlu0 %v307, 64
      %v1058 = vpop.permute.xlu0 %1057
      %1059 = vrot.lane.b32.xlu0 %v308, 64
      %v1060 = vpop.permute.xlu0 %1059
      %1061 = vrot.lane.b32.xlu0 %v309, 64
      %v1062 = vpop.permute.xlu0 %1061
      %1063 = vrot.lane.b32.xlu0 %v310, 64
      %v1064 = vpop.permute.xlu0 %1063
      %1065 = vrot.lane.b32.xlu0 %v311, 64
      %v1066 = vpop.permute.xlu0 %1065
      %1131 = vrot.lane.b32.xlu0 %v458, 80
      %v1132 = vpop.permute.xlu0 %1131
      %1133 = vrot.lane.b32.xlu0 %v459, 80
      %v1134 = vpop.permute.xlu0 %1133
      %1135 = vrot.lane.b32.xlu0 %v460, 80
      %v1136 = vpop.permute.xlu0 %1135
      %1137 = vrot.lane.b32.xlu0 %v461, 80
      %v1138 = vpop.permute.xlu0 %1137
      %1139 = vrot.lane.b32.xlu0 %v462, 80
      %v1140 = vpop.permute.xlu0 %1139
      %1141 = vrot.lane.b32.xlu0 %v463, 80
      %v1142 = vpop.permute.xlu0 %1141
      %1143 = vrot.lane.b32.xlu0 %v464, 80
      %v1144 = vpop.permute.xlu0 %1143
      %1145 = vrot.lane.b32.xlu0 %v465, 80
      %v1146 = vpop.permute.xlu0 %1145
      %1147 = vrot.lane.b32.xlu0 %v466, 80
      %v1148 = vpop.permute.xlu0 %1147
      %1149 = vrot.lane.b32.xlu0 %v467, 80
      %v1150 = vpop.permute.xlu0 %1149
      %1151 = vrot.lane.b32.xlu0 %v468, 80
      %v1152 = vpop.permute.xlu0 %1151
      %1153 = vrot.lane.b32.xlu0 %v469, 80
      %v1154 = vpop.permute.xlu0 %1153
      %1155 = vrot.lane.b32.xlu0 %v470, 80
      %v1156 = vpop.permute.xlu0 %1155
      %1157 = vrot.lane.b32.xlu0 %v471, 80
      %v1158 = vpop.permute.xlu0 %1157
      %1159 = vrot.lane.b32.xlu0 %v472, 80
      %v1160 = vpop.permute.xlu0 %1159
      %1161 = vrot.lane.b32.xlu0 %v473, 80
      %v1162 = vpop.permute.xlu0 %1161
      %1163 = vrot.lane.b32.xlu0 %v474, 80
      %v1164 = vpop.permute.xlu0 %1163
      %1165 = vrot.lane.b32.xlu0 %v475, 80
      %v1166 = vpop.permute.xlu0 %1165
      %1167 = vrot.lane.b32.xlu0 %v476, 80
      %v1168 = vpop.permute.xlu0 %1167
      %1169 = vrot.lane.b32.xlu0 %v477, 80
      %v1170 = vpop.permute.xlu0 %1169
      %1171 = vrot.lane.b32.xlu0 %v478, 80
      %v1172 = vpop.permute.xlu0 %1171
      %1173 = vrot.lane.b32.xlu0 %v479, 80
      %v1174 = vpop.permute.xlu0 %1173
      %1175 = vrot.lane.b32.xlu0 %v480, 80
      %v1176 = vpop.permute.xlu0 %1175
      %1177 = vrot.lane.b32.xlu0 %v481, 80
      %v1178 = vpop.permute.xlu0 %1177
      %1179 = vrot.lane.b32.xlu0 %v482, 80
      %v1180 = vpop.permute.xlu0 %1179
      %1181 = vrot.lane.b32.xlu0 %v483, 80
      %v1182 = vpop.permute.xlu0 %1181
      %1183 = vrot.lane.b32.xlu0 %v484, 80
      %v1184 = vpop.permute.xlu0 %1183
      %1185 = vrot.lane.b32.xlu0 %v485, 80
      %v1186 = vpop.permute.xlu0 %1185
      %1187 = vrot.lane.b32.xlu0 %v486, 80
      %v1188 = vpop.permute.xlu0 %1187
      %1189 = vrot.lane.b32.xlu0 %v487, 80
      %v1190 = vpop.permute.xlu0 %1189
      %1191 = vrot.lane.b32.xlu0 %v488, 80
      %v1192 = vpop.permute.xlu0 %1191
      %1193 = vrot.lane.b32.xlu0 %v489, 80
      %v1194 = vpop.permute.xlu0 %1193
      %1259 = vrot.lane.b32.xlu0 %v491, 96
      %v1260 = vpop.permute.xlu0 %1259
      %1261 = vrot.lane.b32.xlu0 %v492, 96
      %v1262 = vpop.permute.xlu0 %1261
      %1263 = vrot.lane.b32.xlu0 %v493, 96
      %v1264 = vpop.permute.xlu0 %1263
      %1265 = vrot.lane.b32.xlu0 %v494, 96
      %v1266 = vpop.permute.xlu0 %1265
      %1267 = vrot.lane.b32.xlu0 %v495, 96
      %v1268 = vpop.permute.xlu0 %1267
      %1269 = vrot.lane.b32.xlu0 %v496, 96
      %v1270 = vpop.permute.xlu0 %1269
      %1271 = vrot.lane.b32.xlu0 %v497, 96
      %v1272 = vpop.permute.xlu0 %1271
      %1273 = vrot.lane.b32.xlu0 %v498, 96
      %v1274 = vpop.permute.xlu0 %1273
      %1275 = vrot.lane.b32.xlu0 %v499, 96
      %v1276 = vpop.permute.xlu0 %1275
      %1277 = vrot.lane.b32.xlu0 %v500, 96
      %v1278 = vpop.permute.xlu0 %1277
      %1279 = vrot.lane.b32.xlu0 %v501, 96
      %v1280 = vpop.permute.xlu0 %1279
      %1281 = vrot.lane.b32.xlu0 %v502, 96
      %v1282 = vpop.permute.xlu0 %1281
      %1283 = vrot.lane.b32.xlu0 %v503, 96
      %v1284 = vpop.permute.xlu0 %1283
      %1285 = vrot.lane.b32.xlu0 %v504, 96
      %v1286 = vpop.permute.xlu0 %1285
      %1287 = vrot.lane.b32.xlu0 %v505, 96
      %v1288 = vpop.permute.xlu0 %1287
      %1289 = vrot.lane.b32.xlu0 %v506, 96
      %v1290 = vpop.permute.xlu0 %1289
      %1291 = vrot.lane.b32.xlu0 %v507, 96
      %v1292 = vpop.permute.xlu0 %1291
      %1293 = vrot.lane.b32.xlu0 %v508, 96
      %v1294 = vpop.permute.xlu0 %1293
      %1295 = vrot.lane.b32.xlu0 %v509, 96
      %v1296 = vpop.permute.xlu0 %1295
      %1297 = vrot.lane.b32.xlu0 %v510, 96
      %v1298 = vpop.permute.xlu0 %1297
      %1299 = vrot.lane.b32.xlu0 %v511, 96
      %v1300 = vpop.permute.xlu0 %1299
      %1301 = vrot.lane.b32.xlu0 %v512, 96
      %v1302 = vpop.permute.xlu0 %1301
      %1303 = vrot.lane.b32.xlu0 %v513, 96
      %v1304 = vpop.permute.xlu0 %1303
      %1305 = vrot.lane.b32.xlu0 %v514, 96
      %v1306 = vpop.permute.xlu0 %1305
      %1307 = vrot.lane.b32.xlu0 %v515, 96
      %v1308 = vpop.permute.xlu0 %1307
      %1309 = vrot.lane.b32.xlu0 %v516, 96
      %v1310 = vpop.permute.xlu0 %1309
      %1311 = vrot.lane.b32.xlu0 %v517, 96
      %v1312 = vpop.permute.xlu0 %1311
      %1313 = vrot.lane.b32.xlu0 %v518, 96
      %v1314 = vpop.permute.xlu0 %1313
      %1315 = vrot.lane.b32.xlu0 %v519, 96
      %v1316 = vpop.permute.xlu0 %1315
      %1317 = vrot.lane.b32.xlu0 %v520, 96
      %v1318 = vpop.permute.xlu0 %1317
      %1319 = vrot.lane.b32.xlu0 %v521, 96
      %v1320 = vpop.permute.xlu0 %1319
      %1321 = vrot.lane.b32.xlu0 %v522, 96
      %v1322 = vpop.permute.xlu0 %1321
      %1387 = vrot.lane.b32.xlu0 %v523, 112
      %v1388 = vpop.permute.xlu0 %1387
      %1389 = vrot.lane.b32.xlu0 %v524, 112
      %v1390 = vpop.permute.xlu0 %1389
      %1391 = vrot.lane.b32.xlu0 %v525, 112
      %v1392 = vpop.permute.xlu0 %1391
      %1393 = vrot.lane.b32.xlu0 %v526, 112
      %v1394 = vpop.permute.xlu0 %1393
      %1395 = vrot.lane.b32.xlu0 %v527, 112
      %v1396 = vpop.permute.xlu0 %1395
      %1397 = vrot.lane.b32.xlu0 %v528, 112
      %v1398 = vpop.permute.xlu0 %1397
      %1399 = vrot.lane.b32.xlu0 %v529, 112
      %v1400 = vpop.permute.xlu0 %1399
      %1401 = vrot.lane.b32.xlu0 %v530, 112
      %v1402 = vpop.permute.xlu0 %1401
      %1403 = vrot.lane.b32.xlu0 %v531, 112
      %v1404 = vpop.permute.xlu0 %1403
      %1405 = vrot.lane.b32.xlu0 %v532, 112
      %v1406 = vpop.permute.xlu0 %1405
      %1407 = vrot.lane.b32.xlu0 %v533, 112
      %v1408 = vpop.permute.xlu0 %1407
      %1409 = vrot.lane.b32.xlu0 %v534, 112
      %v1410 = vpop.permute.xlu0 %1409
      %1411 = vrot.lane.b32.xlu0 %v535, 112
      %v1412 = vpop.permute.xlu0 %1411
      %1413 = vrot.lane.b32.xlu0 %v536, 112
      %v1414 = vpop.permute.xlu0 %1413
      %1415 = vrot.lane.b32.xlu0 %v537, 112
      %v1416 = vpop.permute.xlu0 %1415
      %1417 = vrot.lane.b32.xlu0 %v538, 112
      %v1418 = vpop.permute.xlu0 %1417
      %1419 = vrot.lane.b32.xlu0 %v539, 112
      %v1420 = vpop.permute.xlu0 %1419
      %1421 = vrot.lane.b32.xlu0 %v540, 112
      %v1422 = vpop.permute.xlu0 %1421
      %1423 = vrot.lane.b32.xlu0 %v541, 112
      %v1424 = vpop.permute.xlu0 %1423
      %1425 = vrot.lane.b32.xlu0 %v542, 112
      %v1426 = vpop.permute.xlu0 %1425
      %1427 = vrot.lane.b32.xlu0 %v543, 112
      %v1428 = vpop.permute.xlu0 %1427
      %1429 = vrot.lane.b32.xlu0 %v544, 112
      %v1430 = vpop.permute.xlu0 %1429
      %1431 = vrot.lane.b32.xlu0 %v545, 112
      %v1432 = vpop.permute.xlu0 %1431
      %1433 = vrot.lane.b32.xlu0 %v546, 112
      %v1434 = vpop.permute.xlu0 %1433
      %1435 = vrot.lane.b32.xlu0 %v547, 112
      %v1436 = vpop.permute.xlu0 %1435
      %1437 = vrot.lane.b32.xlu0 %v548, 112
      %v1438 = vpop.permute.xlu0 %1437
      %1439 = vrot.lane.b32.xlu0 %v549, 112
      %v1440 = vpop.permute.xlu0 %1439
      %1441 = vrot.lane.b32.xlu0 %v550, 112
      %v1442 = vpop.permute.xlu0 %1441
      %1443 = vrot.lane.b32.xlu0 %v551, 112
      %v1444 = vpop.permute.xlu0 %1443
      %1445 = vrot.lane.b32.xlu0 %v552, 112
      %v1446 = vpop.permute.xlu0 %1445
      %1447 = vrot.lane.b32.xlu0 %v553, 112
      %v1448 = vpop.permute.xlu0 %1447
      %1449 = vrot.lane.b32.xlu0 %v554, 112
      %v1450 = vpop.permute.xlu0 %1449
      %vm1483 = vcmask 130048
      %v1484 = vsel %vm1483, %v330, %v620
      %v1485 = vsel %vm1483, %v331, %v622
      %v1486 = vsel %vm1483, %v332, %v624
      %v1487 = vsel %vm1483, %v333, %v626
      %v1488 = vsel %vm1483, %v334, %v628
      %v1489 = vsel %vm1483, %v335, %v630
      %v1490 = vsel %vm1483, %v336, %v632
      %v1491 = vsel %vm1483, %v337, %v634
      %v1492 = vsel %vm1483, %v338, %v636
      %v1493 = vsel %vm1483, %v339, %v638
      %v1494 = vsel %vm1483, %v340, %v640
      %v1495 = vsel %vm1483, %v341, %v642
      %v1496 = vsel %vm1483, %v342, %v644
      %v1497 = vsel %vm1483, %v343, %v646
      %v1498 = vsel %vm1483, %v344, %v648
      %v1499 = vsel %vm1483, %v345, %v650
      %v1500 = vsel %vm1483, %v346, %v652
      %v1501 = vsel %vm1483, %v347, %v654
      %v1502 = vsel %vm1483, %v348, %v656
      %v1503 = vsel %vm1483, %v349, %v658
      %v1504 = vsel %vm1483, %v350, %v660
      %v1505 = vsel %vm1483, %v351, %v662
      %v1506 = vsel %vm1483, %v352, %v664
      %v1507 = vsel %vm1483, %v353, %v666
      %v1508 = vsel %vm1483, %v354, %v668
      %v1509 = vsel %vm1483, %v355, %v670
      %v1510 = vsel %vm1483, %v356, %v672
      %v1511 = vsel %vm1483, %v357, %v674
      %v1512 = vsel %vm1483, %v358, %v676
      %v1513 = vsel %vm1483, %v359, %v678
      %v1514 = vsel %vm1483, %v360, %v680
      %v1515 = vsel %vm1483, %v361, %v682
      %vm1516 = vcmask 261120
      %v1517 = vsel %vm1516, %v1484, %v748
      %v1518 = vsel %vm1516, %v1485, %v750
      %v1519 = vsel %vm1516, %v1486, %v752
      %v1520 = vsel %vm1516, %v1487, %v754
      %v1521 = vsel %vm1516, %v1488, %v756
      %v1522 = vsel %vm1516, %v1489, %v758
      %v1523 = vsel %vm1516, %v1490, %v760
      %v1524 = vsel %vm1516, %v1491, %v762
      %v1525 = vsel %vm1516, %v1492, %v764
      %v1526 = vsel %vm1516, %v1493, %v766
      %v1527 = vsel %vm1516, %v1494, %v768
      %v1528 = vsel %vm1516, %v1495, %v770
      %v1529 = vsel %vm1516, %v1496, %v772
      %v1530 = vsel %vm1516, %v1497, %v774
      %v1531 = vsel %vm1516, %v1498, %v776
      %v1532 = vsel %vm1516, %v1499, %v778
      %v1533 = vsel %vm1516, %v1500, %v780
      %v1534 = vsel %vm1516, %v1501, %v782
      %v1535 = vsel %vm1516, %v1502, %v784
      %v1536 = vsel %vm1516, %v1503, %v786
      %v1537 = vsel %vm1516, %v1504, %v788
      %v1538 = vsel %vm1516, %v1505, %v790
      %v1539 = vsel %vm1516, %v1506, %v792
      %v1540 = vsel %vm1516, %v1507, %v794
      %v1541 = vsel %vm1516, %v1508, %v796
      %v1542 = vsel %vm1516, %v1509, %v798
      %v1543 = vsel %vm1516, %v1510, %v800
      %v1544 = vsel %vm1516, %v1511, %v802
      %v1545 = vsel %vm1516, %v1512, %v804
      %v1546 = vsel %vm1516, %v1513, %v806
      %v1547 = vsel %vm1516, %v1514, %v808
      %v1548 = vsel %vm1516, %v1515, %v810
      %vm1549 = vcmask 392192
      %v1550 = vsel %vm1549, %v1517, %v876
      %v1551 = vsel %vm1549, %v1518, %v878
      %v1552 = vsel %vm1549, %v1519, %v880
      %v1553 = vsel %vm1549, %v1520, %v882
      %v1554 = vsel %vm1549, %v1521, %v884
      %v1555 = vsel %vm1549, %v1522, %v886
      %v1556 = vsel %vm1549, %v1523, %v888
      %v1557 = vsel %vm1549, %v1524, %v890
      %v1558 = vsel %vm1549, %v1525, %v892
      %v1559 = vsel %vm1549, %v1526, %v894
      %v1560 = vsel %vm1549, %v1527, %v896
      %v1561 = vsel %vm1549, %v1528, %v898
      %v1562 = vsel %vm1549, %v1529, %v900
      %v1563 = vsel %vm1549, %v1530, %v902
      %v1564 = vsel %vm1549, %v1531, %v904
      %v1565 = vsel %vm1549, %v1532, %v906
      %v1566 = vsel %vm1549, %v1533, %v908
      %v1567 = vsel %vm1549, %v1534, %v910
      %v1568 = vsel %vm1549, %v1535, %v912
      %v1569 = vsel %vm1549, %v1536, %v914
      %v1570 = vsel %vm1549, %v1537, %v916
      %v1571 = vsel %vm1549, %v1538, %v918
      %v1572 = vsel %vm1549, %v1539, %v920
      %v1573 = vsel %vm1549, %v1540, %v922
      %v1574 = vsel %vm1549, %v1541, %v924
      %v1575 = vsel %vm1549, %v1542, %v926
      %v1576 = vsel %vm1549, %v1543, %v928
      %v1577 = vsel %vm1549, %v1544, %v930
      %v1578 = vsel %vm1549, %v1545, %v932
      %v1579 = vsel %vm1549, %v1546, %v934
      %v1580 = vsel %vm1549, %v1547, %v936
      %v1581 = vsel %vm1549, %v1548, %v938
      %vm1582 = vcmask 523264
      %v1583 = vsel %vm1582, %v1550, %v1004
      %v1584 = vsel %vm1582, %v1551, %v1006
      %v1585 = vsel %vm1582, %v1552, %v1008
      %v1586 = vsel %vm1582, %v1553, %v1010
      %v1587 = vsel %vm1582, %v1554, %v1012
      %v1588 = vsel %vm1582, %v1555, %v1014
      %v1589 = vsel %vm1582, %v1556, %v1016
      %v1590 = vsel %vm1582, %v1557, %v1018
      %v1591 = vsel %vm1582, %v1558, %v1020
      %v1592 = vsel %vm1582, %v1559, %v1022
      %v1593 = vsel %vm1582, %v1560, %v1024
      %v1594 = vsel %vm1582, %v1561, %v1026
      %v1595 = vsel %vm1582, %v1562, %v1028
      %v1596 = vsel %vm1582, %v1563, %v1030
      %v1597 = vsel %vm1582, %v1564, %v1032
      %v1598 = vsel %vm1582, %v1565, %v1034
      %v1599 = vsel %vm1582, %v1566, %v1036
      %v1600 = vsel %vm1582, %v1567, %v1038
      %v1601 = vsel %vm1582, %v1568, %v1040
      %v1602 = vsel %vm1582, %v1569, %v1042
      %v1603 = vsel %vm1582, %v1570, %v1044
      %v1604 = vsel %vm1582, %v1571, %v1046
      %v1605 = vsel %vm1582, %v1572, %v1048
      %v1606 = vsel %vm1582, %v1573, %v1050
      %v1607 = vsel %vm1582, %v1574, %v1052
      %v1608 = vsel %vm1582, %v1575, %v1054
      %v1609 = vsel %vm1582, %v1576, %v1056
      %v1610 = vsel %vm1582, %v1577, %v1058
      %v1611 = vsel %vm1582, %v1578, %v1060
      %v1612 = vsel %vm1582, %v1579, %v1062
      %v1613 = vsel %vm1582, %v1580, %v1064
      %v1614 = vsel %vm1582, %v1581, %v1066
      %vm1615 = vcmask 654336
      %v1616 = vsel %vm1615, %v1583, %v1132
      %v1617 = vsel %vm1615, %v1584, %v1134
      %v1618 = vsel %vm1615, %v1585, %v1136
      %v1619 = vsel %vm1615, %v1586, %v1138
      %v1620 = vsel %vm1615, %v1587, %v1140
      %v1621 = vsel %vm1615, %v1588, %v1142
      %v1622 = vsel %vm1615, %v1589, %v1144
      %v1623 = vsel %vm1615, %v1590, %v1146
      %v1624 = vsel %vm1615, %v1591, %v1148
      %v1625 = vsel %vm1615, %v1592, %v1150
      %v1626 = vsel %vm1615, %v1593, %v1152
      %v1627 = vsel %vm1615, %v1594, %v1154
      %v1628 = vsel %vm1615, %v1595, %v1156
      %v1629 = vsel %vm1615, %v1596, %v1158
      %v1630 = vsel %vm1615, %v1597, %v1160
      %v1631 = vsel %vm1615, %v1598, %v1162
      %v1632 = vsel %vm1615, %v1599, %v1164
      %v1633 = vsel %vm1615, %v1600, %v1166
      %v1634 = vsel %vm1615, %v1601, %v1168
      %v1635 = vsel %vm1615, %v1602, %v1170
      %v1636 = vsel %vm1615, %v1603, %v1172
      %v1637 = vsel %vm1615, %v1604, %v1174
      %v1638 = vsel %vm1615, %v1605, %v1176
      %v1639 = vsel %vm1615, %v1606, %v1178
      %v1640 = vsel %vm1615, %v1607, %v1180
      %v1641 = vsel %vm1615, %v1608, %v1182
      %v1642 = vsel %vm1615, %v1609, %v1184
      %v1643 = vsel %vm1615, %v1610, %v1186
      %v1644 = vsel %vm1615, %v1611, %v1188
      %v1645 = vsel %vm1615, %v1612, %v1190
      %v1646 = vsel %vm1615, %v1613, %v1192
      %v1647 = vsel %vm1615, %v1614, %v1194
      %vm1648 = vcmask 785408
      %v1649 = vsel %vm1648, %v1616, %v1260
      %v1650 = vsel %vm1648, %v1617, %v1262
      %v1651 = vsel %vm1648, %v1618, %v1264
      %v1652 = vsel %vm1648, %v1619, %v1266
      %v1653 = vsel %vm1648, %v1620, %v1268
      %v1654 = vsel %vm1648, %v1621, %v1270
      %v1655 = vsel %vm1648, %v1622, %v1272
      %v1656 = vsel %vm1648, %v1623, %v1274
      %v1657 = vsel %vm1648, %v1624, %v1276
      %v1658 = vsel %vm1648, %v1625, %v1278
      %v1659 = vsel %vm1648, %v1626, %v1280
      %v1660 = vsel %vm1648, %v1627, %v1282
      %v1661 = vsel %vm1648, %v1628, %v1284
      %v1662 = vsel %vm1648, %v1629, %v1286
      %v1663 = vsel %vm1648, %v1630, %v1288
      %v1664 = vsel %vm1648, %v1631, %v1290
      %v1665 = vsel %vm1648, %v1632, %v1292
      %v1666 = vsel %vm1648, %v1633, %v1294
      %v1667 = vsel %vm1648, %v1634, %v1296
      %v1668 = vsel %vm1648, %v1635, %v1298
      %v1669 = vsel %vm1648, %v1636, %v1300
      %v1670 = vsel %vm1648, %v1637, %v1302
      %v1671 = vsel %vm1648, %v1638, %v1304
      %v1672 = vsel %vm1648, %v1639, %v1306
      %v1673 = vsel %vm1648, %v1640, %v1308
      %v1674 = vsel %vm1648, %v1641, %v1310
      %v1675 = vsel %vm1648, %v1642, %v1312
      %v1676 = vsel %vm1648, %v1643, %v1314
      %v1677 = vsel %vm1648, %v1644, %v1316
      %v1678 = vsel %vm1648, %v1645, %v1318
      %v1679 = vsel %vm1648, %v1646, %v1320
      %v1680 = vsel %vm1648, %v1647, %v1322
      %vm1681 = vcmask 916480
      %v1682 = vsel %vm1681, %v1649, %v1388
      %v1683 = vsel %vm1681, %v1650, %v1390
      %v1684 = vsel %vm1681, %v1651, %v1392
      %v1685 = vsel %vm1681, %v1652, %v1394
      %v1686 = vsel %vm1681, %v1653, %v1396
      %v1687 = vsel %vm1681, %v1654, %v1398
      %v1688 = vsel %vm1681, %v1655, %v1400
      %v1689 = vsel %vm1681, %v1656, %v1402
      %v1690 = vsel %vm1681, %v1657, %v1404
      %v1691 = vsel %vm1681, %v1658, %v1406
      %v1692 = vsel %vm1681, %v1659, %v1408
      %v1693 = vsel %vm1681, %v1660, %v1410
      %v1694 = vsel %vm1681, %v1661, %v1412
      %v1695 = vsel %vm1681, %v1662, %v1414
      %v1696 = vsel %vm1681, %v1663, %v1416
      %v1697 = vsel %vm1681, %v1664, %v1418
      %v1698 = vsel %vm1681, %v1665, %v1420
      %v1699 = vsel %vm1681, %v1666, %v1422
      %v1700 = vsel %vm1681, %v1667, %v1424
      %v1701 = vsel %vm1681, %v1668, %v1426
      %v1702 = vsel %vm1681, %v1669, %v1428
      %v1703 = vsel %vm1681, %v1670, %v1430
      %v1704 = vsel %vm1681, %v1671, %v1432
      %v1705 = vsel %vm1681, %v1672, %v1434
      %v1706 = vsel %vm1681, %v1673, %v1436
      %v1707 = vsel %vm1681, %v1674, %v1438
      %v1708 = vsel %vm1681, %v1675, %v1440
      %v1709 = vsel %vm1681, %v1676, %v1442
      %v1710 = vsel %vm1681, %v1677, %v1444
      %v1711 = vsel %vm1681, %v1678, %v1446
      %v1712 = vsel %vm1681, %v1679, %v1448
      %v1713 = vsel %vm1681, %v1680, %v1450
      %v1715 = vsel %vm1483, %v555, 0
      %v1718 = vsel %vm1483, %v556, 0
      %v1721 = vsel %vm1483, %v557, 0
      %v1724 = vsel %vm1483, %v558, 0
      %v1727 = vsel %vm1483, %v559, 0
      %v1730 = vsel %vm1483, %v560, 0
      %v1733 = vsel %vm1483, %v561, 0
      %v1736 = vsel %vm1483, %v562, 0
      %v1739 = vsel %vm1483, %v563, 0
      %v1742 = vsel %vm1483, %v564, 0
      %v1745 = vsel %vm1483, %v565, 0
      %v1748 = vsel %vm1483, %v566, 0
      %v1751 = vsel %vm1483, %v567, 0
      %v1754 = vsel %vm1483, %v568, 0
      %v1757 = vsel %vm1483, %v569, 0
      %v1760 = vsel %vm1483, %v570, 0
      %v1763 = vsel %vm1483, %v571, 0
      %v1766 = vsel %vm1483, %v572, 0
      %v1769 = vsel %vm1483, %v573, 0
      %v1772 = vsel %vm1483, %v574, 0
      %v1775 = vsel %vm1483, %v575, 0
      %v1778 = vsel %vm1483, %v576, 0
      %v1781 = vsel %vm1483, %v577, 0
      %v1784 = vsel %vm1483, %v578, 0
      %v1787 = vsel %vm1483, %v579, 0
      %v1790 = vsel %vm1483, %v580, 0
      %v1793 = vsel %vm1483, %v581, 0
      %v1796 = vsel %vm1483, %v582, 0
      %v1799 = vsel %vm1483, %v583, 0
      %v1802 = vsel %vm1483, %v584, 0
      %v1805 = vsel %vm1483, %v585, 0
      %v1808 = vsel %vm1483, %v586, 0
      %1810 = vmatpush.msra.mxu0 %v327
      %1811 = vmatpush.msra.mxu0 %v326
      %1812 = vmatpush.msra.mxu0 %v325
      %1813 = vmatpush.msra.mxu0 %v324
      %1814 = vmatpush.msra.mxu0 %v323
      %1815 = vmatpush.msra.mxu0 %v322
      %1816 = vmatpush.msra.mxu0 %v321
      %1817 = vmatpush.msra.mxu0 %v320
      %1818 = vmatpush.msra.mxu0 %v319
      %1819 = vmatpush.msra.mxu0 %v318
      %1820 = vmatpush.msra.mxu0 %v317
      %1821 = vmatpush.msra.mxu0 %v316
      %1822 = vmatpush.msra.mxu0 %v315
      %1823 = vmatpush.msra.mxu0 %v314
      %1824 = vmatpush.msra.mxu0 %v313
      %1825 = vmatpush.msra.mxu0 %v312
      %1826 = vmatmul.f32.gmra.mxu0 %v1682
      %v1827 = vpop.f32.mrf.mxu0
      %v1828 = vadd.f32 0.0, %v1827
      %1829 = vmatmul.f32.gmra.mxu0 %v1683
      %v1830 = vpop.f32.mrf.mxu0
      %v1831 = vadd.f32 0.0, %v1830
      %1832 = vmatmul.f32.gmra.mxu0 %v1684
      %v1833 = vpop.f32.mrf.mxu0
      %v1834 = vadd.f32 0.0, %v1833
      %1835 = vmatmul.f32.gmra.mxu0 %v1685
      %v1836 = vpop.f32.mrf.mxu0
      %v1837 = vadd.f32 0.0, %v1836
      %1838 = vmatmul.f32.gmra.mxu0 %v1686
      %v1839 = vpop.f32.mrf.mxu0
      %v1840 = vadd.f32 0.0, %v1839
      %1841 = vmatmul.f32.gmra.mxu0 %v1687
      %v1842 = vpop.f32.mrf.mxu0
      %v1843 = vadd.f32 0.0, %v1842
      %1844 = vmatmul.f32.gmra.mxu0 %v1688
      %v1845 = vpop.f32.mrf.mxu0
      %v1846 = vadd.f32 0.0, %v1845
      %1847 = vmatmul.f32.gmra.mxu0 %v1689
      %v1848 = vpop.f32.mrf.mxu0
      %v1849 = vadd.f32 0.0, %v1848
      %1850 = vmatmul.f32.gmra.mxu0 %v1690
      %v1851 = vpop.f32.mrf.mxu0
      %v1852 = vadd.f32 0.0, %v1851
      %1853 = vmatmul.f32.gmra.mxu0 %v1691
      %v1854 = vpop.f32.mrf.mxu0
      %v1855 = vadd.f32 0.0, %v1854
      %1856 = vmatmul.f32.gmra.mxu0 %v1692
      %v1857 = vpop.f32.mrf.mxu0
      %v1858 = vadd.f32 0.0, %v1857
      %1859 = vmatmul.f32.gmra.mxu0 %v1693
      %v1860 = vpop.f32.mrf.mxu0
      %v1861 = vadd.f32 0.0, %v1860
      %1862 = vmatmul.f32.gmra.mxu0 %v1694
      %v1863 = vpop.f32.mrf.mxu0
      %v1864 = vadd.f32 0.0, %v1863
      %1865 = vmatmul.f32.gmra.mxu0 %v1695
      %v1866 = vpop.f32.mrf.mxu0
      %v1867 = vadd.f32 0.0, %v1866
      %1868 = vmatmul.f32.gmra.mxu0 %v1696
      %v1869 = vpop.f32.mrf.mxu0
      %v1870 = vadd.f32 0.0, %v1869
      %1871 = vmatmul.f32.gmra.mxu0 %v1697
      %v1872 = vpop.f32.mrf.mxu0
      %v1873 = vadd.f32 0.0, %v1872
      %1874 = vmatmul.f32.gmra.mxu0 %v1698
      %v1875 = vpop.f32.mrf.mxu0
      %v1876 = vadd.f32 0.0, %v1875
      %1877 = vmatmul.f32.gmra.mxu0 %v1699
      %v1878 = vpop.f32.mrf.mxu0
      %v1879 = vadd.f32 0.0, %v1878
      %1880 = vmatmul.f32.gmra.mxu0 %v1700
      %v1881 = vpop.f32.mrf.mxu0
      %v1882 = vadd.f32 0.0, %v1881
      %1883 = vmatmul.f32.gmra.mxu0 %v1701
      %v1884 = vpop.f32.mrf.mxu0
      %v1885 = vadd.f32 0.0, %v1884
      %1886 = vmatmul.f32.gmra.mxu0 %v1702
      %v1887 = vpop.f32.mrf.mxu0
      %v1888 = vadd.f32 0.0, %v1887
      %1889 = vmatmul.f32.gmra.mxu0 %v1703
      %v1890 = vpop.f32.mrf.mxu0
      %v1891 = vadd.f32 0.0, %v1890
      %1892 = vmatmul.f32.gmra.mxu0 %v1704
      %v1893 = vpop.f32.mrf.mxu0
      %v1894 = vadd.f32 0.0, %v1893
      %1895 = vmatmul.f32.gmra.mxu0 %v1705
      %v1896 = vpop.f32.mrf.mxu0
      %v1897 = vadd.f32 0.0, %v1896
      %1898 = vmatmul.f32.gmra.mxu0 %v1706
      %v1899 = vpop.f32.mrf.mxu0
      %v1900 = vadd.f32 0.0, %v1899
      %1901 = vmatmul.f32.gmra.mxu0 %v1707
      %v1902 = vpop.f32.mrf.mxu0
      %v1903 = vadd.f32 0.0, %v1902
      %1904 = vmatmul.f32.gmra.mxu0 %v1708
      %v1905 = vpop.f32.mrf.mxu0
      %v1906 = vadd.f32 0.0, %v1905
      %1907 = vmatmul.f32.gmra.mxu0 %v1709
      %v1908 = vpop.f32.mrf.mxu0
      %v1909 = vadd.f32 0.0, %v1908
      %1910 = vmatmul.f32.gmra.mxu0 %v1710
      %v1911 = vpop.f32.mrf.mxu0
      %v1912 = vadd.f32 0.0, %v1911
      %1913 = vmatmul.f32.gmra.mxu0 %v1711
      %v1914 = vpop.f32.mrf.mxu0
      %v1915 = vadd.f32 0.0, %v1914
      %1916 = vmatmul.f32.gmra.mxu0 %v1712
      %v1917 = vpop.f32.mrf.mxu0
      %v1918 = vadd.f32 0.0, %v1917
      %1919 = vmatmul.f32.gmra.mxu0 %v1713
      %v1920 = vpop.f32.mrf.mxu0
      %v1921 = vadd.f32 0.0, %v1920
      %1922 = vdwg.mxu0
      %1923 = vmatpush.msra.mxu0 0.0
      %1924 = vmatpush.msra.mxu0 0.0
      %1925 = vmatpush.msra.mxu0 0.0
      %1926 = vmatpush.msra.mxu0 0.0
      %1927 = vmatpush.msra.mxu0 0.0
      %1928 = vmatpush.msra.mxu0 0.0
      %1929 = vmatpush.msra.mxu0 0.0
      %1930 = vmatpush.msra.mxu0 0.0
      %1931 = vmatpush.msra.mxu0 0.0
      %1932 = vmatpush.msra.mxu0 0.0
      %1933 = vmatpush.msra.mxu0 0.0
      %1934 = vmatpush.msra.mxu0 0.0
      %1935 = vmatpush.msra.mxu0 0.0
      %1936 = vmatpush.msra.mxu0 0.0
      %1937 = vmatpush.msra.mxu0 %v329
      %1938 = vmatpush.msra.mxu0 %v328
      %1939 = vmatmul.f32.gmra.mxu0 %v1715
      %v1940 = vpop.f32.mrf.mxu0
      %v1941 = vadd.f32 %v1828, %v1940
      %1942 = vmatmul.f32.gmra.mxu0 %v1718
      %v1943 = vpop.f32.mrf.mxu0
      %v1944 = vadd.f32 %v1831, %v1943
      %1945 = vmatmul.f32.gmra.mxu0 %v1721
      %v1946 = vpop.f32.mrf.mxu0
      %v1947 = vadd.f32 %v1834, %v1946
      %1948 = vmatmul.f32.gmra.mxu0 %v1724
      %v1949 = vpop.f32.mrf.mxu0
      %v1950 = vadd.f32 %v1837, %v1949
      %1951 = vmatmul.f32.gmra.mxu0 %v1727
      %v1952 = vpop.f32.mrf.mxu0
      %v1953 = vadd.f32 %v1840, %v1952
      %1954 = vmatmul.f32.gmra.mxu0 %v1730
      %v1955 = vpop.f32.mrf.mxu0
      %v1956 = vadd.f32 %v1843, %v1955
      %1957 = vmatmul.f32.gmra.mxu0 %v1733
      %v1958 = vpop.f32.mrf.mxu0
      %v1959 = vadd.f32 %v1846, %v1958
      %1960 = vmatmul.f32.gmra.mxu0 %v1736
      %v1961 = vpop.f32.mrf.mxu0
      %v1962 = vadd.f32 %v1849, %v1961
      %1963 = vmatmul.f32.gmra.mxu0 %v1739
      %v1964 = vpop.f32.mrf.mxu0
      %v1965 = vadd.f32 %v1852, %v1964
      %1966 = vmatmul.f32.gmra.mxu0 %v1742
      %v1967 = vpop.f32.mrf.mxu0
      %v1968 = vadd.f32 %v1855, %v1967
      %1969 = vmatmul.f32.gmra.mxu0 %v1745
      %v1970 = vpop.f32.mrf.mxu0
      %v1971 = vadd.f32 %v1858, %v1970
      %1972 = vmatmul.f32.gmra.mxu0 %v1748
      %v1973 = vpop.f32.mrf.mxu0
      %v1974 = vadd.f32 %v1861, %v1973
      %1975 = vmatmul.f32.gmra.mxu0 %v1751
      %v1976 = vpop.f32.mrf.mxu0
      %v1977 = vadd.f32 %v1864, %v1976
      %1978 = vmatmul.f32.gmra.mxu0 %v1754
      %v1979 = vpop.f32.mrf.mxu0
      %v1980 = vadd.f32 %v1867, %v1979
      %1981 = vmatmul.f32.gmra.mxu0 %v1757
      %v1982 = vpop.f32.mrf.mxu0
      %v1983 = vadd.f32 %v1870, %v1982
      %1984 = vmatmul.f32.gmra.mxu0 %v1760
      %v1985 = vpop.f32.mrf.mxu0
      %v1986 = vadd.f32 %v1873, %v1985
      %1987 = vmatmul.f32.gmra.mxu0 %v1763
      %v1988 = vpop.f32.mrf.mxu0
      %v1989 = vadd.f32 %v1876, %v1988
      %1990 = vmatmul.f32.gmra.mxu0 %v1766
      %v1991 = vpop.f32.mrf.mxu0
      %v1992 = vadd.f32 %v1879, %v1991
      %1993 = vmatmul.f32.gmra.mxu0 %v1769
      %v1994 = vpop.f32.mrf.mxu0
      %v1995 = vadd.f32 %v1882, %v1994
      %1996 = vmatmul.f32.gmra.mxu0 %v1772
      %v1997 = vpop.f32.mrf.mxu0
      %v1998 = vadd.f32 %v1885, %v1997
      %1999 = vmatmul.f32.gmra.mxu0 %v1775
      %v2000 = vpop.f32.mrf.mxu0
      %v2001 = vadd.f32 %v1888, %v2000
      %2002 = vmatmul.f32.gmra.mxu0 %v1778
      %v2003 = vpop.f32.mrf.mxu0
      %v2004 = vadd.f32 %v1891, %v2003
      %2005 = vmatmul.f32.gmra.mxu0 %v1781
      %v2006 = vpop.f32.mrf.mxu0
      %v2007 = vadd.f32 %v1894, %v2006
      %2008 = vmatmul.f32.gmra.mxu0 %v1784
      %v2009 = vpop.f32.mrf.mxu0
      %v2010 = vadd.f32 %v1897, %v2009
      %2011 = vmatmul.f32.gmra.mxu0 %v1787
      %v2012 = vpop.f32.mrf.mxu0
      %v2013 = vadd.f32 %v1900, %v2012
      %2014 = vmatmul.f32.gmra.mxu0 %v1790
      %v2015 = vpop.f32.mrf.mxu0
      %v2016 = vadd.f32 %v1903, %v2015
      %2017 = vmatmul.f32.gmra.mxu0 %v1793
      %v2018 = vpop.f32.mrf.mxu0
      %v2019 = vadd.f32 %v1906, %v2018
      %2020 = vmatmul.f32.gmra.mxu0 %v1796
      %v2021 = vpop.f32.mrf.mxu0
      %v2022 = vadd.f32 %v1909, %v2021
      %2023 = vmatmul.f32.gmra.mxu0 %v1799
      %v2024 = vpop.f32.mrf.mxu0
      %v2025 = vadd.f32 %v1912, %v2024
      %2026 = vmatmul.f32.gmra.mxu0 %v1802
      %v2027 = vpop.f32.mrf.mxu0
      %v2028 = vadd.f32 %v1915, %v2027
      %2029 = vmatmul.f32.gmra.mxu0 %v1805
      %v2030 = vpop.f32.mrf.mxu0
      %v2031 = vadd.f32 %v1918, %v2030
      %2032 = vmatmul.f32.gmra.mxu0 %v1808
      %v2033 = vpop.f32.mrf.mxu0
      %v2034 = vadd.f32 %v1921, %v2033
      %2035 = vdwg.mxu0
      %v2036 = vld [vmem:[%s2] sm:$0x1]
      %v2038 = vperm.slane %v2036, 0
      %v2040 = vmul.f32 %v1941, %v2038
      %v2041 = vmul.f32 %v1944, %v2038
      %v2042 = vmul.f32 %v1947, %v2038
      %v2043 = vmul.f32 %v1950, %v2038
      %v2044 = vmul.f32 %v1953, %v2038
      %v2045 = vmul.f32 %v1956, %v2038
      %v2046 = vmul.f32 %v1959, %v2038
      %v2047 = vmul.f32 %v1962, %v2038
      %v2048 = vmul.f32 %v1965, %v2038
      %v2049 = vmul.f32 %v1968, %v2038
      %v2050 = vmul.f32 %v1971, %v2038
      %v2051 = vmul.f32 %v1974, %v2038
      %v2052 = vmul.f32 %v1977, %v2038
      %v2053 = vmul.f32 %v1980, %v2038
      %v2054 = vmul.f32 %v1983, %v2038
      %v2055 = vmul.f32 %v1986, %v2038
      %v2056 = vmul.f32 %v1989, %v2038
      %v2057 = vmul.f32 %v1992, %v2038
      %v2058 = vmul.f32 %v1995, %v2038
      %v2059 = vmul.f32 %v1998, %v2038
      %v2060 = vmul.f32 %v2001, %v2038
      %v2061 = vmul.f32 %v2004, %v2038
      %v2062 = vmul.f32 %v2007, %v2038
      %v2063 = vmul.f32 %v2010, %v2038
      %v2064 = vmul.f32 %v2013, %v2038
      %v2065 = vmul.f32 %v2016, %v2038
      %v2066 = vmul.f32 %v2019, %v2038
      %v2067 = vmul.f32 %v2022, %v2038
      %v2068 = vmul.f32 %v2025, %v2038
      %v2069 = vmul.f32 %v2028, %v2038
      %v2070 = vmul.f32 %v2031, %v2038
      %v2071 = vmul.f32 %v2034, %v2038
      %v2072 = vld [vmem:[%s3] sm:$0x1]
      %v2074 = vperm.slane %v2072, 0
      %v2076 = vadd.f32 %v2040, %v2074
      %v2077 = vadd.f32 %v2041, %v2074
      %v2078 = vadd.f32 %v2042, %v2074
      %v2079 = vadd.f32 %v2043, %v2074
      %v2080 = vadd.f32 %v2044, %v2074
      %v2081 = vadd.f32 %v2045, %v2074
      %v2082 = vadd.f32 %v2046, %v2074
      %v2083 = vadd.f32 %v2047, %v2074
      %v2084 = vadd.f32 %v2048, %v2074
      %v2085 = vadd.f32 %v2049, %v2074
      %v2086 = vadd.f32 %v2050, %v2074
      %v2087 = vadd.f32 %v2051, %v2074
      %v2088 = vadd.f32 %v2052, %v2074
      %v2089 = vadd.f32 %v2053, %v2074
      %v2090 = vadd.f32 %v2054, %v2074
      %v2091 = vadd.f32 %v2055, %v2074
      %v2092 = vadd.f32 %v2056, %v2074
      %v2093 = vadd.f32 %v2057, %v2074
      %v2094 = vadd.f32 %v2058, %v2074
      %v2095 = vadd.f32 %v2059, %v2074
      %v2096 = vadd.f32 %v2060, %v2074
      %v2097 = vadd.f32 %v2061, %v2074
      %v2098 = vadd.f32 %v2062, %v2074
      %v2099 = vadd.f32 %v2063, %v2074
      %v2100 = vadd.f32 %v2064, %v2074
      %v2101 = vadd.f32 %v2065, %v2074
      %v2102 = vadd.f32 %v2066, %v2074
      %v2103 = vadd.f32 %v2067, %v2074
      %v2104 = vadd.f32 %v2068, %v2074
      %v2105 = vadd.f32 %v2069, %v2074
      %v2106 = vadd.f32 %v2070, %v2074
      %v2107 = vadd.f32 %v2071, %v2074
      %v2108 = vmax.f32 %v2076, 0.0
      %v2109 = vmax.f32 %v2077, 0.0
      %v2110 = vmax.f32 %v2078, 0.0
      %v2111 = vmax.f32 %v2079, 0.0
      %v2112 = vmax.f32 %v2080, 0.0
      %v2113 = vmax.f32 %v2081, 0.0
      %v2114 = vmax.f32 %v2082, 0.0
      %v2115 = vmax.f32 %v2083, 0.0
      %v2116 = vmax.f32 %v2084, 0.0
      %v2117 = vmax.f32 %v2085, 0.0
      %v2118 = vmax.f32 %v2086, 0.0
      %v2119 = vmax.f32 %v2087, 0.0
      %v2120 = vmax.f32 %v2088, 0.0
      %v2121 = vmax.f32 %v2089, 0.0
      %v2122 = vmax.f32 %v2090, 0.0
      %v2123 = vmax.f32 %v2091, 0.0
      %v2124 = vmax.f32 %v2092, 0.0
      %v2125 = vmax.f32 %v2093, 0.0
      %v2126 = vmax.f32 %v2094, 0.0
      %v2127 = vmax.f32 %v2095, 0.0
      %v2128 = vmax.f32 %v2096, 0.0
      %v2129 = vmax.f32 %v2097, 0.0
      %v2130 = vmax.f32 %v2098, 0.0
      %v2131 = vmax.f32 %v2099, 0.0
      %v2132 = vmax.f32 %v2100, 0.0
      %v2133 = vmax.f32 %v2101, 0.0
      %v2134 = vmax.f32 %v2102, 0.0
      %v2135 = vmax.f32 %v2103, 0.0
      %v2136 = vmax.f32 %v2104, 0.0
      %v2137 = vmax.f32 %v2105, 0.0
      %v2138 = vmax.f32 %v2106, 0.0
      %v2139 = vmax.f32 %v2107, 0.0
      %2140 = vst.msk [vmem:[#allocation2] sm:$0xff] %vm1483, 0.0
      %2141 = vst.msk [vmem:[#allocation2 + $0x8] sm:$0xff] %vm1483, 0.0
      %vm2142 = vcmask 123904
      %2143 = vst.msk [vmem:[#allocation2 + $0x10] sm:$0x3] %vm2142, 0.0
      %2144 = vst.msk [vmem:[#allocation2 + $0x18] sm:$0xff] %vm1483, 0.0
      %2145 = vst.msk [vmem:[#allocation2 + $0x20] sm:$0xff] %vm1483, 0.0
      %2146 = vst.msk [vmem:[#allocation2 + $0x28] sm:$0x3] %vm2142, 0.0
      %2147 = vst.msk [vmem:[#allocation2 + $0x30] sm:$0xff] %vm1483, 0.0
      %2148 = vst.msk [vmem:[#allocation2 + $0x38] sm:$0xff] %vm1483, 0.0
      %2149 = vst.msk [vmem:[#allocation2 + $0x40] sm:$0x3] %vm2142, 0.0
      %2150 = vst.msk [vmem:[#allocation2 + $0x48] sm:$0xff] %vm1483, 0.0
      %2151 = vst.msk [vmem:[#allocation2 + $0x50] sm:$0xff] %vm1483, 0.0
      %2152 = vst.msk [vmem:[#allocation2 + $0x58] sm:$0x3] %vm2142, 0.0
      %2153 = vst.msk [vmem:[#allocation2 + $0x60] sm:$0xff] %vm1483, 0.0
      %2154 = vst.msk [vmem:[#allocation2 + $0x68] sm:$0xff] %vm1483, 0.0
      %2155 = vst.msk [vmem:[#allocation2 + $0x70] sm:$0x3] %vm2142, 0.0
      %2156 = vst.msk [vmem:[#allocation2 + $0x78] sm:$0xff] %vm1483, 0.0
      %2157 = vst.msk [vmem:[#allocation2 + $0x80] sm:$0xff] %vm1483, 0.0
      %2158 = vst.msk [vmem:[#allocation2 + $0x88] sm:$0x3] %vm2142, 0.0
      %2159 = vst.msk [vmem:[#allocation2 + $0x90] sm:$0xff] %vm1483, 0.0
      %2160 = vst.msk [vmem:[#allocation2 + $0x98] sm:$0xff] %vm1483, 0.0
      %2161 = vst.msk [vmem:[#allocation2 + $0xa0] sm:$0x3] %vm2142, 0.0
      %2162 = vst.msk [vmem:[#allocation2 + $0xa8] sm:$0xff] %vm1483, 0.0
      %2163 = vst.msk [vmem:[#allocation2 + $0xb0] sm:$0xff] %vm1483, 0.0
      %2164 = vst.msk [vmem:[#allocation2 + $0xb8] sm:$0x3] %vm2142, 0.0
      %2165 = vst.msk [vmem:[#allocation2 + $0xc0] sm:$0xff] %vm1483, 0.0
      %2166 = vst.msk [vmem:[#allocation2 + $0xc8] sm:$0xff] %vm1483, 0.0
      %2167 = vst.msk [vmem:[#allocation2 + $0xd0] sm:$0x3] %vm2142, 0.0
      %2168 = vst.msk [vmem:[#allocation2 + $0xd8] sm:$0xff] %vm1483, 0.0
      %2169 = vst.msk [vmem:[#allocation2 + $0xe0] sm:$0xff] %vm1483, 0.0
      %2170 = vst.msk [vmem:[#allocation2 + $0xe8] sm:$0x3] %vm2142, 0.0
      %2171 = vst.msk [vmem:[#allocation2 + $0xf0] sm:$0xff] %vm1483, 0.0
      %2172 = vst.msk [vmem:[#allocation2 + $0xf8] sm:$0xff] %vm1483, 0.0
      %2173 = vst.msk [vmem:[#allocation2 + $0x100] sm:$0x3] %vm2142, 0.0
      %2174 = vst.msk [vmem:[#allocation2 + $0x108] sm:$0xff] %vm1483, 0.0
      %2175 = vst.msk [vmem:[#allocation2 + $0x110] sm:$0xff] %vm1483, 0.0
      %2176 = vst.msk [vmem:[#allocation2 + $0x118] sm:$0x3] %vm2142, 0.0
      %2177 = vst.msk [vmem:[#allocation2 + $0x120] sm:$0xff] %vm1483, 0.0
      %2178 = vst.msk [vmem:[#allocation2 + $0x128] sm:$0xff] %vm1483, 0.0
      %2179 = vst.msk [vmem:[#allocation2 + $0x130] sm:$0x3] %vm2142, 0.0
      %2180 = vst.msk [vmem:[#allocation2 + $0x138] sm:$0xff] %vm1483, 0.0
      %2181 = vst.msk [vmem:[#allocation2 + $0x140] sm:$0xff] %vm1483, 0.0
      %2182 = vst.msk [vmem:[#allocation2 + $0x148] sm:$0x3] %vm2142, 0.0
      %2183 = vst.msk [vmem:[#allocation2 + $0x150] sm:$0xff] %vm1483, 0.0
      %2184 = vst.msk [vmem:[#allocation2 + $0x158] sm:$0xff] %vm1483, 0.0
      %2185 = vst.msk [vmem:[#allocation2 + $0x160] sm:$0x3] %vm2142, 0.0
      %2186 = vst.msk [vmem:[#allocation2 + $0x168] sm:$0xff] %vm1483, 0.0
      %2187 = vst.msk [vmem:[#allocation2 + $0x170] sm:$0xff] %vm1483, 0.0
      %2188 = vst.msk [vmem:[#allocation2 + $0x178] sm:$0x3] %vm2142, 0.0
      %2189 = vst.msk [vmem:[#allocation2 + $0x180] sm:$0xff] %vm1483, 0.0
      %2190 = vst.msk [vmem:[#allocation2 + $0x188] sm:$0xff] %vm1483, 0.0
      %2191 = vst.msk [vmem:[#allocation2 + $0x190] sm:$0x3] %vm2142, 0.0
      %2192 = vst.msk [vmem:[#allocation2 + $0x198] sm:$0xff] %vm1483, 0.0
      %2193 = vst.msk [vmem:[#allocation2 + $0x1a0] sm:$0xff] %vm1483, 0.0
      %2194 = vst.msk [vmem:[#allocation2 + $0x1a8] sm:$0x3] %vm2142, 0.0
      %s2195 = scalar_lea.vmem [#allocation2], 24
      %2196 = vst.msk [vmem:[%s2195 + $0x1] sm:$0xff] %vm1483, %v2108
      %2197 = vst.msk [vmem:[%s2195 + $0x9] sm:$0xff] %vm1483, %v2109
      %2198 = vst.msk [vmem:[%s2195 + $0x19] sm:$0xff] %vm1483, %v2110
      %2199 = vst.msk [vmem:[%s2195 + $0x21] sm:$0xff] %vm1483, %v2111
      %2200 = vst.msk [vmem:[%s2195 + $0x31] sm:$0xff] %vm1483, %v2112
      %2201 = vst.msk [vmem:[%s2195 + $0x39] sm:$0xff] %vm1483, %v2113
      %2202 = vst.msk [vmem:[%s2195 + $0x49] sm:$0xff] %vm1483, %v2114
      %2203 = vst.msk [vmem:[%s2195 + $0x51] sm:$0xff] %vm1483, %v2115
      %2204 = vst.msk [vmem:[%s2195 + $0x61] sm:$0xff] %vm1483, %v2116
      %2205 = vst.msk [vmem:[%s2195 + $0x69] sm:$0xff] %vm1483, %v2117
      %2206 = vst.msk [vmem:[%s2195 + $0x79] sm:$0xff] %vm1483, %v2118
      %2207 = vst.msk [vmem:[%s2195 + $0x81] sm:$0xff] %vm1483, %v2119
      %2208 = vst.msk [vmem:[%s2195 + $0x91] sm:$0xff] %vm1483, %v2120
      %2209 = vst.msk [vmem:[%s2195 + $0x99] sm:$0xff] %vm1483, %v2121
      %2210 = vst.msk [vmem:[%s2195 + $0xa9] sm:$0xff] %vm1483, %v2122
      %2211 = vst.msk [vmem:[%s2195 + $0xb1] sm:$0xff] %vm1483, %v2123
      %2212 = vst.msk [vmem:[%s2195 + $0xc1] sm:$0xff] %vm1483, %v2124
      %2213 = vst.msk [vmem:[%s2195 + $0xc9] sm:$0xff] %vm1483, %v2125
      %2214 = vst.msk [vmem:[%s2195 + $0xd9] sm:$0xff] %vm1483, %v2126
      %2215 = vst.msk [vmem:[%s2195 + $0xe1] sm:$0xff] %vm1483, %v2127
      %2216 = vst.msk [vmem:[%s2195 + $0xf1] sm:$0xff] %vm1483, %v2128
      %2217 = vst.msk [vmem:[%s2195 + $0xf9] sm:$0xff] %vm1483, %v2129
      %2218 = vst.msk [vmem:[%s2195 + $0x109] sm:$0xff] %vm1483, %v2130
      %2219 = vst.msk [vmem:[%s2195 + $0x111] sm:$0xff] %vm1483, %v2131
      %2220 = vst.msk [vmem:[%s2195 + $0x121] sm:$0xff] %vm1483, %v2132
      %2221 = vst.msk [vmem:[%s2195 + $0x129] sm:$0xff] %vm1483, %v2133
      %2222 = vst.msk [vmem:[%s2195 + $0x139] sm:$0xff] %vm1483, %v2134
      %2223 = vst.msk [vmem:[%s2195 + $0x141] sm:$0xff] %vm1483, %v2135
      %2224 = vst.msk [vmem:[%s2195 + $0x151] sm:$0xff] %vm1483, %v2136
      %2225 = vst.msk [vmem:[%s2195 + $0x159] sm:$0xff] %vm1483, %v2137
      %2226 = vst.msk [vmem:[%s2195 + $0x169] sm:$0xff] %vm1483, %v2138
      %2227 = vst.msk [vmem:[%s2195 + $0x171] sm:$0xff] %vm1483, %v2139
      %v2228 = vld [vmem:[%s4] sm:$0xff]
      %v2229 = vld [vmem:[%s4 + $0x8] sm:$0xff]
      %v2230 = vld [vmem:[%s4 + $0x10] sm:$0xff]
      %v2231 = vld [vmem:[%s4 + $0x18] sm:$0xff]
      %v2232 = vld [vmem:[%s4 + $0x20] sm:$0xff]
      %v2233 = vld [vmem:[%s4 + $0x28] sm:$0xff]
      %v2234 = vld [vmem:[%s4 + $0x30] sm:$0xff]
      %v2235 = vld [vmem:[%s4 + $0x38] sm:$0xff]
      %v2236 = vld [vmem:[%s4 + $0x40] sm:$0xff]
      %v2237 = vld [vmem:[%s4 + $0x48] sm:$0xff]
      %v2238 = vld [vmem:[%s4 + $0x50] sm:$0xff]
      %v2239 = vld [vmem:[%s4 + $0x58] sm:$0xff]
      %v2240 = vld [vmem:[%s4 + $0x60] sm:$0xff]
      %v2241 = vld [vmem:[%s4 + $0x68] sm:$0xff]
      %v2242 = vld [vmem:[%s4 + $0x70] sm:$0xff]
      %v2243 = vld [vmem:[%s4 + $0x78] sm:$0xff]
      %v2244 = vld [vmem:[%s4 + $0x80] sm:$0xff]
      %v2245 = vld [vmem:[%s4 + $0x88] sm:$0xff]
      %v2246 = vld [vmem:[#allocation2] sm:$0xff]
      %v2247 = vld [vmem:[#allocation2 + $0x8] sm:$0xff]
      %v2248 = vld [vmem:[#allocation2 + $0x18] sm:$0xff]
      %v2249 = vld [vmem:[#allocation2 + $0x20] sm:$0xff]
      %v2250 = vld [vmem:[#allocation2 + $0x30] sm:$0xff]
      %v2251 = vld [vmem:[#allocation2 + $0x38] sm:$0xff]
      %v2252 = vld [vmem:[#allocation2 + $0x48] sm:$0xff]
      %v2253 = vld [vmem:[#allocation2 + $0x50] sm:$0xff]
      %v2254 = vld [vmem:[#allocation2 + $0x60] sm:$0xff]
      %v2255 = vld [vmem:[#allocation2 + $0x68] sm:$0xff]
      %v2256 = vld [vmem:[#allocation2 + $0x78] sm:$0xff]
      %v2257 = vld [vmem:[#allocation2 + $0x80] sm:$0xff]
      %v2258 = vld [vmem:[#allocation2 + $0x90] sm:$0xff]
      %v2259 = vld [vmem:[#allocation2 + $0x98] sm:$0xff]
      %v2260 = vld [vmem:[#allocation2 + $0xa8] sm:$0xff]
      %v2261 = vld [vmem:[#allocation2 + $0xb0] sm:$0xff]
      %v2262 = vld [vmem:[#allocation2 + $0xc0] sm:$0xff]
      %v2263 = vld [vmem:[#allocation2 + $0xc8] sm:$0xff]
      %v2264 = vld [vmem:[#allocation2 + $0xd8] sm:$0xff]
      %v2265 = vld [vmem:[#allocation2 + $0xe0] sm:$0xff]
      %v2266 = vld [vmem:[#allocation2 + $0xf0] sm:$0xff]
      %v2267 = vld [vmem:[#allocation2 + $0xf8] sm:$0xff]
      %v2268 = vld [vmem:[#allocation2 + $0x108] sm:$0xff]
      %v2269 = vld [vmem:[#allocation2 + $0x110] sm:$0xff]
      %v2270 = vld [vmem:[#allocation2 + $0x120] sm:$0xff]
      %v2271 = vld [vmem:[#allocation2 + $0x128] sm:$0xff]
      %v2272 = vld [vmem:[#allocation2 + $0x138] sm:$0xff]
      %v2273 = vld [vmem:[#allocation2 + $0x140] sm:$0xff]
      %v2274 = vld [vmem:[#allocation2 + $0x150] sm:$0xff]
      %v2275 = vld [vmem:[#allocation2 + $0x158] sm:$0xff]
      %v2276 = vld [vmem:[#allocation2 + $0x168] sm:$0xff]
      %v2277 = vld [vmem:[#allocation2 + $0x170] sm:$0xff]
      %v2278 = vld [vmem:[#allocation2 + $0x1] sm:$0xff]
      %v2279 = vld [vmem:[#allocation2 + $0x9] sm:$0xff]
      %v2280 = vld [vmem:[#allocation2 + $0x19] sm:$0xff]
      %v2281 = vld [vmem:[#allocation2 + $0x21] sm:$0xff]
      %v2282 = vld [vmem:[#allocation2 + $0x31] sm:$0xff]
      %v2283 = vld [vmem:[#allocation2 + $0x39] sm:$0xff]
      %v2284 = vld [vmem:[#allocation2 + $0x49] sm:$0xff]
      %v2285 = vld [vmem:[#allocation2 + $0x51] sm:$0xff]
      %v2286 = vld [vmem:[#allocation2 + $0x61] sm:$0xff]
      %v2287 = vld [vmem:[#allocation2 + $0x69] sm:$0xff]
      %v2288 = vld [vmem:[#allocation2 + $0x79] sm:$0xff]
      %v2289 = vld [vmem:[#allocation2 + $0x81] sm:$0xff]
      %v2290 = vld [vmem:[#allocation2 + $0x91] sm:$0xff]
      %v2291 = vld [vmem:[#allocation2 + $0x99] sm:$0xff]
      %v2292 = vld [vmem:[#allocation2 + $0xa9] sm:$0xff]
      %v2293 = vld [vmem:[#allocation2 + $0xb1] sm:$0xff]
      %v2294 = vld [vmem:[#allocation2 + $0xc1] sm:$0xff]
      %v2295 = vld [vmem:[#allocation2 + $0xc9] sm:$0xff]
      %v2296 = vld [vmem:[#allocation2 + $0xd9] sm:$0xff]
      %v2297 = vld [vmem:[#allocation2 + $0xe1] sm:$0xff]
      %v2298 = vld [vmem:[#allocation2 + $0xf1] sm:$0xff]
      %v2299 = vld [vmem:[#allocation2 + $0xf9] sm:$0xff]
      %v2300 = vld [vmem:[#allocation2 + $0x109] sm:$0xff]
      %v2301 = vld [vmem:[#allocation2 + $0x111] sm:$0xff]
      %v2302 = vld [vmem:[#allocation2 + $0x121] sm:$0xff]
      %v2303 = vld [vmem:[#allocation2 + $0x129] sm:$0xff]
      %v2304 = vld [vmem:[#allocation2 + $0x139] sm:$0xff]
      %v2305 = vld [vmem:[#allocation2 + $0x141] sm:$0xff]
      %v2306 = vld [vmem:[#allocation2 + $0x151] sm:$0xff]
      %v2307 = vld [vmem:[#allocation2 + $0x159] sm:$0xff]
      %v2308 = vld [vmem:[#allocation2 + $0x169] sm:$0xff]
      %v2309 = vld [vmem:[#allocation2 + $0x171] sm:$0xff]
      %v2310 = vld [vmem:[#allocation2 + $0x2] sm:$0xff]
      %v2311 = vld [vmem:[#allocation2 + $0xa] sm:$0xff]
      %v2312 = vld [vmem:[#allocation2 + $0x1a] sm:$0xff]
      %v2313 = vld [vmem:[#allocation2 + $0x22] sm:$0xff]
      %v2314 = vld [vmem:[#allocation2 + $0x32] sm:$0xff]
      %v2315 = vld [vmem:[#allocation2 + $0x3a] sm:$0xff]
      %v2316 = vld [vmem:[#allocation2 + $0x4a] sm:$0xff]
      %v2317 = vld [vmem:[#allocation2 + $0x52] sm:$0xff]
      %v2318 = vld [vmem:[#allocation2 + $0x62] sm:$0xff]
      %v2319 = vld [vmem:[#allocation2 + $0x6a] sm:$0xff]
      %v2320 = vld [vmem:[#allocation2 + $0x7a] sm:$0xff]
      %v2321 = vld [vmem:[#allocation2 + $0x82] sm:$0xff]
      %v2322 = vld [vmem:[#allocation2 + $0x92] sm:$0xff]
      %v2323 = vld [vmem:[#allocation2 + $0x9a] sm:$0xff]
      %v2324 = vld [vmem:[#allocation2 + $0xaa] sm:$0xff]
      %v2325 = vld [vmem:[#allocation2 + $0xb2] sm:$0xff]
      %v2326 = vld [vmem:[#allocation2 + $0xc2] sm:$0xff]
      %v2327 = vld [vmem:[#allocation2 + $0xca] sm:$0xff]
      %v2328 = vld [vmem:[#allocation2 + $0xda] sm:$0xff]
      %v2329 = vld [vmem:[#allocation2 + $0xe2] sm:$0xff]
      %v2330 = vld [vmem:[#allocation2 + $0xf2] sm:$0xff]
      %v2331 = vld [vmem:[#allocation2 + $0xfa] sm:$0xff]
      %v2332 = vld [vmem:[#allocation2 + $0x10a] sm:$0xff]
      %v2333 = vld [vmem:[#allocation2 + $0x112] sm:$0xff]
      %v2334 = vld [vmem:[#allocation2 + $0x122] sm:$0xff]
      %v2335 = vld [vmem:[#allocation2 + $0x12a] sm:$0xff]
      %v2336 = vld [vmem:[#allocation2 + $0x13a] sm:$0xff]
      %v2337 = vld [vmem:[#allocation2 + $0x142] sm:$0xff]
      %v2338 = vld [vmem:[#allocation2 + $0x152] sm:$0xff]
      %v2339 = vld [vmem:[#allocation2 + $0x15a] sm:$0xff]
      %v2340 = vld [vmem:[#allocation2 + $0x16a] sm:$0xff]
      %v2341 = vld [vmem:[#allocation2 + $0x172] sm:$0xff]
      %v2342 = vld [vmem:[%s2195] sm:$0xff]
      %v2343 = vld [vmem:[%s2195 + $0x8] sm:$0xff]
      %v2344 = vld [vmem:[%s2195 + $0x18] sm:$0xff]
      %v2345 = vld [vmem:[%s2195 + $0x20] sm:$0xff]
      %v2346 = vld [vmem:[%s2195 + $0x30] sm:$0xff]
      %v2347 = vld [vmem:[%s2195 + $0x38] sm:$0xff]
      %v2348 = vld [vmem:[%s2195 + $0x48] sm:$0xff]
      %v2349 = vld [vmem:[%s2195 + $0x50] sm:$0xff]
      %v2350 = vld [vmem:[%s2195 + $0x60] sm:$0xff]
      %v2351 = vld [vmem:[%s2195 + $0x68] sm:$0xff]
      %v2352 = vld [vmem:[%s2195 + $0x78] sm:$0xff]
      %v2353 = vld [vmem:[%s2195 + $0x80] sm:$0xff]
      %v2354 = vld [vmem:[%s2195 + $0x90] sm:$0xff]
      %v2355 = vld [vmem:[%s2195 + $0x98] sm:$0xff]
      %v2356 = vld [vmem:[%s2195 + $0xa8] sm:$0xff]
      %v2357 = vld [vmem:[%s2195 + $0xb0] sm:$0xff]
      %v2358 = vld [vmem:[%s2195 + $0xc0] sm:$0xff]
      %v2359 = vld [vmem:[%s2195 + $0xc8] sm:$0xff]
      %v2360 = vld [vmem:[%s2195 + $0xd8] sm:$0xff]
      %v2361 = vld [vmem:[%s2195 + $0xe0] sm:$0xff]
      %v2362 = vld [vmem:[%s2195 + $0xf0] sm:$0xff]
      %v2363 = vld [vmem:[%s2195 + $0xf8] sm:$0xff]
      %v2364 = vld [vmem:[%s2195 + $0x108] sm:$0xff]
      %v2365 = vld [vmem:[%s2195 + $0x110] sm:$0xff]
      %v2366 = vld [vmem:[%s2195 + $0x120] sm:$0xff]
      %v2367 = vld [vmem:[%s2195 + $0x128] sm:$0xff]
      %v2368 = vld [vmem:[%s2195 + $0x138] sm:$0xff]
      %v2369 = vld [vmem:[%s2195 + $0x140] sm:$0xff]
      %v2370 = vld [vmem:[%s2195 + $0x150] sm:$0xff]
      %v2371 = vld [vmem:[%s2195 + $0x158] sm:$0xff]
      %v2372 = vld [vmem:[%s2195 + $0x168] sm:$0xff]
      %v2373 = vld [vmem:[%s2195 + $0x170] sm:$0xff]
      %v2374 = vld [vmem:[%s2195 + $0x1] sm:$0xff]
      %v2375 = vld [vmem:[%s2195 + $0x9] sm:$0xff]
      %v2376 = vld [vmem:[%s2195 + $0x19] sm:$0xff]
      %v2377 = vld [vmem:[%s2195 + $0x21] sm:$0xff]
      %v2378 = vld [vmem:[%s2195 + $0x31] sm:$0xff]
      %v2379 = vld [vmem:[%s2195 + $0x39] sm:$0xff]
      %v2380 = vld [vmem:[%s2195 + $0x49] sm:$0xff]
      %v2381 = vld [vmem:[%s2195 + $0x51] sm:$0xff]
      %v2382 = vld [vmem:[%s2195 + $0x61] sm:$0xff]
      %v2383 = vld [vmem:[%s2195 + $0x69] sm:$0xff]
      %v2384 = vld [vmem:[%s2195 + $0x79] sm:$0xff]
      %v2385 = vld [vmem:[%s2195 + $0x81] sm:$0xff]
      %v2386 = vld [vmem:[%s2195 + $0x91] sm:$0xff]
      %v2387 = vld [vmem:[%s2195 + $0x99] sm:$0xff]
      %v2388 = vld [vmem:[%s2195 + $0xa9] sm:$0xff]
      %v2389 = vld [vmem:[%s2195 + $0xb1] sm:$0xff]
      %v2390 = vld [vmem:[%s2195 + $0xc1] sm:$0xff]
      %v2391 = vld [vmem:[%s2195 + $0xc9] sm:$0xff]
      %v2392 = vld [vmem:[%s2195 + $0xd9] sm:$0xff]
      %v2393 = vld [vmem:[%s2195 + $0xe1] sm:$0xff]
      %v2394 = vld [vmem:[%s2195 + $0xf1] sm:$0xff]
      %v2395 = vld [vmem:[%s2195 + $0xf9] sm:$0xff]
      %v2396 = vld [vmem:[%s2195 + $0x109] sm:$0xff]
      %v2397 = vld [vmem:[%s2195 + $0x111] sm:$0xff]
      %v2398 = vld [vmem:[%s2195 + $0x121] sm:$0xff]
      %v2399 = vld [vmem:[%s2195 + $0x129] sm:$0xff]
      %v2400 = vld [vmem:[%s2195 + $0x139] sm:$0xff]
      %v2401 = vld [vmem:[%s2195 + $0x141] sm:$0xff]
      %v2402 = vld [vmem:[%s2195 + $0x151] sm:$0xff]
      %v2403 = vld [vmem:[%s2195 + $0x159] sm:$0xff]
      %v2404 = vld [vmem:[%s2195 + $0x169] sm:$0xff]
      %v2405 = vld [vmem:[%s2195 + $0x171] sm:$0xff]
      %v2406 = vld [vmem:[%s2195 + $0x2] sm:$0xff]
      %v2407 = vld [vmem:[%s2195 + $0xa] sm:$0xff]
      %v2408 = vld [vmem:[%s2195 + $0x1a] sm:$0xff]
      %v2409 = vld [vmem:[%s2195 + $0x22] sm:$0xff]
      %v2410 = vld [vmem:[%s2195 + $0x32] sm:$0xff]
      %v2411 = vld [vmem:[%s2195 + $0x3a] sm:$0xff]
      %v2412 = vld [vmem:[%s2195 + $0x4a] sm:$0xff]
      %v2413 = vld [vmem:[%s2195 + $0x52] sm:$0xff]
      %v2414 = vld [vmem:[%s2195 + $0x62] sm:$0xff]
      %v2415 = vld [vmem:[%s2195 + $0x6a] sm:$0xff]
      %v2416 = vld [vmem:[%s2195 + $0x7a] sm:$0xff]
      %v2417 = vld [vmem:[%s2195 + $0x82] sm:$0xff]
      %v2418 = vld [vmem:[%s2195 + $0x92] sm:$0xff]
      %v2419 = vld [vmem:[%s2195 + $0x9a] sm:$0xff]
      %v2420 = vld [vmem:[%s2195 + $0xaa] sm:$0xff]
      %v2421 = vld [vmem:[%s2195 + $0xb2] sm:$0xff]
      %v2422 = vld [vmem:[%s2195 + $0xc2] sm:$0xff]
      %v2423 = vld [vmem:[%s2195 + $0xca] sm:$0xff]
      %v2424 = vld [vmem:[%s2195 + $0xda] sm:$0xff]
      %v2425 = vld [vmem:[%s2195 + $0xe2] sm:$0xff]
      %v2426 = vld [vmem:[%s2195 + $0xf2] sm:$0xff]
      %v2427 = vld [vmem:[%s2195 + $0xfa] sm:$0xff]
      %v2428 = vld [vmem:[%s2195 + $0x10a] sm:$0xff]
      %v2429 = vld [vmem:[%s2195 + $0x112] sm:$0xff]
      %v2430 = vld [vmem:[%s2195 + $0x122] sm:$0xff]
      %v2431 = vld [vmem:[%s2195 + $0x12a] sm:$0xff]
      %v2432 = vld [vmem:[%s2195 + $0x13a] sm:$0xff]
      %v2433 = vld [vmem:[%s2195 + $0x142] sm:$0xff]
      %v2434 = vld [vmem:[%s2195 + $0x152] sm:$0xff]
      %v2435 = vld [vmem:[%s2195 + $0x15a] sm:$0xff]
      %v2436 = vld [vmem:[%s2195 + $0x16a] sm:$0xff]
      %v2437 = vld [vmem:[%s2195 + $0x172] sm:$0xff]
      %s2438 = scalar_lea.vmem [#allocation2], 48
      %v2439 = vld [vmem:[%s2438] sm:$0xff]
      %v2440 = vld [vmem:[%s2438 + $0x8] sm:$0xff]
      %v2441 = vld [vmem:[%s2438 + $0x18] sm:$0xff]
      %v2442 = vld [vmem:[%s2438 + $0x20] sm:$0xff]
      %v2443 = vld [vmem:[%s2438 + $0x30] sm:$0xff]
      %v2444 = vld [vmem:[%s2438 + $0x38] sm:$0xff]
      %v2445 = vld [vmem:[%s2438 + $0x48] sm:$0xff]
      %v2446 = vld [vmem:[%s2438 + $0x50] sm:$0xff]
      %v2447 = vld [vmem:[%s2438 + $0x60] sm:$0xff]
      %v2448 = vld [vmem:[%s2438 + $0x68] sm:$0xff]
      %v2449 = vld [vmem:[%s2438 + $0x78] sm:$0xff]
      %v2450 = vld [vmem:[%s2438 + $0x80] sm:$0xff]
      %v2451 = vld [vmem:[%s2438 + $0x90] sm:$0xff]
      %v2452 = vld [vmem:[%s2438 + $0x98] sm:$0xff]
      %v2453 = vld [vmem:[%s2438 + $0xa8] sm:$0xff]
      %v2454 = vld [vmem:[%s2438 + $0xb0] sm:$0xff]
      %v2455 = vld [vmem:[%s2438 + $0xc0] sm:$0xff]
      %v2456 = vld [vmem:[%s2438 + $0xc8] sm:$0xff]
      %v2457 = vld [vmem:[%s2438 + $0xd8] sm:$0xff]
      %v2458 = vld [vmem:[%s2438 + $0xe0] sm:$0xff]
      %v2459 = vld [vmem:[%s2438 + $0xf0] sm:$0xff]
      %v2460 = vld [vmem:[%s2438 + $0xf8] sm:$0xff]
      %v2461 = vld [vmem:[%s2438 + $0x108] sm:$0xff]
      %v2462 = vld [vmem:[%s2438 + $0x110] sm:$0xff]
      %v2463 = vld [vmem:[%s2438 + $0x120] sm:$0xff]
      %v2464 = vld [vmem:[%s2438 + $0x128] sm:$0xff]
      %v2465 = vld [vmem:[%s2438 + $0x138] sm:$0xff]
      %v2466 = vld [vmem:[%s2438 + $0x140] sm:$0xff]
      %v2467 = vld [vmem:[%s2438 + $0x150] sm:$0xff]
      %v2468 = vld [vmem:[%s2438 + $0x158] sm:$0xff]
      %v2469 = vld [vmem:[%s2438 + $0x168] sm:$0xff]
      %v2470 = vld [vmem:[%s2438 + $0x170] sm:$0xff]
      %v2471 = vld [vmem:[%s2438 + $0x1] sm:$0xff]
      %v2472 = vld [vmem:[%s2438 + $0x9] sm:$0xff]
      %v2473 = vld [vmem:[%s2438 + $0x19] sm:$0xff]
      %v2474 = vld [vmem:[%s2438 + $0x21] sm:$0xff]
      %v2475 = vld [vmem:[%s2438 + $0x31] sm:$0xff]
      %v2476 = vld [vmem:[%s2438 + $0x39] sm:$0xff]
      %v2477 = vld [vmem:[%s2438 + $0x49] sm:$0xff]
      %v2478 = vld [vmem:[%s2438 + $0x51] sm:$0xff]
      %v2479 = vld [vmem:[%s2438 + $0x61] sm:$0xff]
      %v2480 = vld [vmem:[%s2438 + $0x69] sm:$0xff]
      %v2481 = vld [vmem:[%s2438 + $0x79] sm:$0xff]
      %v2482 = vld [vmem:[%s2438 + $0x81] sm:$0xff]
      %v2483 = vld [vmem:[%s2438 + $0x91] sm:$0xff]
      %v2484 = vld [vmem:[%s2438 + $0x99] sm:$0xff]
      %v2485 = vld [vmem:[%s2438 + $0xa9] sm:$0xff]
      %v2486 = vld [vmem:[%s2438 + $0xb1] sm:$0xff]
      %v2487 = vld [vmem:[%s2438 + $0xc1] sm:$0xff]
      %v2488 = vld [vmem:[%s2438 + $0xc9] sm:$0xff]
      %v2489 = vld [vmem:[%s2438 + $0xd9] sm:$0xff]
      %v2490 = vld [vmem:[%s2438 + $0xe1] sm:$0xff]
      %v2491 = vld [vmem:[%s2438 + $0xf1] sm:$0xff]
      %v2492 = vld [vmem:[%s2438 + $0xf9] sm:$0xff]
      %v2493 = vld [vmem:[%s2438 + $0x109] sm:$0xff]
      %v2494 = vld [vmem:[%s2438 + $0x111] sm:$0xff]
      %v2495 = vld [vmem:[%s2438 + $0x121] sm:$0xff]
      %v2496 = vld [vmem:[%s2438 + $0x129] sm:$0xff]
      %v2497 = vld [vmem:[%s2438 + $0x139] sm:$0xff]
      %v2498 = vld [vmem:[%s2438 + $0x141] sm:$0xff]
      %v2499 = vld [vmem:[%s2438 + $0x151] sm:$0xff]
      %v2500 = vld [vmem:[%s2438 + $0x159] sm:$0xff]
      %v2501 = vld [vmem:[%s2438 + $0x169] sm:$0xff]
      %v2502 = vld [vmem:[%s2438 + $0x171] sm:$0xff]
      %v2503 = vld [vmem:[%s2438 + $0x2] sm:$0xff]
      %v2504 = vld [vmem:[%s2438 + $0xa] sm:$0xff]
      %v2505 = vld [vmem:[%s2438 + $0x1a] sm:$0xff]
      %v2506 = vld [vmem:[%s2438 + $0x22] sm:$0xff]
      %v2507 = vld [vmem:[%s2438 + $0x32] sm:$0xff]
      %v2508 = vld [vmem:[%s2438 + $0x3a] sm:$0xff]
      %v2509 = vld [vmem:[%s2438 + $0x4a] sm:$0xff]
      %v2510 = vld [vmem:[%s2438 + $0x52] sm:$0xff]
      %v2511 = vld [vmem:[%s2438 + $0x62] sm:$0xff]
      %v2512 = vld [vmem:[%s2438 + $0x6a] sm:$0xff]
      %v2513 = vld [vmem:[%s2438 + $0x7a] sm:$0xff]
      %v2514 = vld [vmem:[%s2438 + $0x82] sm:$0xff]
      %v2515 = vld [vmem:[%s2438 + $0x92] sm:$0xff]
      %v2516 = vld [vmem:[%s2438 + $0x9a] sm:$0xff]
      %v2517 = vld [vmem:[%s2438 + $0xaa] sm:$0xff]
      %v2518 = vld [vmem:[%s2438 + $0xb2] sm:$0xff]
      %v2519 = vld [vmem:[%s2438 + $0xc2] sm:$0xff]
      %v2520 = vld [vmem:[%s2438 + $0xca] sm:$0xff]
      %v2521 = vld [vmem:[%s2438 + $0xda] sm:$0xff]
      %v2522 = vld [vmem:[%s2438 + $0xe2] sm:$0xff]
      %v2523 = vld [vmem:[%s2438 + $0xf2] sm:$0xff]
      %v2524 = vld [vmem:[%s2438 + $0xfa] sm:$0xff]
      %v2525 = vld [vmem:[%s2438 + $0x10a] sm:$0xff]
      %v2526 = vld [vmem:[%s2438 + $0x112] sm:$0xff]
      %v2527 = vld [vmem:[%s2438 + $0x122] sm:$0xff]
      %v2528 = vld [vmem:[%s2438 + $0x12a] sm:$0xff]
      %v2529 = vld [vmem:[%s2438 + $0x13a] sm:$0xff]
      %v2530 = vld [vmem:[%s2438 + $0x142] sm:$0xff]
      %v2531 = vld [vmem:[%s2438 + $0x152] sm:$0xff]
      %v2532 = vld [vmem:[%s2438 + $0x15a] sm:$0xff]
      %v2533 = vld [vmem:[%s2438 + $0x16a] sm:$0xff]
      %v2534 = vld [vmem:[%s2438 + $0x172] sm:$0xff]
      %2567 = vrot.lane.b32.xlu0 %v2278, 16
      %v2568 = vpop.permute.xlu0 %2567
      %2569 = vrot.lane.b32.xlu0 %v2279, 16
      %v2570 = vpop.permute.xlu0 %2569
      %2571 = vrot.lane.b32.xlu0 %v2280, 16
      %v2572 = vpop.permute.xlu0 %2571
      %2573 = vrot.lane.b32.xlu0 %v2281, 16
      %v2574 = vpop.permute.xlu0 %2573
      %2575 = vrot.lane.b32.xlu0 %v2282, 16
      %v2576 = vpop.permute.xlu0 %2575
      %2577 = vrot.lane.b32.xlu0 %v2283, 16
      %v2578 = vpop.permute.xlu0 %2577
      %2579 = vrot.lane.b32.xlu0 %v2284, 16
      %v2580 = vpop.permute.xlu0 %2579
      %2581 = vrot.lane.b32.xlu0 %v2285, 16
      %v2582 = vpop.permute.xlu0 %2581
      %2583 = vrot.lane.b32.xlu0 %v2286, 16
      %v2584 = vpop.permute.xlu0 %2583
      %2585 = vrot.lane.b32.xlu0 %v2287, 16
      %v2586 = vpop.permute.xlu0 %2585
      %2587 = vrot.lane.b32.xlu0 %v2288, 16
      %v2588 = vpop.permute.xlu0 %2587
      %2589 = vrot.lane.b32.xlu0 %v2289, 16
      %v2590 = vpop.permute.xlu0 %2589
      %2591 = vrot.lane.b32.xlu0 %v2290, 16
      %v2592 = vpop.permute.xlu0 %2591
      %2593 = vrot.lane.b32.xlu0 %v2291, 16
      %v2594 = vpop.permute.xlu0 %2593
      %2595 = vrot.lane.b32.xlu0 %v2292, 16
      %v2596 = vpop.permute.xlu0 %2595
      %2597 = vrot.lane.b32.xlu0 %v2293, 16
      %v2598 = vpop.permute.xlu0 %2597
      %2599 = vrot.lane.b32.xlu0 %v2294, 16
      %v2600 = vpop.permute.xlu0 %2599
      %2601 = vrot.lane.b32.xlu0 %v2295, 16
      %v2602 = vpop.permute.xlu0 %2601
      %2603 = vrot.lane.b32.xlu0 %v2296, 16
      %v2604 = vpop.permute.xlu0 %2603
      %2605 = vrot.lane.b32.xlu0 %v2297, 16
      %v2606 = vpop.permute.xlu0 %2605
      %2607 = vrot.lane.b32.xlu0 %v2298, 16
      %v2608 = vpop.permute.xlu0 %2607
      %2609 = vrot.lane.b32.xlu0 %v2299, 16
      %v2610 = vpop.permute.xlu0 %2609
      %2611 = vrot.lane.b32.xlu0 %v2300, 16
      %v2612 = vpop.permute.xlu0 %2611
      %2613 = vrot.lane.b32.xlu0 %v2301, 16
      %v2614 = vpop.permute.xlu0 %2613
      %2615 = vrot.lane.b32.xlu0 %v2302, 16
      %v2616 = vpop.permute.xlu0 %2615
      %2617 = vrot.lane.b32.xlu0 %v2303, 16
      %v2618 = vpop.permute.xlu0 %2617
      %2619 = vrot.lane.b32.xlu0 %v2304, 16
      %v2620 = vpop.permute.xlu0 %2619
      %2621 = vrot.lane.b32.xlu0 %v2305, 16
      %v2622 = vpop.permute.xlu0 %2621
      %2623 = vrot.lane.b32.xlu0 %v2306, 16
      %v2624 = vpop.permute.xlu0 %2623
      %2625 = vrot.lane.b32.xlu0 %v2307, 16
      %v2626 = vpop.permute.xlu0 %2625
      %2627 = vrot.lane.b32.xlu0 %v2308, 16
      %v2628 = vpop.permute.xlu0 %2627
      %2629 = vrot.lane.b32.xlu0 %v2309, 16
      %v2630 = vpop.permute.xlu0 %2629
      %2695 = vrot.lane.b32.xlu0 %v2310, 32
      %v2696 = vpop.permute.xlu0 %2695
      %2697 = vrot.lane.b32.xlu0 %v2311, 32
      %v2698 = vpop.permute.xlu0 %2697
      %2699 = vrot.lane.b32.xlu0 %v2312, 32
      %v2700 = vpop.permute.xlu0 %2699
      %2701 = vrot.lane.b32.xlu0 %v2313, 32
      %v2702 = vpop.permute.xlu0 %2701
      %2703 = vrot.lane.b32.xlu0 %v2314, 32
      %v2704 = vpop.permute.xlu0 %2703
      %2705 = vrot.lane.b32.xlu0 %v2315, 32
      %v2706 = vpop.permute.xlu0 %2705
      %2707 = vrot.lane.b32.xlu0 %v2316, 32
      %v2708 = vpop.permute.xlu0 %2707
      %2709 = vrot.lane.b32.xlu0 %v2317, 32
      %v2710 = vpop.permute.xlu0 %2709
      %2711 = vrot.lane.b32.xlu0 %v2318, 32
      %v2712 = vpop.permute.xlu0 %2711
      %2713 = vrot.lane.b32.xlu0 %v2319, 32
      %v2714 = vpop.permute.xlu0 %2713
      %2715 = vrot.lane.b32.xlu0 %v2320, 32
      %v2716 = vpop.permute.xlu0 %2715
      %2717 = vrot.lane.b32.xlu0 %v2321, 32
      %v2718 = vpop.permute.xlu0 %2717
      %2719 = vrot.lane.b32.xlu0 %v2322, 32
      %v2720 = vpop.permute.xlu0 %2719
      %2721 = vrot.lane.b32.xlu0 %v2323, 32
      %v2722 = vpop.permute.xlu0 %2721
      %2723 = vrot.lane.b32.xlu0 %v2324, 32
      %v2724 = vpop.permute.xlu0 %2723
      %2725 = vrot.lane.b32.xlu0 %v2325, 32
      %v2726 = vpop.permute.xlu0 %2725
      %2727 = vrot.lane.b32.xlu0 %v2326, 32
      %v2728 = vpop.permute.xlu0 %2727
      %2729 = vrot.lane.b32.xlu0 %v2327, 32
      %v2730 = vpop.permute.xlu0 %2729
      %2731 = vrot.lane.b32.xlu0 %v2328, 32
      %v2732 = vpop.permute.xlu0 %2731
      %2733 = vrot.lane.b32.xlu0 %v2329, 32
      %v2734 = vpop.permute.xlu0 %2733
      %2735 = vrot.lane.b32.xlu0 %v2330, 32
      %v2736 = vpop.permute.xlu0 %2735
      %2737 = vrot.lane.b32.xlu0 %v2331, 32
      %v2738 = vpop.permute.xlu0 %2737
      %2739 = vrot.lane.b32.xlu0 %v2332, 32
      %v2740 = vpop.permute.xlu0 %2739
      %2741 = vrot.lane.b32.xlu0 %v2333, 32
      %v2742 = vpop.permute.xlu0 %2741
      %2743 = vrot.lane.b32.xlu0 %v2334, 32
      %v2744 = vpop.permute.xlu0 %2743
      %2745 = vrot.lane.b32.xlu0 %v2335, 32
      %v2746 = vpop.permute.xlu0 %2745
      %2747 = vrot.lane.b32.xlu0 %v2336, 32
      %v2748 = vpop.permute.xlu0 %2747
      %2749 = vrot.lane.b32.xlu0 %v2337, 32
      %v2750 = vpop.permute.xlu0 %2749
      %2751 = vrot.lane.b32.xlu0 %v2338, 32
      %v2752 = vpop.permute.xlu0 %2751
      %2753 = vrot.lane.b32.xlu0 %v2339, 32
      %v2754 = vpop.permute.xlu0 %2753
      %2755 = vrot.lane.b32.xlu0 %v2340, 32
      %v2756 = vpop.permute.xlu0 %2755
      %2757 = vrot.lane.b32.xlu0 %v2341, 32
      %v2758 = vpop.permute.xlu0 %2757
      %2823 = vrot.lane.b32.xlu0 %v2342, 48
      %v2824 = vpop.permute.xlu0 %2823
      %2825 = vrot.lane.b32.xlu0 %v2343, 48
      %v2826 = vpop.permute.xlu0 %2825
      %2827 = vrot.lane.b32.xlu0 %v2344, 48
      %v2828 = vpop.permute.xlu0 %2827
      %2829 = vrot.lane.b32.xlu0 %v2345, 48
      %v2830 = vpop.permute.xlu0 %2829
      %2831 = vrot.lane.b32.xlu0 %v2346, 48
      %v2832 = vpop.permute.xlu0 %2831
      %2833 = vrot.lane.b32.xlu0 %v2347, 48
      %v2834 = vpop.permute.xlu0 %2833
      %2835 = vrot.lane.b32.xlu0 %v2348, 48
      %v2836 = vpop.permute.xlu0 %2835
      %2837 = vrot.lane.b32.xlu0 %v2349, 48
      %v2838 = vpop.permute.xlu0 %2837
      %2839 = vrot.lane.b32.xlu0 %v2350, 48
      %v2840 = vpop.permute.xlu0 %2839
      %2841 = vrot.lane.b32.xlu0 %v2351, 48
      %v2842 = vpop.permute.xlu0 %2841
      %2843 = vrot.lane.b32.xlu0 %v2352, 48
      %v2844 = vpop.permute.xlu0 %2843
      %2845 = vrot.lane.b32.xlu0 %v2353, 48
      %v2846 = vpop.permute.xlu0 %2845
      %2847 = vrot.lane.b32.xlu0 %v2354, 48
      %v2848 = vpop.permute.xlu0 %2847
      %2849 = vrot.lane.b32.xlu0 %v2355, 48
      %v2850 = vpop.permute.xlu0 %2849
      %2851 = vrot.lane.b32.xlu0 %v2356, 48
      %v2852 = vpop.permute.xlu0 %2851
      %2853 = vrot.lane.b32.xlu0 %v2357, 48
      %v2854 = vpop.permute.xlu0 %2853
      %2855 = vrot.lane.b32.xlu0 %v2358, 48
      %v2856 = vpop.permute.xlu0 %2855
      %2857 = vrot.lane.b32.xlu0 %v2359, 48
      %v2858 = vpop.permute.xlu0 %2857
      %2859 = vrot.lane.b32.xlu0 %v2360, 48
      %v2860 = vpop.permute.xlu0 %2859
      %2861 = vrot.lane.b32.xlu0 %v2361, 48
      %v2862 = vpop.permute.xlu0 %2861
      %2863 = vrot.lane.b32.xlu0 %v2362, 48
      %v2864 = vpop.permute.xlu0 %2863
      %2865 = vrot.lane.b32.xlu0 %v2363, 48
      %v2866 = vpop.permute.xlu0 %2865
      %2867 = vrot.lane.b32.xlu0 %v2364, 48
      %v2868 = vpop.permute.xlu0 %2867
      %2869 = vrot.lane.b32.xlu0 %v2365, 48
      %v2870 = vpop.permute.xlu0 %2869
      %2871 = vrot.lane.b32.xlu0 %v2366, 48
      %v2872 = vpop.permute.xlu0 %2871
      %2873 = vrot.lane.b32.xlu0 %v2367, 48
      %v2874 = vpop.permute.xlu0 %2873
      %2875 = vrot.lane.b32.xlu0 %v2368, 48
      %v2876 = vpop.permute.xlu0 %2875
      %2877 = vrot.lane.b32.xlu0 %v2369, 48
      %v2878 = vpop.permute.xlu0 %2877
      %2879 = vrot.lane.b32.xlu0 %v2370, 48
      %v2880 = vpop.permute.xlu0 %2879
      %2881 = vrot.lane.b32.xlu0 %v2371, 48
      %v2882 = vpop.permute.xlu0 %2881
      %2883 = vrot.lane.b32.xlu0 %v2372, 48
      %v2884 = vpop.permute.xlu0 %2883
      %2885 = vrot.lane.b32.xlu0 %v2373, 48
      %v2886 = vpop.permute.xlu0 %2885
      %2951 = vrot.lane.b32.xlu0 %v2374, 64
      %v2952 = vpop.permute.xlu0 %2951
      %2953 = vrot.lane.b32.xlu0 %v2375, 64
      %v2954 = vpop.permute.xlu0 %2953
      %2955 = vrot.lane.b32.xlu0 %v2376, 64
      %v2956 = vpop.permute.xlu0 %2955
      %2957 = vrot.lane.b32.xlu0 %v2377, 64
      %v2958 = vpop.permute.xlu0 %2957
      %2959 = vrot.lane.b32.xlu0 %v2378, 64
      %v2960 = vpop.permute.xlu0 %2959
      %2961 = vrot.lane.b32.xlu0 %v2379, 64
      %v2962 = vpop.permute.xlu0 %2961
      %2963 = vrot.lane.b32.xlu0 %v2380, 64
      %v2964 = vpop.permute.xlu0 %2963
      %2965 = vrot.lane.b32.xlu0 %v2381, 64
      %v2966 = vpop.permute.xlu0 %2965
      %2967 = vrot.lane.b32.xlu0 %v2382, 64
      %v2968 = vpop.permute.xlu0 %2967
      %2969 = vrot.lane.b32.xlu0 %v2383, 64
      %v2970 = vpop.permute.xlu0 %2969
      %2971 = vrot.lane.b32.xlu0 %v2384, 64
      %v2972 = vpop.permute.xlu0 %2971
      %2973 = vrot.lane.b32.xlu0 %v2385, 64
      %v2974 = vpop.permute.xlu0 %2973
      %2975 = vrot.lane.b32.xlu0 %v2386, 64
      %v2976 = vpop.permute.xlu0 %2975
      %2977 = vrot.lane.b32.xlu0 %v2387, 64
      %v2978 = vpop.permute.xlu0 %2977
      %2979 = vrot.lane.b32.xlu0 %v2388, 64
      %v2980 = vpop.permute.xlu0 %2979
      %2981 = vrot.lane.b32.xlu0 %v2389, 64
      %v2982 = vpop.permute.xlu0 %2981
      %2983 = vrot.lane.b32.xlu0 %v2390, 64
      %v2984 = vpop.permute.xlu0 %2983
      %2985 = vrot.lane.b32.xlu0 %v2391, 64
      %v2986 = vpop.permute.xlu0 %2985
      %2987 = vrot.lane.b32.xlu0 %v2392, 64
      %v2988 = vpop.permute.xlu0 %2987
      %2989 = vrot.lane.b32.xlu0 %v2393, 64
      %v2990 = vpop.permute.xlu0 %2989
      %2991 = vrot.lane.b32.xlu0 %v2394, 64
      %v2992 = vpop.permute.xlu0 %2991
      %2993 = vrot.lane.b32.xlu0 %v2395, 64
      %v2994 = vpop.permute.xlu0 %2993
      %2995 = vrot.lane.b32.xlu0 %v2396, 64
      %v2996 = vpop.permute.xlu0 %2995
      %2997 = vrot.lane.b32.xlu0 %v2397, 64
      %v2998 = vpop.permute.xlu0 %2997
      %2999 = vrot.lane.b32.xlu0 %v2398, 64
      %v3000 = vpop.permute.xlu0 %2999
      %3001 = vrot.lane.b32.xlu0 %v2399, 64
      %v3002 = vpop.permute.xlu0 %3001
      %3003 = vrot.lane.b32.xlu0 %v2400, 64
      %v3004 = vpop.permute.xlu0 %3003
      %3005 = vrot.lane.b32.xlu0 %v2401, 64
      %v3006 = vpop.permute.xlu0 %3005
      %3007 = vrot.lane.b32.xlu0 %v2402, 64
      %v3008 = vpop.permute.xlu0 %3007
      %3009 = vrot.lane.b32.xlu0 %v2403, 64
      %v3010 = vpop.permute.xlu0 %3009
      %3011 = vrot.lane.b32.xlu0 %v2404, 64
      %v3012 = vpop.permute.xlu0 %3011
      %3013 = vrot.lane.b32.xlu0 %v2405, 64
      %v3014 = vpop.permute.xlu0 %3013
      %3079 = vrot.lane.b32.xlu0 %v2406, 80
      %v3080 = vpop.permute.xlu0 %3079
      %3081 = vrot.lane.b32.xlu0 %v2407, 80
      %v3082 = vpop.permute.xlu0 %3081
      %3083 = vrot.lane.b32.xlu0 %v2408, 80
      %v3084 = vpop.permute.xlu0 %3083
      %3085 = vrot.lane.b32.xlu0 %v2409, 80
      %v3086 = vpop.permute.xlu0 %3085
      %3087 = vrot.lane.b32.xlu0 %v2410, 80
      %v3088 = vpop.permute.xlu0 %3087
      %3089 = vrot.lane.b32.xlu0 %v2411, 80
      %v3090 = vpop.permute.xlu0 %3089
      %3091 = vrot.lane.b32.xlu0 %v2412, 80
      %v3092 = vpop.permute.xlu0 %3091
      %3093 = vrot.lane.b32.xlu0 %v2413, 80
      %v3094 = vpop.permute.xlu0 %3093
      %3095 = vrot.lane.b32.xlu0 %v2414, 80
      %v3096 = vpop.permute.xlu0 %3095
      %3097 = vrot.lane.b32.xlu0 %v2415, 80
      %v3098 = vpop.permute.xlu0 %3097
      %3099 = vrot.lane.b32.xlu0 %v2416, 80
      %v3100 = vpop.permute.xlu0 %3099
      %3101 = vrot.lane.b32.xlu0 %v2417, 80
      %v3102 = vpop.permute.xlu0 %3101
      %3103 = vrot.lane.b32.xlu0 %v2418, 80
      %v3104 = vpop.permute.xlu0 %3103
      %3105 = vrot.lane.b32.xlu0 %v2419, 80
      %v3106 = vpop.permute.xlu0 %3105
      %3107 = vrot.lane.b32.xlu0 %v2420, 80
      %v3108 = vpop.permute.xlu0 %3107
      %3109 = vrot.lane.b32.xlu0 %v2421, 80
      %v3110 = vpop.permute.xlu0 %3109
      %3111 = vrot.lane.b32.xlu0 %v2422, 80
      %v3112 = vpop.permute.xlu0 %3111
      %3113 = vrot.lane.b32.xlu0 %v2423, 80
      %v3114 = vpop.permute.xlu0 %3113
      %3115 = vrot.lane.b32.xlu0 %v2424, 80
      %v3116 = vpop.permute.xlu0 %3115
      %3117 = vrot.lane.b32.xlu0 %v2425, 80
      %v3118 = vpop.permute.xlu0 %3117
      %3119 = vrot.lane.b32.xlu0 %v2426, 80
      %v3120 = vpop.permute.xlu0 %3119
      %3121 = vrot.lane.b32.xlu0 %v2427, 80
      %v3122 = vpop.permute.xlu0 %3121
      %3123 = vrot.lane.b32.xlu0 %v2428, 80
      %v3124 = vpop.permute.xlu0 %3123
      %3125 = vrot.lane.b32.xlu0 %v2429, 80
      %v3126 = vpop.permute.xlu0 %3125
      %3127 = vrot.lane.b32.xlu0 %v2430, 80
      %v3128 = vpop.permute.xlu0 %3127
      %3129 = vrot.lane.b32.xlu0 %v2431, 80
      %v3130 = vpop.permute.xlu0 %3129
      %3131 = vrot.lane.b32.xlu0 %v2432, 80
      %v3132 = vpop.permute.xlu0 %3131
      %3133 = vrot.lane.b32.xlu0 %v2433, 80
      %v3134 = vpop.permute.xlu0 %3133
      %3135 = vrot.lane.b32.xlu0 %v2434, 80
      %v3136 = vpop.permute.xlu0 %3135
      %3137 = vrot.lane.b32.xlu0 %v2435, 80
      %v3138 = vpop.permute.xlu0 %3137
      %3139 = vrot.lane.b32.xlu0 %v2436, 80
      %v3140 = vpop.permute.xlu0 %3139
      %3141 = vrot.lane.b32.xlu0 %v2437, 80
      %v3142 = vpop.permute.xlu0 %3141
      %3207 = vrot.lane.b32.xlu0 %v2439, 96
      %v3208 = vpop.permute.xlu0 %3207
      %3209 = vrot.lane.b32.xlu0 %v2440, 96
      %v3210 = vpop.permute.xlu0 %3209
      %3211 = vrot.lane.b32.xlu0 %v2441, 96
      %v3212 = vpop.permute.xlu0 %3211
      %3213 = vrot.lane.b32.xlu0 %v2442, 96
      %v3214 = vpop.permute.xlu0 %3213
      %3215 = vrot.lane.b32.xlu0 %v2443, 96
      %v3216 = vpop.permute.xlu0 %3215
      %3217 = vrot.lane.b32.xlu0 %v2444, 96
      %v3218 = vpop.permute.xlu0 %3217
      %3219 = vrot.lane.b32.xlu0 %v2445, 96
      %v3220 = vpop.permute.xlu0 %3219
      %3221 = vrot.lane.b32.xlu0 %v2446, 96
      %v3222 = vpop.permute.xlu0 %3221
      %3223 = vrot.lane.b32.xlu0 %v2447, 96
      %v3224 = vpop.permute.xlu0 %3223
      %3225 = vrot.lane.b32.xlu0 %v2448, 96
      %v3226 = vpop.permute.xlu0 %3225
      %3227 = vrot.lane.b32.xlu0 %v2449, 96
      %v3228 = vpop.permute.xlu0 %3227
      %3229 = vrot.lane.b32.xlu0 %v2450, 96
      %v3230 = vpop.permute.xlu0 %3229
      %3231 = vrot.lane.b32.xlu0 %v2451, 96
      %v3232 = vpop.permute.xlu0 %3231
      %3233 = vrot.lane.b32.xlu0 %v2452, 96
      %v3234 = vpop.permute.xlu0 %3233
      %3235 = vrot.lane.b32.xlu0 %v2453, 96
      %v3236 = vpop.permute.xlu0 %3235
      %3237 = vrot.lane.b32.xlu0 %v2454, 96
      %v3238 = vpop.permute.xlu0 %3237
      %3239 = vrot.lane.b32.xlu0 %v2455, 96
      %v3240 = vpop.permute.xlu0 %3239
      %3241 = vrot.lane.b32.xlu0 %v2456, 96
      %v3242 = vpop.permute.xlu0 %3241
      %3243 = vrot.lane.b32.xlu0 %v2457, 96
      %v3244 = vpop.permute.xlu0 %3243
      %3245 = vrot.lane.b32.xlu0 %v2458, 96
      %v3246 = vpop.permute.xlu0 %3245
      %3247 = vrot.lane.b32.xlu0 %v2459, 96
      %v3248 = vpop.permute.xlu0 %3247
      %3249 = vrot.lane.b32.xlu0 %v2460, 96
      %v3250 = vpop.permute.xlu0 %3249
      %3251 = vrot.lane.b32.xlu0 %v2461, 96
      %v3252 = vpop.permute.xlu0 %3251
      %3253 = vrot.lane.b32.xlu0 %v2462, 96
      %v3254 = vpop.permute.xlu0 %3253
      %3255 = vrot.lane.b32.xlu0 %v2463, 96
      %v3256 = vpop.permute.xlu0 %3255
      %3257 = vrot.lane.b32.xlu0 %v2464, 96
      %v3258 = vpop.permute.xlu0 %3257
      %3259 = vrot.lane.b32.xlu0 %v2465, 96
      %v3260 = vpop.permute.xlu0 %3259
      %3261 = vrot.lane.b32.xlu0 %v2466, 96
      %v3262 = vpop.permute.xlu0 %3261
      %3263 = vrot.lane.b32.xlu0 %v2467, 96
      %v3264 = vpop.permute.xlu0 %3263
      %3265 = vrot.lane.b32.xlu0 %v2468, 96
      %v3266 = vpop.permute.xlu0 %3265
      %3267 = vrot.lane.b32.xlu0 %v2469, 96
      %v3268 = vpop.permute.xlu0 %3267
      %3269 = vrot.lane.b32.xlu0 %v2470, 96
      %v3270 = vpop.permute.xlu0 %3269
      %3335 = vrot.lane.b32.xlu0 %v2471, 112
      %v3336 = vpop.permute.xlu0 %3335
      %3337 = vrot.lane.b32.xlu0 %v2472, 112
      %v3338 = vpop.permute.xlu0 %3337
      %3339 = vrot.lane.b32.xlu0 %v2473, 112
      %v3340 = vpop.permute.xlu0 %3339
      %3341 = vrot.lane.b32.xlu0 %v2474, 112
      %v3342 = vpop.permute.xlu0 %3341
      %3343 = vrot.lane.b32.xlu0 %v2475, 112
      %v3344 = vpop.permute.xlu0 %3343
      %3345 = vrot.lane.b32.xlu0 %v2476, 112
      %v3346 = vpop.permute.xlu0 %3345
      %3347 = vrot.lane.b32.xlu0 %v2477, 112
      %v3348 = vpop.permute.xlu0 %3347
      %3349 = vrot.lane.b32.xlu0 %v2478, 112
      %v3350 = vpop.permute.xlu0 %3349
      %3351 = vrot.lane.b32.xlu0 %v2479, 112
      %v3352 = vpop.permute.xlu0 %3351
      %3353 = vrot.lane.b32.xlu0 %v2480, 112
      %v3354 = vpop.permute.xlu0 %3353
      %3355 = vrot.lane.b32.xlu0 %v2481, 112
      %v3356 = vpop.permute.xlu0 %3355
      %3357 = vrot.lane.b32.xlu0 %v2482, 112
      %v3358 = vpop.permute.xlu0 %3357
      %3359 = vrot.lane.b32.xlu0 %v2483, 112
      %v3360 = vpop.permute.xlu0 %3359
      %3361 = vrot.lane.b32.xlu0 %v2484, 112
      %v3362 = vpop.permute.xlu0 %3361
      %3363 = vrot.lane.b32.xlu0 %v2485, 112
      %v3364 = vpop.permute.xlu0 %3363
      %3365 = vrot.lane.b32.xlu0 %v2486, 112
      %v3366 = vpop.permute.xlu0 %3365
      %3367 = vrot.lane.b32.xlu0 %v2487, 112
      %v3368 = vpop.permute.xlu0 %3367
      %3369 = vrot.lane.b32.xlu0 %v2488, 112
      %v3370 = vpop.permute.xlu0 %3369
      %3371 = vrot.lane.b32.xlu0 %v2489, 112
      %v3372 = vpop.permute.xlu0 %3371
      %3373 = vrot.lane.b32.xlu0 %v2490, 112
      %v3374 = vpop.permute.xlu0 %3373
      %3375 = vrot.lane.b32.xlu0 %v2491, 112
      %v3376 = vpop.permute.xlu0 %3375
      %3377 = vrot.lane.b32.xlu0 %v2492, 112
      %v3378 = vpop.permute.xlu0 %3377
      %3379 = vrot.lane.b32.xlu0 %v2493, 112
      %v3380 = vpop.permute.xlu0 %3379
      %3381 = vrot.lane.b32.xlu0 %v2494, 112
      %v3382 = vpop.permute.xlu0 %3381
      %3383 = vrot.lane.b32.xlu0 %v2495, 112
      %v3384 = vpop.permute.xlu0 %3383
      %3385 = vrot.lane.b32.xlu0 %v2496, 112
      %v3386 = vpop.permute.xlu0 %3385
      %3387 = vrot.lane.b32.xlu0 %v2497, 112
      %v3388 = vpop.permute.xlu0 %3387
      %3389 = vrot.lane.b32.xlu0 %v2498, 112
      %v3390 = vpop.permute.xlu0 %3389
      %3391 = vrot.lane.b32.xlu0 %v2499, 112
      %v3392 = vpop.permute.xlu0 %3391
      %3393 = vrot.lane.b32.xlu0 %v2500, 112
      %v3394 = vpop.permute.xlu0 %3393
      %3395 = vrot.lane.b32.xlu0 %v2501, 112
      %v3396 = vpop.permute.xlu0 %3395
      %3397 = vrot.lane.b32.xlu0 %v2502, 112
      %v3398 = vpop.permute.xlu0 %3397
      %v3431 = vsel %vm1483, %v2246, %v2568
      %v3432 = vsel %vm1483, %v2247, %v2570
      %v3433 = vsel %vm1483, %v2248, %v2572
      %v3434 = vsel %vm1483, %v2249, %v2574
      %v3435 = vsel %vm1483, %v2250, %v2576
      %v3436 = vsel %vm1483, %v2251, %v2578
      %v3437 = vsel %vm1483, %v2252, %v2580
      %v3438 = vsel %vm1483, %v2253, %v2582
      %v3439 = vsel %vm1483, %v2254, %v2584
      %v3440 = vsel %vm1483, %v2255, %v2586
      %v3441 = vsel %vm1483, %v2256, %v2588
      %v3442 = vsel %vm1483, %v2257, %v2590
      %v3443 = vsel %vm1483, %v2258, %v2592
      %v3444 = vsel %vm1483, %v2259, %v2594
      %v3445 = vsel %vm1483, %v2260, %v2596
      %v3446 = vsel %vm1483, %v2261, %v2598
      %v3447 = vsel %vm1483, %v2262, %v2600
      %v3448 = vsel %vm1483, %v2263, %v2602
      %v3449 = vsel %vm1483, %v2264, %v2604
      %v3450 = vsel %vm1483, %v2265, %v2606
      %v3451 = vsel %vm1483, %v2266, %v2608
      %v3452 = vsel %vm1483, %v2267, %v2610
      %v3453 = vsel %vm1483, %v2268, %v2612
      %v3454 = vsel %vm1483, %v2269, %v2614
      %v3455 = vsel %vm1483, %v2270, %v2616
      %v3456 = vsel %vm1483, %v2271, %v2618
      %v3457 = vsel %vm1483, %v2272, %v2620
      %v3458 = vsel %vm1483, %v2273, %v2622
      %v3459 = vsel %vm1483, %v2274, %v2624
      %v3460 = vsel %vm1483, %v2275, %v2626
      %v3461 = vsel %vm1483, %v2276, %v2628
      %v3462 = vsel %vm1483, %v2277, %v2630
      %v3463 = vsel %vm1516, %v3431, %v2696
      %v3464 = vsel %vm1516, %v3432, %v2698
      %v3465 = vsel %vm1516, %v3433, %v2700
      %v3466 = vsel %vm1516, %v3434, %v2702
      %v3467 = vsel %vm1516, %v3435, %v2704
      %v3468 = vsel %vm1516, %v3436, %v2706
      %v3469 = vsel %vm1516, %v3437, %v2708
      %v3470 = vsel %vm1516, %v3438, %v2710
      %v3471 = vsel %vm1516, %v3439, %v2712
      %v3472 = vsel %vm1516, %v3440, %v2714
      %v3473 = vsel %vm1516, %v3441, %v2716
      %v3474 = vsel %vm1516, %v3442, %v2718
      %v3475 = vsel %vm1516, %v3443, %v2720
      %v3476 = vsel %vm1516, %v3444, %v2722
      %v3477 = vsel %vm1516, %v3445, %v2724
      %v3478 = vsel %vm1516, %v3446, %v2726
      %v3479 = vsel %vm1516, %v3447, %v2728
      %v3480 = vsel %vm1516, %v3448, %v2730
      %v3481 = vsel %vm1516, %v3449, %v2732
      %v3482 = vsel %vm1516, %v3450, %v2734
      %v3483 = vsel %vm1516, %v3451, %v2736
      %v3484 = vsel %vm1516, %v3452, %v2738
      %v3485 = vsel %vm1516, %v3453, %v2740
      %v3486 = vsel %vm1516, %v3454, %v2742
      %v3487 = vsel %vm1516, %v3455, %v2744
      %v3488 = vsel %vm1516, %v3456, %v2746
      %v3489 = vsel %vm1516, %v3457, %v2748
      %v3490 = vsel %vm1516, %v3458, %v2750
      %v3491 = vsel %vm1516, %v3459, %v2752
      %v3492 = vsel %vm1516, %v3460, %v2754
      %v3493 = vsel %vm1516, %v3461, %v2756
      %v3494 = vsel %vm1516, %v3462, %v2758
      %v3495 = vsel %vm1549, %v3463, %v2824
      %v3496 = vsel %vm1549, %v3464, %v2826
      %v3497 = vsel %vm1549, %v3465, %v2828
      %v3498 = vsel %vm1549, %v3466, %v2830
      %v3499 = vsel %vm1549, %v3467, %v2832
      %v3500 = vsel %vm1549, %v3468, %v2834
      %v3501 = vsel %vm1549, %v3469, %v2836
      %v3502 = vsel %vm1549, %v3470, %v2838
      %v3503 = vsel %vm1549, %v3471, %v2840
      %v3504 = vsel %vm1549, %v3472, %v2842
      %v3505 = vsel %vm1549, %v3473, %v2844
      %v3506 = vsel %vm1549, %v3474, %v2846
      %v3507 = vsel %vm1549, %v3475, %v2848
      %v3508 = vsel %vm1549, %v3476, %v2850
      %v3509 = vsel %vm1549, %v3477, %v2852
      %v3510 = vsel %vm1549, %v3478, %v2854
      %v3511 = vsel %vm1549, %v3479, %v2856
      %v3512 = vsel %vm1549, %v3480, %v2858
      %v3513 = vsel %vm1549, %v3481, %v2860
      %v3514 = vsel %vm1549, %v3482, %v2862
      %v3515 = vsel %vm1549, %v3483, %v2864
      %v3516 = vsel %vm1549, %v3484, %v2866
      %v3517 = vsel %vm1549, %v3485, %v2868
      %v3518 = vsel %vm1549, %v3486, %v2870
      %v3519 = vsel %vm1549, %v3487, %v2872
      %v3520 = vsel %vm1549, %v3488, %v2874
      %v3521 = vsel %vm1549, %v3489, %v2876
      %v3522 = vsel %vm1549, %v3490, %v2878
      %v3523 = vsel %vm1549, %v3491, %v2880
      %v3524 = vsel %vm1549, %v3492, %v2882
      %v3525 = vsel %vm1549, %v3493, %v2884
      %v3526 = vsel %vm1549, %v3494, %v2886
      %v3527 = vsel %vm1582, %v3495, %v2952
      %v3528 = vsel %vm1582, %v3496, %v2954
      %v3529 = vsel %vm1582, %v3497, %v2956
      %v3530 = vsel %vm1582, %v3498, %v2958
      %v3531 = vsel %vm1582, %v3499, %v2960
      %v3532 = vsel %vm1582, %v3500, %v2962
      %v3533 = vsel %vm1582, %v3501, %v2964
      %v3534 = vsel %vm1582, %v3502, %v2966
      %v3535 = vsel %vm1582, %v3503, %v2968
      %v3536 = vsel %vm1582, %v3504, %v2970
      %v3537 = vsel %vm1582, %v3505, %v2972
      %v3538 = vsel %vm1582, %v3506, %v2974
      %v3539 = vsel %vm1582, %v3507, %v2976
      %v3540 = vsel %vm1582, %v3508, %v2978
      %v3541 = vsel %vm1582, %v3509, %v2980
      %v3542 = vsel %vm1582, %v3510, %v2982
      %v3543 = vsel %vm1582, %v3511, %v2984
      %v3544 = vsel %vm1582, %v3512, %v2986
      %v3545 = vsel %vm1582, %v3513, %v2988
      %v3546 = vsel %vm1582, %v3514, %v2990
      %v3547 = vsel %vm1582, %v3515, %v2992
      %v3548 = vsel %vm1582, %v3516, %v2994
      %v3549 = vsel %vm1582, %v3517, %v2996
      %v3550 = vsel %vm1582, %v3518, %v2998
      %v3551 = vsel %vm1582, %v3519, %v3000
      %v3552 = vsel %vm1582, %v3520, %v3002
      %v3553 = vsel %vm1582, %v3521, %v3004
      %v3554 = vsel %vm1582, %v3522, %v3006
      %v3555 = vsel %vm1582, %v3523, %v3008
      %v3556 = vsel %vm1582, %v3524, %v3010
      %v3557 = vsel %vm1582, %v3525, %v3012
      %v3558 = vsel %vm1582, %v3526, %v3014
      %v3559 = vsel %vm1615, %v3527, %v3080
      %v3560 = vsel %vm1615, %v3528, %v3082
      %v3561 = vsel %vm1615, %v3529, %v3084
      %v3562 = vsel %vm1615, %v3530, %v3086
      %v3563 = vsel %vm1615, %v3531, %v3088
      %v3564 = vsel %vm1615, %v3532, %v3090
      %v3565 = vsel %vm1615, %v3533, %v3092
      %v3566 = vsel %vm1615, %v3534, %v3094
      %v3567 = vsel %vm1615, %v3535, %v3096
      %v3568 = vsel %vm1615, %v3536, %v3098
      %v3569 = vsel %vm1615, %v3537, %v3100
      %v3570 = vsel %vm1615, %v3538, %v3102
      %v3571 = vsel %vm1615, %v3539, %v3104
      %v3572 = vsel %vm1615, %v3540, %v3106
      %v3573 = vsel %vm1615, %v3541, %v3108
      %v3574 = vsel %vm1615, %v3542, %v3110
      %v3575 = vsel %vm1615, %v3543, %v3112
      %v3576 = vsel %vm1615, %v3544, %v3114
      %v3577 = vsel %vm1615, %v3545, %v3116
      %v3578 = vsel %vm1615, %v3546, %v3118
      %v3579 = vsel %vm1615, %v3547, %v3120
      %v3580 = vsel %vm1615, %v3548, %v3122
      %v3581 = vsel %vm1615, %v3549, %v3124
      %v3582 = vsel %vm1615, %v3550, %v3126
      %v3583 = vsel %vm1615, %v3551, %v3128
      %v3584 = vsel %vm1615, %v3552, %v3130
      %v3585 = vsel %vm1615, %v3553, %v3132
      %v3586 = vsel %vm1615, %v3554, %v3134
      %v3587 = vsel %vm1615, %v3555, %v3136
      %v3588 = vsel %vm1615, %v3556, %v3138
      %v3589 = vsel %vm1615, %v3557, %v3140
      %v3590 = vsel %vm1615, %v3558, %v3142
      %v3591 = vsel %vm1648, %v3559, %v3208
      %v3592 = vsel %vm1648, %v3560, %v3210
      %v3593 = vsel %vm1648, %v3561, %v3212
      %v3594 = vsel %vm1648, %v3562, %v3214
      %v3595 = vsel %vm1648, %v3563, %v3216
      %v3596 = vsel %vm1648, %v3564, %v3218
      %v3597 = vsel %vm1648, %v3565, %v3220
      %v3598 = vsel %vm1648, %v3566, %v3222
      %v3599 = vsel %vm1648, %v3567, %v3224
      %v3600 = vsel %vm1648, %v3568, %v3226
      %v3601 = vsel %vm1648, %v3569, %v3228
      %v3602 = vsel %vm1648, %v3570, %v3230
      %v3603 = vsel %vm1648, %v3571, %v3232
      %v3604 = vsel %vm1648, %v3572, %v3234
      %v3605 = vsel %vm1648, %v3573, %v3236
      %v3606 = vsel %vm1648, %v3574, %v3238
      %v3607 = vsel %vm1648, %v3575, %v3240
      %v3608 = vsel %vm1648, %v3576, %v3242
      %v3609 = vsel %vm1648, %v3577, %v3244
      %v3610 = vsel %vm1648, %v3578, %v3246
      %v3611 = vsel %vm1648, %v3579, %v3248
      %v3612 = vsel %vm1648, %v3580, %v3250
      %v3613 = vsel %vm1648, %v3581, %v3252
      %v3614 = vsel %vm1648, %v3582, %v3254
      %v3615 = vsel %vm1648, %v3583, %v3256
      %v3616 = vsel %vm1648, %v3584, %v3258
      %v3617 = vsel %vm1648, %v3585, %v3260
      %v3618 = vsel %vm1648, %v3586, %v3262
      %v3619 = vsel %vm1648, %v3587, %v3264
      %v3620 = vsel %vm1648, %v3588, %v3266
      %v3621 = vsel %vm1648, %v3589, %v3268
      %v3622 = vsel %vm1648, %v3590, %v3270
      %v3623 = vsel %vm1681, %v3591, %v3336
      %v3624 = vsel %vm1681, %v3592, %v3338
      %v3625 = vsel %vm1681, %v3593, %v3340
      %v3626 = vsel %vm1681, %v3594, %v3342
      %v3627 = vsel %vm1681, %v3595, %v3344
      %v3628 = vsel %vm1681, %v3596, %v3346
      %v3629 = vsel %vm1681, %v3597, %v3348
      %v3630 = vsel %vm1681, %v3598, %v3350
      %v3631 = vsel %vm1681, %v3599, %v3352
      %v3632 = vsel %vm1681, %v3600, %v3354
      %v3633 = vsel %vm1681, %v3601, %v3356
      %v3634 = vsel %vm1681, %v3602, %v3358
      %v3635 = vsel %vm1681, %v3603, %v3360
      %v3636 = vsel %vm1681, %v3604, %v3362
      %v3637 = vsel %vm1681, %v3605, %v3364
      %v3638 = vsel %vm1681, %v3606, %v3366
      %v3639 = vsel %vm1681, %v3607, %v3368
      %v3640 = vsel %vm1681, %v3608, %v3370
      %v3641 = vsel %vm1681, %v3609, %v3372
      %v3642 = vsel %vm1681, %v3610, %v3374
      %v3643 = vsel %vm1681, %v3611, %v3376
      %v3644 = vsel %vm1681, %v3612, %v3378
      %v3645 = vsel %vm1681, %v3613, %v3380
      %v3646 = vsel %vm1681, %v3614, %v3382
      %v3647 = vsel %vm1681, %v3615, %v3384
      %v3648 = vsel %vm1681, %v3616, %v3386
      %v3649 = vsel %vm1681, %v3617, %v3388
      %v3650 = vsel %vm1681, %v3618, %v3390
      %v3651 = vsel %vm1681, %v3619, %v3392
      %v3652 = vsel %vm1681, %v3620, %v3394
      %v3653 = vsel %vm1681, %v3621, %v3396
      %v3654 = vsel %vm1681, %v3622, %v3398
      %v3656 = vsel %vm1483, %v2503, 0
      %v3659 = vsel %vm1483, %v2504, 0
      %v3662 = vsel %vm1483, %v2505, 0
      %v3665 = vsel %vm1483, %v2506, 0
      %v3668 = vsel %vm1483, %v2507, 0
      %v3671 = vsel %vm1483, %v2508, 0
      %v3674 = vsel %vm1483, %v2509, 0
      %v3677 = vsel %vm1483, %v2510, 0
      %v3680 = vsel %vm1483, %v2511, 0
      %v3683 = vsel %vm1483, %v2512, 0
      %v3686 = vsel %vm1483, %v2513, 0
      %v3689 = vsel %vm1483, %v2514, 0
      %v3692 = vsel %vm1483, %v2515, 0
      %v3695 = vsel %vm1483, %v2516, 0
      %v3698 = vsel %vm1483, %v2517, 0
      %v3701 = vsel %vm1483, %v2518, 0
      %v3704 = vsel %vm1483, %v2519, 0
      %v3707 = vsel %vm1483, %v2520, 0
      %v3710 = vsel %vm1483, %v2521, 0
      %v3713 = vsel %vm1483, %v2522, 0
      %v3716 = vsel %vm1483, %v2523, 0
      %v3719 = vsel %vm1483, %v2524, 0
      %v3722 = vsel %vm1483, %v2525, 0
      %v3725 = vsel %vm1483, %v2526, 0
      %v3728 = vsel %vm1483, %v2527, 0
      %v3731 = vsel %vm1483, %v2528, 0
      %v3734 = vsel %vm1483, %v2529, 0
      %v3737 = vsel %vm1483, %v2530, 0
      %v3740 = vsel %vm1483, %v2531, 0
      %v3743 = vsel %vm1483, %v2532, 0
      %v3746 = vsel %vm1483, %v2533, 0
      %v3749 = vsel %vm1483, %v2534, 0
      %3751 = vmatpush.msra.mxu0 %v2243
      %3752 = vmatpush.msra.mxu0 %v2242
      %3753 = vmatpush.msra.mxu0 %v2241
      %3754 = vmatpush.msra.mxu0 %v2240
      %3755 = vmatpush.msra.mxu0 %v2239
      %3756 = vmatpush.msra.mxu0 %v2238
      %3757 = vmatpush.msra.mxu0 %v2237
      %3758 = vmatpush.msra.mxu0 %v2236
      %3759 = vmatpush.msra.mxu0 %v2235
      %3760 = vmatpush.msra.mxu0 %v2234
      %3761 = vmatpush.msra.mxu0 %v2233
      %3762 = vmatpush.msra.mxu0 %v2232
      %3763 = vmatpush.msra.mxu0 %v2231
      %3764 = vmatpush.msra.mxu0 %v2230
      %3765 = vmatpush.msra.mxu0 %v2229
      %3766 = vmatpush.msra.mxu0 %v2228
      %3767 = vmatmul.f32.gmra.mxu0 %v3623
      %v3768 = vpop.f32.mrf.mxu0
      %v3769 = vadd.f32 0.0, %v3768
      %3770 = vmatmul.f32.gmra.mxu0 %v3624
      %v3771 = vpop.f32.mrf.mxu0
      %v3772 = vadd.f32 0.0, %v3771
      %3773 = vmatmul.f32.gmra.mxu0 %v3625
      %v3774 = vpop.f32.mrf.mxu0
      %v3775 = vadd.f32 0.0, %v3774
      %3776 = vmatmul.f32.gmra.mxu0 %v3626
      %v3777 = vpop.f32.mrf.mxu0
      %v3778 = vadd.f32 0.0, %v3777
      %3779 = vmatmul.f32.gmra.mxu0 %v3627
      %v3780 = vpop.f32.mrf.mxu0
      %v3781 = vadd.f32 0.0, %v3780
      %3782 = vmatmul.f32.gmra.mxu0 %v3628
      %v3783 = vpop.f32.mrf.mxu0
      %v3784 = vadd.f32 0.0, %v3783
      %3785 = vmatmul.f32.gmra.mxu0 %v3629
      %v3786 = vpop.f32.mrf.mxu0
      %v3787 = vadd.f32 0.0, %v3786
      %3788 = vmatmul.f32.gmra.mxu0 %v3630
      %v3789 = vpop.f32.mrf.mxu0
      %v3790 = vadd.f32 0.0, %v3789
      %3791 = vmatmul.f32.gmra.mxu0 %v3631
      %v3792 = vpop.f32.mrf.mxu0
      %v3793 = vadd.f32 0.0, %v3792
      %3794 = vmatmul.f32.gmra.mxu0 %v3632
      %v3795 = vpop.f32.mrf.mxu0
      %v3796 = vadd.f32 0.0, %v3795
      %3797 = vmatmul.f32.gmra.mxu0 %v3633
      %v3798 = vpop.f32.mrf.mxu0
      %v3799 = vadd.f32 0.0, %v3798
      %3800 = vmatmul.f32.gmra.mxu0 %v3634
      %v3801 = vpop.f32.mrf.mxu0
      %v3802 = vadd.f32 0.0, %v3801
      %3803 = vmatmul.f32.gmra.mxu0 %v3635
      %v3804 = vpop.f32.mrf.mxu0
      %v3805 = vadd.f32 0.0, %v3804
      %3806 = vmatmul.f32.gmra.mxu0 %v3636
      %v3807 = vpop.f32.mrf.mxu0
      %v3808 = vadd.f32 0.0, %v3807
      %3809 = vmatmul.f32.gmra.mxu0 %v3637
      %v3810 = vpop.f32.mrf.mxu0
      %v3811 = vadd.f32 0.0, %v3810
      %3812 = vmatmul.f32.gmra.mxu0 %v3638
      %v3813 = vpop.f32.mrf.mxu0
      %v3814 = vadd.f32 0.0, %v3813
      %3815 = vmatmul.f32.gmra.mxu0 %v3639
      %v3816 = vpop.f32.mrf.mxu0
      %v3817 = vadd.f32 0.0, %v3816
      %3818 = vmatmul.f32.gmra.mxu0 %v3640
      %v3819 = vpop.f32.mrf.mxu0
      %v3820 = vadd.f32 0.0, %v3819
      %3821 = vmatmul.f32.gmra.mxu0 %v3641
      %v3822 = vpop.f32.mrf.mxu0
      %v3823 = vadd.f32 0.0, %v3822
      %3824 = vmatmul.f32.gmra.mxu0 %v3642
      %v3825 = vpop.f32.mrf.mxu0
      %v3826 = vadd.f32 0.0, %v3825
      %3827 = vmatmul.f32.gmra.mxu0 %v3643
      %v3828 = vpop.f32.mrf.mxu0
      %v3829 = vadd.f32 0.0, %v3828
      %3830 = vmatmul.f32.gmra.mxu0 %v3644
      %v3831 = vpop.f32.mrf.mxu0
      %v3832 = vadd.f32 0.0, %v3831
      %3833 = vmatmul.f32.gmra.mxu0 %v3645
      %v3834 = vpop.f32.mrf.mxu0
      %v3835 = vadd.f32 0.0, %v3834
      %3836 = vmatmul.f32.gmra.mxu0 %v3646
      %v3837 = vpop.f32.mrf.mxu0
      %v3838 = vadd.f32 0.0, %v3837
      %3839 = vmatmul.f32.gmra.mxu0 %v3647
      %v3840 = vpop.f32.mrf.mxu0
      %v3841 = vadd.f32 0.0, %v3840
      %3842 = vmatmul.f32.gmra.mxu0 %v3648
      %v3843 = vpop.f32.mrf.mxu0
      %v3844 = vadd.f32 0.0, %v3843
      %3845 = vmatmul.f32.gmra.mxu0 %v3649
      %v3846 = vpop.f32.mrf.mxu0
      %v3847 = vadd.f32 0.0, %v3846
      %3848 = vmatmul.f32.gmra.mxu0 %v3650
      %v3849 = vpop.f32.mrf.mxu0
      %v3850 = vadd.f32 0.0, %v3849
      %3851 = vmatmul.f32.gmra.mxu0 %v3651
      %v3852 = vpop.f32.mrf.mxu0
      %v3853 = vadd.f32 0.0, %v3852
      %3854 = vmatmul.f32.gmra.mxu0 %v3652
      %v3855 = vpop.f32.mrf.mxu0
      %v3856 = vadd.f32 0.0, %v3855
      %3857 = vmatmul.f32.gmra.mxu0 %v3653
      %v3858 = vpop.f32.mrf.mxu0
      %v3859 = vadd.f32 0.0, %v3858
      %3860 = vmatmul.f32.gmra.mxu0 %v3654
      %v3861 = vpop.f32.mrf.mxu0
      %v3862 = vadd.f32 0.0, %v3861
      %3863 = vdwg.mxu0
      %3864 = vmatpush.msra.mxu0 0.0
      %3865 = vmatpush.msra.mxu0 0.0
      %3866 = vmatpush.msra.mxu0 0.0
      %3867 = vmatpush.msra.mxu0 0.0
      %3868 = vmatpush.msra.mxu0 0.0
      %3869 = vmatpush.msra.mxu0 0.0
      %3870 = vmatpush.msra.mxu0 0.0
      %3871 = vmatpush.msra.mxu0 0.0
      %3872 = vmatpush.msra.mxu0 0.0
      %3873 = vmatpush.msra.mxu0 0.0
      %3874 = vmatpush.msra.mxu0 0.0
      %3875 = vmatpush.msra.mxu0 0.0
      %3876 = vmatpush.msra.mxu0 0.0
      %3877 = vmatpush.msra.mxu0 0.0
      %3878 = vmatpush.msra.mxu0 %v2245
      %3879 = vmatpush.msra.mxu0 %v2244
      %3880 = vmatmul.f32.gmra.mxu0 %v3656
      %v3881 = vpop.f32.mrf.mxu0
      %v3882 = vadd.f32 %v3769, %v3881
      %3883 = vmatmul.f32.gmra.mxu0 %v3659
      %v3884 = vpop.f32.mrf.mxu0
      %v3885 = vadd.f32 %v3772, %v3884
      %3886 = vmatmul.f32.gmra.mxu0 %v3662
      %v3887 = vpop.f32.mrf.mxu0
      %v3888 = vadd.f32 %v3775, %v3887
      %3889 = vmatmul.f32.gmra.mxu0 %v3665
      %v3890 = vpop.f32.mrf.mxu0
      %v3891 = vadd.f32 %v3778, %v3890
      %3892 = vmatmul.f32.gmra.mxu0 %v3668
      %v3893 = vpop.f32.mrf.mxu0
      %v3894 = vadd.f32 %v3781, %v3893
      %3895 = vmatmul.f32.gmra.mxu0 %v3671
      %v3896 = vpop.f32.mrf.mxu0
      %v3897 = vadd.f32 %v3784, %v3896
      %3898 = vmatmul.f32.gmra.mxu0 %v3674
      %v3899 = vpop.f32.mrf.mxu0
      %v3900 = vadd.f32 %v3787, %v3899
      %3901 = vmatmul.f32.gmra.mxu0 %v3677
      %v3902 = vpop.f32.mrf.mxu0
      %v3903 = vadd.f32 %v3790, %v3902
      %3904 = vmatmul.f32.gmra.mxu0 %v3680
      %v3905 = vpop.f32.mrf.mxu0
      %v3906 = vadd.f32 %v3793, %v3905
      %3907 = vmatmul.f32.gmra.mxu0 %v3683
      %v3908 = vpop.f32.mrf.mxu0
      %v3909 = vadd.f32 %v3796, %v3908
      %3910 = vmatmul.f32.gmra.mxu0 %v3686
      %v3911 = vpop.f32.mrf.mxu0
      %v3912 = vadd.f32 %v3799, %v3911
      %3913 = vmatmul.f32.gmra.mxu0 %v3689
      %v3914 = vpop.f32.mrf.mxu0
      %v3915 = vadd.f32 %v3802, %v3914
      %3916 = vmatmul.f32.gmra.mxu0 %v3692
      %v3917 = vpop.f32.mrf.mxu0
      %v3918 = vadd.f32 %v3805, %v3917
      %3919 = vmatmul.f32.gmra.mxu0 %v3695
      %v3920 = vpop.f32.mrf.mxu0
      %v3921 = vadd.f32 %v3808, %v3920
      %3922 = vmatmul.f32.gmra.mxu0 %v3698
      %v3923 = vpop.f32.mrf.mxu0
      %v3924 = vadd.f32 %v3811, %v3923
      %3925 = vmatmul.f32.gmra.mxu0 %v3701
      %v3926 = vpop.f32.mrf.mxu0
      %v3927 = vadd.f32 %v3814, %v3926
      %3928 = vmatmul.f32.gmra.mxu0 %v3704
      %v3929 = vpop.f32.mrf.mxu0
      %v3930 = vadd.f32 %v3817, %v3929
      %3931 = vmatmul.f32.gmra.mxu0 %v3707
      %v3932 = vpop.f32.mrf.mxu0
      %v3933 = vadd.f32 %v3820, %v3932
      %3934 = vmatmul.f32.gmra.mxu0 %v3710
      %v3935 = vpop.f32.mrf.mxu0
      %v3936 = vadd.f32 %v3823, %v3935
      %3937 = vmatmul.f32.gmra.mxu0 %v3713
      %v3938 = vpop.f32.mrf.mxu0
      %v3939 = vadd.f32 %v3826, %v3938
      %3940 = vmatmul.f32.gmra.mxu0 %v3716
      %v3941 = vpop.f32.mrf.mxu0
      %v3942 = vadd.f32 %v3829, %v3941
      %3943 = vmatmul.f32.gmra.mxu0 %v3719
      %v3944 = vpop.f32.mrf.mxu0
      %v3945 = vadd.f32 %v3832, %v3944
      %3946 = vmatmul.f32.gmra.mxu0 %v3722
      %v3947 = vpop.f32.mrf.mxu0
      %v3948 = vadd.f32 %v3835, %v3947
      %3949 = vmatmul.f32.gmra.mxu0 %v3725
      %v3950 = vpop.f32.mrf.mxu0
      %v3951 = vadd.f32 %v3838, %v3950
      %3952 = vmatmul.f32.gmra.mxu0 %v3728
      %v3953 = vpop.f32.mrf.mxu0
      %v3954 = vadd.f32 %v3841, %v3953
      %3955 = vmatmul.f32.gmra.mxu0 %v3731
      %v3956 = vpop.f32.mrf.mxu0
      %v3957 = vadd.f32 %v3844, %v3956
      %3958 = vmatmul.f32.gmra.mxu0 %v3734
      %v3959 = vpop.f32.mrf.mxu0
      %v3960 = vadd.f32 %v3847, %v3959
      %3961 = vmatmul.f32.gmra.mxu0 %v3737
      %v3962 = vpop.f32.mrf.mxu0
      %v3963 = vadd.f32 %v3850, %v3962
      %3964 = vmatmul.f32.gmra.mxu0 %v3740
      %v3965 = vpop.f32.mrf.mxu0
      %v3966 = vadd.f32 %v3853, %v3965
      %3967 = vmatmul.f32.gmra.mxu0 %v3743
      %v3968 = vpop.f32.mrf.mxu0
      %v3969 = vadd.f32 %v3856, %v3968
      %3970 = vmatmul.f32.gmra.mxu0 %v3746
      %v3971 = vpop.f32.mrf.mxu0
      %v3972 = vadd.f32 %v3859, %v3971
      %3973 = vmatmul.f32.gmra.mxu0 %v3749
      %v3974 = vpop.f32.mrf.mxu0
      %v3975 = vadd.f32 %v3862, %v3974
      %3976 = vdwg.mxu0
      %v3977 = vld [vmem:[%s5] sm:$0x1]
      %v3979 = vperm.slane %v3977, 0
      %v3981 = vmul.f32 %v3882, %v3979
      %v3982 = vmul.f32 %v3885, %v3979
      %v3983 = vmul.f32 %v3888, %v3979
      %v3984 = vmul.f32 %v3891, %v3979
      %v3985 = vmul.f32 %v3894, %v3979
      %v3986 = vmul.f32 %v3897, %v3979
      %v3987 = vmul.f32 %v3900, %v3979
      %v3988 = vmul.f32 %v3903, %v3979
      %v3989 = vmul.f32 %v3906, %v3979
      %v3990 = vmul.f32 %v3909, %v3979
      %v3991 = vmul.f32 %v3912, %v3979
      %v3992 = vmul.f32 %v3915, %v3979
      %v3993 = vmul.f32 %v3918, %v3979
      %v3994 = vmul.f32 %v3921, %v3979
      %v3995 = vmul.f32 %v3924, %v3979
      %v3996 = vmul.f32 %v3927, %v3979
      %v3997 = vmul.f32 %v3930, %v3979
      %v3998 = vmul.f32 %v3933, %v3979
      %v3999 = vmul.f32 %v3936, %v3979
      %v4000 = vmul.f32 %v3939, %v3979
      %v4001 = vmul.f32 %v3942, %v3979
      %v4002 = vmul.f32 %v3945, %v3979
      %v4003 = vmul.f32 %v3948, %v3979
      %v4004 = vmul.f32 %v3951, %v3979
      %v4005 = vmul.f32 %v3954, %v3979
      %v4006 = vmul.f32 %v3957, %v3979
      %v4007 = vmul.f32 %v3960, %v3979
      %v4008 = vmul.f32 %v3963, %v3979
      %v4009 = vmul.f32 %v3966, %v3979
      %v4010 = vmul.f32 %v3969, %v3979
      %v4011 = vmul.f32 %v3972, %v3979
      %v4012 = vmul.f32 %v3975, %v3979
      %v4013 = vld [vmem:[%s6] sm:$0x1]
      %v4015 = vperm.slane %v4013, 0
      %v4017 = vadd.f32 %v3981, %v4015
      %v4018 = vadd.f32 %v3982, %v4015
      %v4019 = vadd.f32 %v3983, %v4015
      %v4020 = vadd.f32 %v3984, %v4015
      %v4021 = vadd.f32 %v3985, %v4015
      %v4022 = vadd.f32 %v3986, %v4015
      %v4023 = vadd.f32 %v3987, %v4015
      %v4024 = vadd.f32 %v3988, %v4015
      %v4025 = vadd.f32 %v3989, %v4015
      %v4026 = vadd.f32 %v3990, %v4015
      %v4027 = vadd.f32 %v3991, %v4015
      %v4028 = vadd.f32 %v3992, %v4015
      %v4029 = vadd.f32 %v3993, %v4015
      %v4030 = vadd.f32 %v3994, %v4015
      %v4031 = vadd.f32 %v3995, %v4015
      %v4032 = vadd.f32 %v3996, %v4015
      %v4033 = vadd.f32 %v3997, %v4015
      %v4034 = vadd.f32 %v3998, %v4015
      %v4035 = vadd.f32 %v3999, %v4015
      %v4036 = vadd.f32 %v4000, %v4015
      %v4037 = vadd.f32 %v4001, %v4015
      %v4038 = vadd.f32 %v4002, %v4015
      %v4039 = vadd.f32 %v4003, %v4015
      %v4040 = vadd.f32 %v4004, %v4015
      %v4041 = vadd.f32 %v4005, %v4015
      %v4042 = vadd.f32 %v4006, %v4015
      %v4043 = vadd.f32 %v4007, %v4015
      %v4044 = vadd.f32 %v4008, %v4015
      %v4045 = vadd.f32 %v4009, %v4015
      %v4046 = vadd.f32 %v4010, %v4015
      %v4047 = vadd.f32 %v4011, %v4015
      %v4048 = vadd.f32 %v4012, %v4015
      %v4049 = vadd.f32 %v4017, %v280
      %v4050 = vadd.f32 %v4018, %v281
      %v4051 = vadd.f32 %v4019, %v282
      %v4052 = vadd.f32 %v4020, %v283
      %v4053 = vadd.f32 %v4021, %v284
      %v4054 = vadd.f32 %v4022, %v285
      %v4055 = vadd.f32 %v4023, %v286
      %v4056 = vadd.f32 %v4024, %v287
      %v4057 = vadd.f32 %v4025, %v288
      %v4058 = vadd.f32 %v4026, %v289
      %v4059 = vadd.f32 %v4027, %v290
      %v4060 = vadd.f32 %v4028, %v291
      %v4061 = vadd.f32 %v4029, %v292
      %v4062 = vadd.f32 %v4030, %v293
      %v4063 = vadd.f32 %v4031, %v294
      %v4064 = vadd.f32 %v4032, %v295
      %v4065 = vadd.f32 %v4033, %v296
      %v4066 = vadd.f32 %v4034, %v297
      %v4067 = vadd.f32 %v4035, %v298
      %v4068 = vadd.f32 %v4036, %v299
      %v4069 = vadd.f32 %v4037, %v300
      %v4070 = vadd.f32 %v4038, %v301
      %v4071 = vadd.f32 %v4039, %v302
      %v4072 = vadd.f32 %v4040, %v303
      %v4073 = vadd.f32 %v4041, %v304
      %v4074 = vadd.f32 %v4042, %v305
      %v4075 = vadd.f32 %v4043, %v306
      %v4076 = vadd.f32 %v4044, %v307
      %v4077 = vadd.f32 %v4045, %v308
      %v4078 = vadd.f32 %v4046, %v309
      %v4079 = vadd.f32 %v4047, %v310
      %v4080 = vadd.f32 %v4048, %v311
      %v4081 = vmax.f32 %v4049, 0.0
      %v4082 = vmax.f32 %v4050, 0.0
      %v4083 = vmax.f32 %v4051, 0.0
      %v4084 = vmax.f32 %v4052, 0.0
      %v4085 = vmax.f32 %v4053, 0.0
      %v4086 = vmax.f32 %v4054, 0.0
      %v4087 = vmax.f32 %v4055, 0.0
      %v4088 = vmax.f32 %v4056, 0.0
      %v4089 = vmax.f32 %v4057, 0.0
      %v4090 = vmax.f32 %v4058, 0.0
      %v4091 = vmax.f32 %v4059, 0.0
      %v4092 = vmax.f32 %v4060, 0.0
      %v4093 = vmax.f32 %v4061, 0.0
      %v4094 = vmax.f32 %v4062, 0.0
      %v4095 = vmax.f32 %v4063, 0.0
      %v4096 = vmax.f32 %v4064, 0.0
      %v4097 = vmax.f32 %v4065, 0.0
      %v4098 = vmax.f32 %v4066, 0.0
      %v4099 = vmax.f32 %v4067, 0.0
      %v4100 = vmax.f32 %v4068, 0.0
      %v4101 = vmax.f32 %v4069, 0.0
      %v4102 = vmax.f32 %v4070, 0.0
      %v4103 = vmax.f32 %v4071, 0.0
      %v4104 = vmax.f32 %v4072, 0.0
      %v4105 = vmax.f32 %v4073, 0.0
      %v4106 = vmax.f32 %v4074, 0.0
      %v4107 = vmax.f32 %v4075, 0.0
      %v4108 = vmax.f32 %v4076, 0.0
      %v4109 = vmax.f32 %v4077, 0.0
      %v4110 = vmax.f32 %v4078, 0.0
      %v4111 = vmax.f32 %v4079, 0.0
      %v4112 = vmax.f32 %v4080, 0.0
      %4113 = vst.msk [vmem:[%s278] sm:$0xff] %vm1483, %v4081
      %4114 = vst.msk [vmem:[%s278 + $0x8] sm:$0xff] %vm1483, %v4082
      %4115 = vst.msk [vmem:[%s278 + $0x10] sm:$0xff] %vm1483, %v4083
      %4116 = vst.msk [vmem:[%s278 + $0x18] sm:$0xff] %vm1483, %v4084
      %4117 = vst.msk [vmem:[%s278 + $0x20] sm:$0xff] %vm1483, %v4085
      %4118 = vst.msk [vmem:[%s278 + $0x28] sm:$0xff] %vm1483, %v4086
      %4119 = vst.msk [vmem:[%s278 + $0x30] sm:$0xff] %vm1483, %v4087
      %4120 = vst.msk [vmem:[%s278 + $0x38] sm:$0xff] %vm1483, %v4088
      %4121 = vst.msk [vmem:[%s278 + $0x40] sm:$0xff] %vm1483, %v4089
      %4122 = vst.msk [vmem:[%s278 + $0x48] sm:$0xff] %vm1483, %v4090
      %4123 = vst.msk [vmem:[%s278 + $0x50] sm:$0xff] %vm1483, %v4091
      %4124 = vst.msk [vmem:[%s278 + $0x58] sm:$0xff] %vm1483, %v4092
      %4125 = vst.msk [vmem:[%s278 + $0x60] sm:$0xff] %vm1483, %v4093
      %4126 = vst.msk [vmem:[%s278 + $0x68] sm:$0xff] %vm1483, %v4094
      %4127 = vst.msk [vmem:[%s278 + $0x70] sm:$0xff] %vm1483, %v4095
      %4128 = vst.msk [vmem:[%s278 + $0x78] sm:$0xff] %vm1483, %v4096
      %4129 = vst.msk [vmem:[%s278 + $0x80] sm:$0xff] %vm1483, %v4097
      %4130 = vst.msk [vmem:[%s278 + $0x88] sm:$0xff] %vm1483, %v4098
      %4131 = vst.msk [vmem:[%s278 + $0x90] sm:$0xff] %vm1483, %v4099
      %4132 = vst.msk [vmem:[%s278 + $0x98] sm:$0xff] %vm1483, %v4100
      %4133 = vst.msk [vmem:[%s278 + $0xa0] sm:$0xff] %vm1483, %v4101
      %4134 = vst.msk [vmem:[%s278 + $0xa8] sm:$0xff] %vm1483, %v4102
      %4135 = vst.msk [vmem:[%s278 + $0xb0] sm:$0xff] %vm1483, %v4103
      %4136 = vst.msk [vmem:[%s278 + $0xb8] sm:$0xff] %vm1483, %v4104
      %4137 = vst.msk [vmem:[%s278 + $0xc0] sm:$0xff] %vm1483, %v4105
      %4138 = vst.msk [vmem:[%s278 + $0xc8] sm:$0xff] %vm1483, %v4106
      %4139 = vst.msk [vmem:[%s278 + $0xd0] sm:$0xff] %vm1483, %v4107
      %4140 = vst.msk [vmem:[%s278 + $0xd8] sm:$0xff] %vm1483, %v4108
      %4141 = vst.msk [vmem:[%s278 + $0xe0] sm:$0xff] %vm1483, %v4109
      %4142 = vst.msk [vmem:[%s278 + $0xe8] sm:$0xff] %vm1483, %v4110
      %4143 = vst.msk [vmem:[%s278 + $0xf0] sm:$0xff] %vm1483, %v4111
      %4144 = vst.msk [vmem:[%s278 + $0xf8] sm:$0xff] %vm1483, %v4112
      %p4145 = scmp.lt.s32.totalorder %s18, 1
      %s4146 = scalar_select %p4145, %s18, 1
      %s4147 = smul.addr %s4146, 32
      %s4148 = smul.addr %s4147, 8
      %s4149 = scalar_lea.vmem %s7, %s4148
      // Predicated region
      $region49: #{basic_block_forward.1} parent=47 // pred_check
        %p4150 = pneg %p188
      $region50: #{basic_block_forward.1} parent=47 // pred_check_branch
        %4152 = sbr.rel (%p4150) target = $region52
      $region51: #{basic_block_forward.1} parent=47 // pred_region
        _
      $region52: #{basic_block_forward.1} parent=47 // pred_fallthru
        _
    $region48: #{basic_block_forward.1} parent=5 // pred_fallthru
      _
    %p4153 = scmp.le.s32.totalorder 2, %s13
    // Predicated region
    $region53: #{basic_block_forward.1} parent=5 // pred_check
      %p4154 = pneg %p4153
    $region54: #{basic_block_forward.1} parent=5 // pred_check_branch
      %4156 = sbr.rel (%p4154) target = $region56
    $region55: #{basic_block_forward.1} parent=5 // pred_region
      %s4157 = ssub.s32 %s13, 2
      // Predicated region
      $region57: #{basic_block_forward.1} parent=55 // pred_check
        %p4158 = pneg %p194
      $region58: #{basic_block_forward.1} parent=55 // pred_check_branch
        %4160 = sbr.rel (%p4158) target = $region60
      $region59: #{basic_block_forward.1} parent=55 // pred_region
        %p4161 = scmp.lt.s32.totalorder %s19, 1
        %s4162 = scalar_select %p4161, %s19, 1
        %s4163 = smul.addr %s4162, 32
        %s4164 = smul.addr %s4163, 8
        %s4165 = scalar_lea.vmem %s7, %s4164
      $region60: #{basic_block_forward.1} parent=55 // pred_fallthru
        _
    $region56: #{basic_block_forward.1} parent=5 // pred_fallthru
      _
  $region6: #{basic_block_forward.1} parent=0 // loop_footer
    %s17 = sadd.s32 1, %s13
  $region7: #{basic_block_forward.1} parent=0 // loop_footer_branch
    %12 = sbr.rel target = $region3
  $region8: #{basic_block_forward.1} parent=0 // loop_exit
    _

</llo_original>
